<compile_context>
chip_gen: v7x
topology: tpu7x:2x2x1
jax: 0.10.0
libtpu: 0.0.40
codegen_flags: <defaults>
</compile_context>

<pallas_src>
import numpy as np

import jax
import jax.numpy as jnp
from jax import lax
from jax.experimental import pallas as pl
from jax.experimental.pallas import tpu as pltpu

PAD = 3          # padding for the largest (7x7) kernel
KH = 7           # packed kernel height (= width)
EPS = 1e-5       # nn.BatchNorm2d default eps
LANE = 128


def _make_call(NSTEPS, NB, H, W, Hp, K128, C3):
    """Build the fused conv+BN+ReLU pallas_call for static shapes."""
    WC3 = W * C3
    MROWS = NB * H           # matmul M per grid step
    RHP = NB * Hp            # interleaved padded rows per step
    inv_count = 1.0 / float(NSTEPS * NB * H * W)
    if WC3 % LANE == 0:
        nchunk, chw = WC3 // LANE, LANE
    else:
        nchunk, chw = 1, WC3

    def kernel(x_ref, b_ref, bias_ref, gamma_ref, beta_ref, fold_ref, bcast_ref,
               out_ref, act_sc, sum_sc, scale_sc, shift_sc):
        p = pl.program_id(0)
        n = pl.program_id(1)

        # ------------- phase 0: conv + bias + batch-sum accumulation -------------
        @pl.when(p == 0)
        def _conv_phase():
            @pl.when(n == 0)
            def _init():
                sum_sc[...] = jnp.zeros_like(sum_sc)

            xblk = x_ref[0]                                   # (NB*Hp, 128) bf16
            # 7 MXU matmuls per step; images are row-interleaved (row = h*NB + i)
            # so each kh tap is one contiguous sublane window -> single big-M LHS.
            accs = [jnp.zeros((MROWS, chw), jnp.float32) for _ in range(nchunk)]
            for kh in range(KH):
                lhs = xblk[kh * NB:kh * NB + MROWS, :]        # (MROWS, 128) bf16
                bk = b_ref[kh]                                # (128, W*C3) bf16
                for c in range(nchunk):
                    accs[c] = accs[c] + jnp.dot(
                        lhs, bk[:, c * chw:(c + 1) * chw],
                        preferred_element_type=jnp.float32)
            if nchunk > 1:
                y = jnp.concatenate(accs, axis=1) + bias_ref[...]
            else:
                y = accs[0] + bias_ref[...]
            act_sc[n] = y                                     # resident f32 pre-BN
            sum_sc[...] += jnp.sum(y, axis=0, keepdims=True)

        # ------------- phase 1: BN stats finalize, normalize + ReLU -------------
        @pl.when(p == 1)
        def _norm_phase():
            @pl.when(n == 0)
            def _stats():
                fold = fold_ref[...]                          # (W*C3, C3) 0/1
                bcast = bcast_ref[...]                        # (C3, W*C3) 0/1
                mean_c = jnp.dot(sum_sc[...], fold,
                                 preferred_element_type=jnp.float32) * inv_count
                mean_t = jnp.dot(mean_c, bcast,
                                 preferred_element_type=jnp.float32)  # (1, W*C3)

                # two-pass (centered) variance over VMEM-resident activations
                def body(j, acc):
                    d = act_sc[j] - mean_t
                    return acc + jnp.sum(d * d, axis=0, keepdims=True)
                ssq = lax.fori_loop(0, NSTEPS, body,
                                    jnp.zeros((1, WC3), jnp.float32), unroll=True)
                var_c = jnp.dot(ssq, fold,
                                preferred_element_type=jnp.float32) * inv_count
                scale_c = lax.rsqrt(var_c + EPS) * gamma_ref[...]     # (1, C3)
                shift_c = beta_ref[...] - mean_c * scale_c
                scale_sc[...] = jnp.dot(scale_c, bcast,
                                        preferred_element_type=jnp.float32)
                shift_sc[...] = jnp.dot(shift_c, bcast,
                                        preferred_element_type=jnp.float32)

            # per-step output block -> HBM writeback pipelines with the next step
            out_ref[0] = jnp.maximum(
                act_sc[n] * scale_sc[...] + shift_sc[...], 0.0)

    return pl.pallas_call(
        kernel,
        grid=(2, NSTEPS),
        in_specs=[
            # padded, row-interleaved images; frozen at the last block in phase 1
            pl.BlockSpec((1, RHP, K128),
                         lambda p, n: (n * (1 - p) + (NSTEPS - 1) * p, 0, 0)),
            pl.BlockSpec((KH, K128, WC3), lambda p, n: (0, 0, 0)),   # banded weights
            pl.BlockSpec((1, WC3), lambda p, n: (0, 0)),             # lane-tiled bias
            pl.BlockSpec((1, C3), lambda p, n: (0, 0)),              # gamma
            pl.BlockSpec((1, C3), lambda p, n: (0, 0)),              # beta
            pl.BlockSpec((WC3, C3), lambda p, n: (0, 0)),            # W-fold matrix
            pl.BlockSpec((C3, WC3), lambda p, n: (0, 0)),            # channel->lane bcast
        ],
        out_specs=pl.BlockSpec((1, MROWS, WC3), lambda p, n: (n * p, 0, 0)),
        out_shape=jax.ShapeDtypeStruct((NSTEPS, MROWS, WC3), jnp.float32),
        scratch_shapes=[
            pltpu.VMEM((NSTEPS, MROWS, WC3), jnp.float32),   # resident pre-BN acts
            pltpu.VMEM((1, WC3), jnp.float32),               # running per-lane sum
            pltpu.VMEM((1, WC3), jnp.float32),               # broadcast scale
            pltpu.VMEM((1, WC3), jnp.float32),               # broadcast shift
        ],
        compiler_params=pltpu.CompilerParams(
            dimension_semantics=("arbitrary", "arbitrary"),
            vmem_limit_bytes=48 * 1024 * 1024),
    )


@jax.jit
def multi_scale_block(x_nchw, params):
    """Pallas implementation of MultiScaleBlock.forward (PyTorch NCHW in/out)."""
    w3, b3, w5, b5, w7, b7, gamma, beta = params
    N, Cin, H, W = x_nchw.shape
    Cout = w3.shape[0]
    C3 = 3 * Cout
    Hp, Wp = H + 2 * PAD, W + 2 * PAD
    WpC = Wp * Cin
    K128 = LANE * pl.cdiv(WpC, LANE)            # pad contraction dim to 128
    WC3 = W * C3

    # images per grid step: largest divisor of N with NB*H <= 256 (MXU-sized M)
    NB = 1
    for d in range(1, N + 1):
        if N % d == 0 and d * H <= 256:
            NB = d
    NSTEPS = N // NB

    # -------- glue: layout transforms (fused by XLA under jit) + weight packing --------
    x = jnp.transpose(x_nchw, (0, 2, 3, 1))                          # NHWC
    xp = jnp.pad(x, ((0, 0), (PAD, PAD), (PAD, PAD), (0, 0)))        # pad for k=7
    xf = xp.reshape(N, Hp, WpC)
    xf = jnp.pad(xf, ((0, 0), (0, 0), (0, K128 - WpC)))              # lane-pad K -> 128
    # row-interleave NB images per grid step: stored row = h*NB + i
    xs = xf.reshape(NSTEPS, NB, Hp, K128).transpose(0, 2, 1, 3)
    xs = xs.reshape(NSTEPS, NB * Hp, K128).astype(jnp.bfloat16)

    # pack 3x3/5x5/7x7 into one 7x7 weight; channel order matches torch.cat
    w3p = jnp.pad(w3, ((0, 0), (0, 0), (2, 2), (2, 2)))
    w5p = jnp.pad(w5, ((0, 0), (0, 0), (1, 1), (1, 1)))
    wall = jnp.concatenate([w3p, w5p, w7], axis=0)                   # (C3, Cin, 7, 7)
    wall_t = jnp.transpose(wall, (2, 3, 1, 0))                       # (kh, kw, Cin, C3)

    # banded block-Toeplitz weight: B[kh, (w+kw)*Cin+ci, w*C3+c] = wall_t[kh,kw,ci,c]
    sel = np.zeros((KH, Wp, W), np.float32)
    for kw in range(KH):
        for w in range(W):
            sel[kw, w + kw, w] = 1.0
    bmat = jnp.einsum('xpw,hxic->hpiwc', jnp.asarray(sel), wall_t)   # (7,Wp,Cin,W,C3)
    bmat = bmat.reshape(KH, WpC, WC3)
    bmat = jnp.pad(bmat, ((0, 0), (0, K128 - WpC), (0, 0))).astype(jnp.bfloat16)

    bias = jnp.concatenate([b3, b5, b7]).astype(jnp.float32)         # (C3,)
    bias_t = jnp.tile(bias, W).reshape(1, WC3)                       # lane-tiled bias
    gamma2 = gamma.reshape(1, C3).astype(jnp.float32)
    beta2 = beta.reshape(1, C3).astype(jnp.float32)
    fold = jnp.asarray(np.tile(np.eye(C3, dtype=np.float32), (W, 1)))  # (W*C3, C3)
    bcast = jnp.transpose(fold)                                        # (C3, W*C3)

    call = _make_call(NSTEPS, NB, H, W, Hp, K128, C3)
    out = call(xs, bmat, bias_t, gamma2, beta2, fold, bcast)         # (NSTEPS, NB*H, W*C3)

    # un-interleave rows (h*NB + i) / lanes (w*C3 + c) and return NCHW
    out = out.reshape(NSTEPS, H, NB, W, C3)
    out = jnp.transpose(out, (0, 2, 4, 1, 3)).reshape(N, C3, H, W)
    return out


def reference(x_nchw, params):
    """Pure-JAX reference matching the PyTorch module in default (training) mode."""
    w3, b3, w5, b5, w7, b7, gamma, beta = params

    def conv(w, b, pad):
        out = lax.conv_general_dilated(
            x_nchw, w, window_strides=(1, 1),
            padding=[(pad, pad), (pad, pad)],
            dimension_numbers=("NCHW", "OIHW", "NCHW"))
        return out + b[None, :, None, None]

    out = jnp.concatenate([conv(w3, b3, 1), conv(w5, b5, 2), conv(w7, b7, 3)],
                          axis=1)
    mean = out.mean(axis=(0, 2, 3), keepdims=True)
    var = out.var(axis=(0, 2, 3), keepdims=True)   # biased, as in BN training mode
    out = (out - mean) / jnp.sqrt(var + EPS)
    out = out * gamma[None, :, None, None] + beta[None, :, None, None]
    return jnp.maximum(out, 0.0)


if __name__ == "__main__":
    N, Cin, Cout, H, W = 2, 4, 8, 16, 16
    key = jax.random.PRNGKey(0)
    ks = jax.random.split(key, 9)

    x = jax.random.normal(ks[0], (N, Cin, H, W), jnp.float32)
    w3 = 0.1 * jax.random.normal(ks[1], (Cout, Cin, 3, 3), jnp.float32)
    b3 = 0.1 * jax.random.normal(ks[2], (Cout,), jnp.float32)
    w5 = 0.1 * jax.random.normal(ks[3], (Cout, Cin, 5, 5), jnp.float32)
    b5 = 0.1 * jax.random.normal(ks[4], (Cout,), jnp.float32)
    w7 = 0.1 * jax.random.normal(ks[5], (Cout, Cin, 7, 7), jnp.float32)
    b7 = 0.1 * jax.random.normal(ks[6], (Cout,), jnp.float32)
    gamma = 1.0 + 0.1 * jax.random.normal(ks[7], (3 * Cout,), jnp.float32)
    beta = 0.1 * jax.random.normal(ks[8], (3 * Cout,), jnp.float32)
    params = (w3, b3, w5, b5, w7, b7, gamma, beta)

    out = multi_scale_block(x, params)
    out = jax.block_until_ready(out)

    ref = reference(x, params)
    max_err = float(jnp.max(jnp.abs(out - ref)))
    assert out.shape == (N, 3 * Cout, H, W), out.shape
    assert max_err < 5e-2, f"max abs error too large: {max_err}"

    print("KERNEL_OK")
</pallas_src>

<mosaic_0001>
module attributes {stable_mosaic.version = 11 : i64} {
  func.func @kernel(%arg0: i32, %arg1: i32, %arg2: memref<1x44x128xbf16, #tpu.memory_space<vmem>>, %arg3: memref<7x128x384xbf16, #tpu.memory_space<vmem>>, %arg4: memref<1x384xf32, #tpu.memory_space<vmem>>, %arg5: memref<1x24xf32, #tpu.memory_space<vmem>>, %arg6: memref<1x24xf32, #tpu.memory_space<vmem>>, %arg7: memref<384x24xf32, #tpu.memory_space<vmem>>, %arg8: memref<24x384xf32, #tpu.memory_space<vmem>>, %arg9: memref<1x32x384xf32, #tpu.memory_space<vmem>>, %arg10: memref<1x32x384xf32, #tpu.memory_space<vmem>>, %arg11: memref<1x384xf32, #tpu.memory_space<vmem>>, %arg12: memref<1x384xf32, #tpu.memory_space<vmem>>, %arg13: memref<1x384xf32, #tpu.memory_space<vmem>>) attributes {dimension_semantics = [#tpu.dimension_semantics<arbitrary>, #tpu.dimension_semantics<arbitrary>], iteration_bounds = array<i64: 2, 1>, scalar_prefetch = 0 : i64, scratch_operands = 4 : i64, tpu.core_type = #tpu.core_type<tc>, window_params = [{transform_indices = @transform_0, window_bounds = array<i64: 1, 44, 128>}, {pipeline_mode = #tpu.pipeline_mode<synchronous>, transform_indices = @transform_1, window_bounds = array<i64: 7, 128, 384>}, {pipeline_mode = #tpu.pipeline_mode<synchronous>, transform_indices = @transform_2, window_bounds = array<i64: 1, 384>}, {pipeline_mode = #tpu.pipeline_mode<synchronous>, transform_indices = @transform_3, window_bounds = array<i64: 1, 24>}, {pipeline_mode = #tpu.pipeline_mode<synchronous>, transform_indices = @transform_4, window_bounds = array<i64: 1, 24>}, {pipeline_mode = #tpu.pipeline_mode<synchronous>, transform_indices = @transform_5, window_bounds = array<i64: 384, 24>}, {pipeline_mode = #tpu.pipeline_mode<synchronous>, transform_indices = @transform_6, window_bounds = array<i64: 24, 384>}, {transform_indices = @transform_7, window_bounds = array<i64: 1, 32, 384>}]} {
    %c0_i32 = arith.constant 0 : i32
    %0 = arith.cmpi eq, %arg0, %c0_i32 : i32
    %1 = arith.extui %0 : i1 to i32
    %c0_i32_0 = arith.constant 0 : i32
    %2 = arith.cmpi ne, %1, %c0_i32_0 : i32
    scf.if %2 {
      %c0_i32_2 = arith.constant 0 : i32
      %6 = arith.cmpi eq, %arg1, %c0_i32_2 : i32
      %7 = arith.extui %6 : i1 to i32
      %c0_i32_3 = arith.constant 0 : i32
      %8 = arith.cmpi ne, %7, %c0_i32_3 : i32
      scf.if %8 {
        %cst_53 = arith.constant 0.000000e+00 : f32
        %111 = vector.broadcast %cst_53 : f32 to vector<1x384xf32>
        %c0_54 = arith.constant 0 : index
        %c0_55 = arith.constant 0 : index
        %112 = vector.load %arg11[%c0_54, %c0_55] : memref<1x384xf32, #tpu.memory_space<vmem>>, vector<1x384xf32>
        tpu.vector_store %arg11[%c0_54, %c0_55], %111 {strides = array<i32>} : memref<1x384xf32, #tpu.memory_space<vmem>>, vector<1x384xf32>,
      } else {
      }
      %c0 = arith.constant 0 : index
      %c0_4 = arith.constant 0 : index
      %c0_5 = arith.constant 0 : index
      %9 = vector.load %arg2[%c0, %c0_4, %c0_5] : memref<1x44x128xbf16, #tpu.memory_space<vmem>>, vector<1x44x128xbf16>
      %10 = vector.shape_cast %9 : vector<1x44x128xbf16> to vector<44x128xbf16>
      %cst = arith.constant 0.000000e+00 : f32
      %11 = vector.broadcast %cst : f32 to vector<32x128xf32>
      %cst_6 = arith.constant 0.000000e+00 : f32
      %12 = vector.broadcast %cst_6 : f32 to vector<32x128xf32>
      %cst_7 = arith.constant 0.000000e+00 : f32
      %13 = vector.broadcast %cst_7 : f32 to vector<32x128xf32>
      %14 = vector.extract_strided_slice %10 {offsets = [0, 0], sizes = [32, 128], strides = [1, 1]} : vector<44x128xbf16> to vector<32x128xbf16>
      %c0_8 = arith.constant 0 : index
      %c0_9 = arith.constant 0 : index
      %c0_10 = arith.constant 0 : index
      %15 = vector.load %arg3[%c0_8, %c0_9, %c0_10] : memref<7x128x384xbf16, #tpu.memory_space<vmem>>, vector<1x128x384xbf16>
      %16 = vector.shape_cast %15 : vector<1x128x384xbf16> to vector<128x384xbf16>
      %17 = vector.extract_strided_slice %16 {offsets = [0, 0], sizes = [128, 128], strides = [1, 1]} : vector<128x384xbf16> to vector<128x128xbf16>
      %cst_11 = arith.constant dense<0.000000e+00> : vector<32x128xf32>
      %18 = tpu.matmul %14, %17, %cst_11 {dimension_numbers = #tpu.dot_dimension_numbers<[1], [0], [0], [1], [0, 0, 1, 1], [], []>} : vector<32x128xbf16>, vector<128x128xbf16>, vector<32x128xf32> -> vector<32x128xf32>
      %19 = arith.addf %11, %18 : vector<32x128xf32>
      %20 = vector.extract_strided_slice %16 {offsets = [0, 128], sizes = [128, 128], strides = [1, 1]} : vector<128x384xbf16> to vector<128x128xbf16>
      %cst_12 = arith.constant dense<0.000000e+00> : vector<32x128xf32>
      %21 = tpu.matmul %14, %20, %cst_12 {dimension_numbers = #tpu.dot_dimension_numbers<[1], [0], [0], [1], [0, 0, 1, 1], [], []>} : vector<32x128xbf16>, vector<128x128xbf16>, vector<32x128xf32> -> vector<32x128xf32>
      %22 = arith.addf %12, %21 : vector<32x128xf32>
      %23 = vector.extract_strided_slice %16 {offsets = [0, 256], sizes = [128, 128], strides = [1, 1]} : vector<128x384xbf16> to vector<128x128xbf16>
      %cst_13 = arith.constant dense<0.000000e+00> : vector<32x128xf32>
      %24 = tpu.matmul %14, %23, %cst_13 {dimension_numbers = #tpu.dot_dimension_numbers<[1], [0], [0], [1], [0, 0, 1, 1], [], []>} : vector<32x128xbf16>, vector<128x128xbf16>, vector<32x128xf32> -> vector<32x128xf32>
      %25 = arith.addf %13, %24 : vector<32x128xf32>
      %26 = vector.extract_strided_slice %10 {offsets = [2, 0], sizes = [32, 128], strides = [1, 1]} : vector<44x128xbf16> to vector<32x128xbf16>
      %c1 = arith.constant 1 : index
      %c0_14 = arith.constant 0 : index
      %c0_15 = arith.constant 0 : index
      %27 = vector.load %arg3[%c1, %c0_14, %c0_15] : memref<7x128x384xbf16, #tpu.memory_space<vmem>>, vector<1x128x384xbf16>
      %28 = vector.shape_cast %27 : vector<1x128x384xbf16> to vector<128x384xbf16>
      %29 = vector.extract_strided_slice %28 {offsets = [0, 0], sizes = [128, 128], strides = [1, 1]} : vector<128x384xbf16> to vector<128x128xbf16>
      %cst_16 = arith.constant dense<0.000000e+00> : vector<32x128xf32>
      %30 = tpu.matmul %26, %29, %cst_16 {dimension_numbers = #tpu.dot_dimension_numbers<[1], [0], [0], [1], [0, 0, 1, 1], [], []>} : vector<32x128xbf16>, vector<128x128xbf16>, vector<32x128xf32> -> vector<32x128xf32>
      %31 = arith.addf %19, %30 : vector<32x128xf32>
      %32 = vector.extract_strided_slice %28 {offsets = [0, 128], sizes = [128, 128], strides = [1, 1]} : vector<128x384xbf16> to vector<128x128xbf16>
      %cst_17 = arith.constant dense<0.000000e+00> : vector<32x128xf32>
      %33 = tpu.matmul %26, %32, %cst_17 {dimension_numbers = #tpu.dot_dimension_numbers<[1], [0], [0], [1], [0, 0, 1, 1], [], []>} : vector<32x128xbf16>, vector<128x128xbf16>, vector<32x128xf32> -> vector<32x128xf32>
      %34 = arith.addf %22, %33 : vector<32x128xf32>
      %35 = vector.extract_strided_slice %28 {offsets = [0, 256], sizes = [128, 128], strides = [1, 1]} : vector<128x384xbf16> to vector<128x128xbf16>
      %cst_18 = arith.constant dense<0.000000e+00> : vector<32x128xf32>
      %36 = tpu.matmul %26, %35, %cst_18 {dimension_numbers = #tpu.dot_dimension_numbers<[1], [0], [0], [1], [0, 0, 1, 1], [], []>} : vector<32x128xbf16>, vector<128x128xbf16>, vector<32x128xf32> -> vector<32x128xf32>
      %37 = arith.addf %25, %36 : vector<32x128xf32>
      %38 = vector.extract_strided_slice %10 {offsets = [4, 0], sizes = [32, 128], strides = [1, 1]} : vector<44x128xbf16> to vector<32x128xbf16>
      %c2 = arith.constant 2 : index
      %c0_19 = arith.constant 0 : index
      %c0_20 = arith.constant 0 : index
      %39 = vector.load %arg3[%c2, %c0_19, %c0_20] : memref<7x128x384xbf16, #tpu.memory_space<vmem>>, vector<1x128x384xbf16>
      %40 = vector.shape_cast %39 : vector<1x128x384xbf16> to vector<128x384xbf16>
      %41 = vector.extract_strided_slice %40 {offsets = [0, 0], sizes = [128, 128], strides = [1, 1]} : vector<128x384xbf16> to vector<128x128xbf16>
      %cst_21 = arith.constant dense<0.000000e+00> : vector<32x128xf32>
      %42 = tpu.matmul %38, %41, %cst_21 {dimension_numbers = #tpu.dot_dimension_numbers<[1], [0], [0], [1], [0, 0, 1, 1], [], []>} : vector<32x128xbf16>, vector<128x128xbf16>, vector<32x128xf32> -> vector<32x128xf32>
      %43 = arith.addf %31, %42 : vector<32x128xf32>
      %44 = vector.extract_strided_slice %40 {offsets = [0, 128], sizes = [128, 128], strides = [1, 1]} : vector<128x384xbf16> to vector<128x128xbf16>
      %cst_22 = arith.constant dense<0.000000e+00> : vector<32x128xf32>
      %45 = tpu.matmul %38, %44, %cst_22 {dimension_numbers = #tpu.dot_dimension_numbers<[1], [0], [0], [1], [0, 0, 1, 1], [], []>} : vector<32x128xbf16>, vector<128x128xbf16>, vector<32x128xf32> -> vector<32x128xf32>
      %46 = arith.addf %34, %45 : vector<32x128xf32>
      %47 = vector.extract_strided_slice %40 {offsets = [0, 256], sizes = [128, 128], strides = [1, 1]} : vector<128x384xbf16> to vector<128x128xbf16>
      %cst_23 = arith.constant dense<0.000000e+00> : vector<32x128xf32>
      %48 = tpu.matmul %38, %47, %cst_23 {dimension_numbers = #tpu.dot_dimension_numbers<[1], [0], [0], [1], [0, 0, 1, 1], [], []>} : vector<32x128xbf16>, vector<128x128xbf16>, vector<32x128xf32> -> vector<32x128xf32>
      %49 = arith.addf %37, %48 : vector<32x128xf32>
      %50 = vector.extract_strided_slice %10 {offsets = [6, 0], sizes = [32, 128], strides = [1, 1]} : vector<44x128xbf16> to vector<32x128xbf16>
      %c3 = arith.constant 3 : index
      %c0_24 = arith.constant 0 : index
      %c0_25 = arith.constant 0 : index
      %51 = vector.load %arg3[%c3, %c0_24, %c0_25] : memref<7x128x384xbf16, #tpu.memory_space<vmem>>, vector<1x128x384xbf16>
      %52 = vector.shape_cast %51 : vector<1x128x384xbf16> to vector<128x384xbf16>
      %53 = vector.extract_strided_slice %52 {offsets = [0, 0], sizes = [128, 128], strides = [1, 1]} : vector<128x384xbf16> to vector<128x128xbf16>
      %cst_26 = arith.constant dense<0.000000e+00> : vector<32x128xf32>
      %54 = tpu.matmul %50, %53, %cst_26 {dimension_numbers = #tpu.dot_dimension_numbers<[1], [0], [0], [1], [0, 0, 1, 1], [], []>} : vector<32x128xbf16>, vector<128x128xbf16>, vector<32x128xf32> -> vector<32x128xf32>
      %55 = arith.addf %43, %54 : vector<32x128xf32>
      %56 = vector.extract_strided_slice %52 {offsets = [0, 128], sizes = [128, 128], strides = [1, 1]} : vector<128x384xbf16> to vector<128x128xbf16>
      %cst_27 = arith.constant dense<0.000000e+00> : vector<32x128xf32>
      %57 = tpu.matmul %50, %56, %cst_27 {dimension_numbers = #tpu.dot_dimension_numbers<[1], [0], [0], [1], [0, 0, 1, 1], [], []>} : vector<32x128xbf16>, vector<128x128xbf16>, vector<32x128xf32> -> vector<32x128xf32>
      %58 = arith.addf %46, %57 : vector<32x128xf32>
      %59 = vector.extract_strided_slice %52 {offsets = [0, 256], sizes = [128, 128], strides = [1, 1]} : vector<128x384xbf16> to vector<128x128xbf16>
      %cst_28 = arith.constant dense<0.000000e+00> : vector<32x128xf32>
      %60 = tpu.matmul %50, %59, %cst_28 {dimension_numbers = #tpu.dot_dimension_numbers<[1], [0], [0], [1], [0, 0, 1, 1], [], []>} : vector<32x128xbf16>, vector<128x128xbf16>, vector<32x128xf32> -> vector<32x128xf32>
      %61 = arith.addf %49, %60 : vector<32x128xf32>
      %62 = vector.extract_strided_slice %10 {offsets = [8, 0], sizes = [32, 128], strides = [1, 1]} : vector<44x128xbf16> to vector<32x128xbf16>
      %c4 = arith.constant 4 : index
      %c0_29 = arith.constant 0 : index
      %c0_30 = arith.constant 0 : index
      %63 = vector.load %arg3[%c4, %c0_29, %c0_30] : memref<7x128x384xbf16, #tpu.memory_space<vmem>>, vector<1x128x384xbf16>
      %64 = vector.shape_cast %63 : vector<1x128x384xbf16> to vector<128x384xbf16>
      %65 = vector.extract_strided_slice %64 {offsets = [0, 0], sizes = [128, 128], strides = [1, 1]} : vector<128x384xbf16> to vector<128x128xbf16>
      %cst_31 = arith.constant dense<0.000000e+00> : vector<32x128xf32>
      %66 = tpu.matmul %62, %65, %cst_31 {dimension_numbers = #tpu.dot_dimension_numbers<[1], [0], [0], [1], [0, 0, 1, 1], [], []>} : vector<32x128xbf16>, vector<128x128xbf16>, vector<32x128xf32> -> vector<32x128xf32>
      %67 = arith.addf %55, %66 : vector<32x128xf32>
      %68 = vector.extract_strided_slice %64 {offsets = [0, 128], sizes = [128, 128], strides = [1, 1]} : vector<128x384xbf16> to vector<128x128xbf16>
      %cst_32 = arith.constant dense<0.000000e+00> : vector<32x128xf32>
      %69 = tpu.matmul %62, %68, %cst_32 {dimension_numbers = #tpu.dot_dimension_numbers<[1], [0], [0], [1], [0, 0, 1, 1], [], []>} : vector<32x128xbf16>, vector<128x128xbf16>, vector<32x128xf32> -> vector<32x128xf32>
      %70 = arith.addf %58, %69 : vector<32x128xf32>
      %71 = vector.extract_strided_slice %64 {offsets = [0, 256], sizes = [128, 128], strides = [1, 1]} : vector<128x384xbf16> to vector<128x128xbf16>
      %cst_33 = arith.constant dense<0.000000e+00> : vector<32x128xf32>
      %72 = tpu.matmul %62, %71, %cst_33 {dimension_numbers = #tpu.dot_dimension_numbers<[1], [0], [0], [1], [0, 0, 1, 1], [], []>} : vector<32x128xbf16>, vector<128x128xbf16>, vector<32x128xf32> -> vector<32x128xf32>
      %73 = arith.addf %61, %72 : vector<32x128xf32>
      %74 = vector.extract_strided_slice %10 {offsets = [10, 0], sizes = [32, 128], strides = [1, 1]} : vector<44x128xbf16> to vector<32x128xbf16>
      %c5 = arith.constant 5 : index
      %c0_34 = arith.constant 0 : index
      %c0_35 = arith.constant 0 : index
      %75 = vector.load %arg3[%c5, %c0_34, %c0_35] : memref<7x128x384xbf16, #tpu.memory_space<vmem>>, vector<1x128x384xbf16>
      %76 = vector.shape_cast %75 : vector<1x128x384xbf16> to vector<128x384xbf16>
      %77 = vector.extract_strided_slice %76 {offsets = [0, 0], sizes = [128, 128], strides = [1, 1]} : vector<128x384xbf16> to vector<128x128xbf16>
      %cst_36 = arith.constant dense<0.000000e+00> : vector<32x128xf32>
      %78 = tpu.matmul %74, %77, %cst_36 {dimension_numbers = #tpu.dot_dimension_numbers<[1], [0], [0], [1], [0, 0, 1, 1], [], []>} : vector<32x128xbf16>, vector<128x128xbf16>, vector<32x128xf32> -> vector<32x128xf32>
      %79 = arith.addf %67, %78 : vector<32x128xf32>
      %80 = vector.extract_strided_slice %76 {offsets = [0, 128], sizes = [128, 128], strides = [1, 1]} : vector<128x384xbf16> to vector<128x128xbf16>
      %cst_37 = arith.constant dense<0.000000e+00> : vector<32x128xf32>
      %81 = tpu.matmul %74, %80, %cst_37 {dimension_numbers = #tpu.dot_dimension_numbers<[1], [0], [0], [1], [0, 0, 1, 1], [], []>} : vector<32x128xbf16>, vector<128x128xbf16>, vector<32x128xf32> -> vector<32x128xf32>
      %82 = arith.addf %70, %81 : vector<32x128xf32>
      %83 = vector.extract_strided_slice %76 {offsets = [0, 256], sizes = [128, 128], strides = [1, 1]} : vector<128x384xbf16> to vector<128x128xbf16>
      %cst_38 = arith.constant dense<0.000000e+00> : vector<32x128xf32>
      %84 = tpu.matmul %74, %83, %cst_38 {dimension_numbers = #tpu.dot_dimension_numbers<[1], [0], [0], [1], [0, 0, 1, 1], [], []>} : vector<32x128xbf16>, vector<128x128xbf16>, vector<32x128xf32> -> vector<32x128xf32>
      %85 = arith.addf %73, %84 : vector<32x128xf32>
      %86 = vector.extract_strided_slice %10 {offsets = [12, 0], sizes = [32, 128], strides = [1, 1]} : vector<44x128xbf16> to vector<32x128xbf16>
      %c6 = arith.constant 6 : index
      %c0_39 = arith.constant 0 : index
      %c0_40 = arith.constant 0 : index
      %87 = vector.load %arg3[%c6, %c0_39, %c0_40] : memref<7x128x384xbf16, #tpu.memory_space<vmem>>, vector<1x128x384xbf16>
      %88 = vector.shape_cast %87 : vector<1x128x384xbf16> to vector<128x384xbf16>
      %89 = vector.extract_strided_slice %88 {offsets = [0, 0], sizes = [128, 128], strides = [1, 1]} : vector<128x384xbf16> to vector<128x128xbf16>
      %cst_41 = arith.constant dense<0.000000e+00> : vector<32x128xf32>
      %90 = tpu.matmul %86, %89, %cst_41 {dimension_numbers = #tpu.dot_dimension_numbers<[1], [0], [0], [1], [0, 0, 1, 1], [], []>} : vector<32x128xbf16>, vector<128x128xbf16>, vector<32x128xf32> -> vector<32x128xf32>
      %91 = arith.addf %79, %90 : vector<32x128xf32>
      %92 = vector.extract_strided_slice %88 {offsets = [0, 128], sizes = [128, 128], strides = [1, 1]} : vector<128x384xbf16> to vector<128x128xbf16>
      %cst_42 = arith.constant dense<0.000000e+00> : vector<32x128xf32>
      %93 = tpu.matmul %86, %92, %cst_42 {dimension_numbers = #tpu.dot_dimension_numbers<[1], [0], [0], [1], [0, 0, 1, 1], [], []>} : vector<32x128xbf16>, vector<128x128xbf16>, vector<32x128xf32> -> vector<32x128xf32>
      %94 = arith.addf %82, %93 : vector<32x128xf32>
      %95 = vector.extract_strided_slice %88 {offsets = [0, 256], sizes = [128, 128], strides = [1, 1]} : vector<128x384xbf16> to vector<128x128xbf16>
      %cst_43 = arith.constant dense<0.000000e+00> : vector<32x128xf32>
      %96 = tpu.matmul %86, %95, %cst_43 {dimension_numbers = #tpu.dot_dimension_numbers<[1], [0], [0], [1], [0, 0, 1, 1], [], []>} : vector<32x128xbf16>, vector<128x128xbf16>, vector<32x128xf32> -> vector<32x128xf32>
      %97 = arith.addf %85, %96 : vector<32x128xf32>
      %98 = tpu.concatenate %91, %94, %97 in 1 : vector<32x128xf32>, vector<32x128xf32>, vector<32x128xf32> -> vector<32x384xf32>
      %c0_44 = arith.constant 0 : index
      %c0_45 = arith.constant 0 : index
      %99 = vector.load %arg4[%c0_44, %c0_45] : memref<1x384xf32, #tpu.memory_space<vmem>>, vector<1x384xf32>
      %100 = vector.broadcast %99 : vector<1x384xf32> to vector<32x384xf32>
      %101 = arith.addf %98, %100 : vector<32x384xf32>
      %102 = arith.index_cast %arg1 : i32 to index
      %c0_46 = arith.constant 0 : index
      %c0_47 = arith.constant 0 : index
      %103 = vector.load %arg10[%102, %c0_46, %c0_47] : memref<1x32x384xf32, #tpu.memory_space<vmem>>, vector<1x32x384xf32>
      %104 = vector.shape_cast %103 : vector<1x32x384xf32> to vector<32x384xf32>
      %105 = vector.shape_cast %101 : vector<32x384xf32> to vector<1x32x384xf32>
      tpu.vector_store %arg10[%102, %c0_46, %c0_47], %105 {strides = array<i32>} : memref<1x32x384xf32, #tpu.memory_space<vmem>>, vector<1x32x384xf32>,
      %c0_48 = arith.constant 0 : index
      %c0_49 = arith.constant 0 : index
      %106 = vector.load %arg11[%c0_48, %c0_49] : memref<1x384xf32, #tpu.memory_space<vmem>>, vector<1x384xf32>
      %cst_50 = arith.constant dense<0.000000e+00> : vector<384xf32>
      %107 = vector.multi_reduction <add>, %101, %cst_50 [0] : vector<32x384xf32> to vector<384xf32>
      %108 = vector.shape_cast %107 : vector<384xf32> to vector<1x384xf32>
      %109 = arith.addf %106, %108 : vector<1x384xf32>
      %c0_51 = arith.constant 0 : index
      %c0_52 = arith.constant 0 : index
      %110 = vector.load %arg11[%c0_51, %c0_52] : memref<1x384xf32, #tpu.memory_space<vmem>>, vector<1x384xf32>
      tpu.vector_store %arg11[%c0_51, %c0_52], %109 {strides = array<i32>} : memref<1x384xf32, #tpu.memory_space<vmem>>, vector<1x384xf32>,
    } else {
    }
    %c1_i32 = arith.constant 1 : i32
    %3 = arith.cmpi eq, %arg0, %c1_i32 : i32
    %4 = arith.extui %3 : i1 to i32
    %c0_i32_1 = arith.constant 0 : i32
    %5 = arith.cmpi ne, %4, %c0_i32_1 : i32
    scf.if %5 {
      %c0_i32_2 = arith.constant 0 : i32
      %6 = arith.cmpi eq, %arg1, %c0_i32_2 : i32
      %7 = arith.extui %6 : i1 to i32
      %c0_i32_3 = arith.constant 0 : i32
      %8 = arith.cmpi ne, %7, %c0_i32_3 : i32
      scf.if %8 {
        %c0_12 = arith.constant 0 : index
        %c0_13 = arith.constant 0 : index
        %23 = vector.load %arg7[%c0_12, %c0_13] : memref<384x24xf32, #tpu.memory_space<vmem>>, vector<384x24xf32>
        %c0_14 = arith.constant 0 : index
        %c0_15 = arith.constant 0 : index
        %24 = vector.load %arg8[%c0_14, %c0_15] : memref<24x384xf32, #tpu.memory_space<vmem>>, vector<24x384xf32>
        %c0_16 = arith.constant 0 : index
        %c0_17 = arith.constant 0 : index
        %25 = vector.load %arg11[%c0_16, %c0_17] : memref<1x384xf32, #tpu.memory_space<vmem>>, vector<1x384xf32>
        %cst_18 = arith.constant dense<0.000000e+00> : vector<1x24xf32>
        %26 = tpu.matmul %25, %23, %cst_18 {dimension_numbers = #tpu.dot_dimension_numbers<[1], [0], [0], [1], [0, 0, 1, 1], [], []>} : vector<1x384xf32>, vector<384x24xf32>, vector<1x24xf32> -> vector<1x24xf32>
        %cst_19 = arith.constant 0.001953125 : f32
        %27 = vector.broadcast %cst_19 : f32 to vector<1x24xf32>
        %28 = arith.mulf %26, %27 : vector<1x24xf32>
        %cst_20 = arith.constant dense<0.000000e+00> : vector<1x384xf32>
        %29 = tpu.matmul %28, %24, %cst_20 {dimension_numbers = #tpu.dot_dimension_numbers<[1], [0], [0], [1], [0, 0, 1, 1], [], []>} : vector<1x24xf32>, vector<24x384xf32>, vector<1x384xf32> -> vector<1x384xf32>
        %cst_21 = arith.constant 0.000000e+00 : f32
        %30 = vector.broadcast %cst_21 : f32 to vector<1x384xf32>
        %c0_i32_22 = arith.constant 0 : i32
        %31 = arith.index_cast %c0_i32_22 : i32 to index
        %c0_23 = arith.constant 0 : index
        %c0_24 = arith.constant 0 : index
        %32 = vector.load %arg10[%31, %c0_23, %c0_24] : memref<1x32x384xf32, #tpu.memory_space<vmem>>, vector<1x32x384xf32>
        %33 = vector.shape_cast %32 : vector<1x32x384xf32> to vector<32x384xf32>
        %34 = vector.broadcast %29 : vector<1x384xf32> to vector<32x384xf32>
        %35 = arith.subf %33, %34 : vector<32x384xf32>
        %36 = arith.mulf %35, %35 : vector<32x384xf32>
        %cst_25 = arith.constant dense<0.000000e+00> : vector<384xf32>
        %37 = vector.multi_reduction <add>, %36, %cst_25 [0] : vector<32x384xf32> to vector<384xf32>
        %38 = vector.shape_cast %37 : vector<384xf32> to vector<1x384xf32>
        %39 = arith.addf %30, %38 : vector<1x384xf32>
        %c1_i32_26 = arith.constant 1 : i32
        %cst_27 = arith.constant dense<0.000000e+00> : vector<1x24xf32>
        %40 = tpu.matmul %39, %23, %cst_27 {dimension_numbers = #tpu.dot_dimension_numbers<[1], [0], [0], [1], [0, 0, 1, 1], [], []>} : vector<1x384xf32>, vector<384x24xf32>, vector<1x24xf32> -> vector<1x24xf32>
        %cst_28 = arith.constant 0.001953125 : f32
        %41 = vector.broadcast %cst_28 : f32 to vector<1x24xf32>
        %42 = arith.mulf %40, %41 : vector<1x24xf32>
        %cst_29 = arith.constant 9.99999974E-6 : f32
        %43 = vector.broadcast %cst_29 : f32 to vector<1x24xf32>
        %44 = arith.addf %42, %43 : vector<1x24xf32>
        %45 = math.rsqrt %44 : vector<1x24xf32>
        %c0_30 = arith.constant 0 : index
        %c0_31 = arith.constant 0 : index
        %46 = vector.load %arg5[%c0_30, %c0_31] : memref<1x24xf32, #tpu.memory_space<vmem>>, vector<1x24xf32>
        %47 = arith.mulf %45, %46 : vector<1x24xf32>
        %c0_32 = arith.constant 0 : index
        %c0_33 = arith.constant 0 : index
        %48 = vector.load %arg6[%c0_32, %c0_33] : memref<1x24xf32, #tpu.memory_space<vmem>>, vector<1x24xf32>
        %49 = arith.mulf %28, %47 : vector<1x24xf32>
        %50 = arith.subf %48, %49 : vector<1x24xf32>
        %cst_34 = arith.constant dense<0.000000e+00> : vector<1x384xf32>
        %51 = tpu.matmul %47, %24, %cst_34 {dimension_numbers = #tpu.dot_dimension_numbers<[1], [0], [0], [1], [0, 0, 1, 1], [], []>} : vector<1x24xf32>, vector<24x384xf32>, vector<1x384xf32> -> vector<1x384xf32>
        %c0_35 = arith.constant 0 : index
        %c0_36 = arith.constant 0 : index
        %52 = vector.load %arg12[%c0_35, %c0_36] : memref<1x384xf32, #tpu.memory_space<vmem>>, vector<1x384xf32>
        tpu.vector_store %arg12[%c0_35, %c0_36], %51 {strides = array<i32>} : memref<1x384xf32, #tpu.memory_space<vmem>>, vector<1x384xf32>,
        %cst_37 = arith.constant dense<0.000000e+00> : vector<1x384xf32>
        %53 = tpu.matmul %50, %24, %cst_37 {dimension_numbers = #tpu.dot_dimension_numbers<[1], [0], [0], [1], [0, 0, 1, 1], [], []>} : vector<1x24xf32>, vector<24x384xf32>, vector<1x384xf32> -> vector<1x384xf32>
        %c0_38 = arith.constant 0 : index
        %c0_39 = arith.constant 0 : index
        %54 = vector.load %arg13[%c0_38, %c0_39] : memref<1x384xf32, #tpu.memory_space<vmem>>, vector<1x384xf32>
        tpu.vector_store %arg13[%c0_38, %c0_39], %53 {strides = array<i32>} : memref<1x384xf32, #tpu.memory_space<vmem>>, vector<1x384xf32>,
      } else {
      }
      %9 = arith.index_cast %arg1 : i32 to index
      %c0 = arith.constant 0 : index
      %c0_4 = arith.constant 0 : index
      %10 = vector.load %arg10[%9, %c0, %c0_4] : memref<1x32x384xf32, #tpu.memory_space<vmem>>, vector<1x32x384xf32>
      %11 = vector.shape_cast %10 : vector<1x32x384xf32> to vector<32x384xf32>
      %c0_5 = arith.constant 0 : index
      %c0_6 = arith.constant 0 : index
      %12 = vector.load %arg12[%c0_5, %c0_6] : memref<1x384xf32, #tpu.memory_space<vmem>>, vector<1x384xf32>
      %13 = vector.broadcast %12 : vector<1x384xf32> to vector<32x384xf32>
      %14 = arith.mulf %11, %13 : vector<32x384xf32>
      %c0_7 = arith.constant 0 : index
      %c0_8 = arith.constant 0 : index
      %15 = vector.load %arg13[%c0_7, %c0_8] : memref<1x384xf32, #tpu.memory_space<vmem>>, vector<1x384xf32>
      %16 = vector.broadcast %15 : vector<1x384xf32> to vector<32x384xf32>
      %17 = arith.addf %14, %16 : vector<32x384xf32>
      %cst = arith.constant 0.000000e+00 : f32
      %18 = vector.broadcast %cst : f32 to vector<32x384xf32>
      %19 = arith.maximumf %17, %18 : vector<32x384xf32>
      %c0_9 = arith.constant 0 : index
      %c0_10 = arith.constant 0 : index
      %c0_11 = arith.constant 0 : index
      %20 = vector.load %arg9[%c0_9, %c0_10, %c0_11] : memref<1x32x384xf32, #tpu.memory_space<vmem>>, vector<1x32x384xf32>
      %21 = vector.shape_cast %20 : vector<1x32x384xf32> to vector<32x384xf32>
      %22 = vector.shape_cast %19 : vector<32x384xf32> to vector<1x32x384xf32>
      tpu.vector_store %arg9[%c0_9, %c0_10, %c0_11], %22 {strides = array<i32>} : memref<1x32x384xf32, #tpu.memory_space<vmem>>, vector<1x32x384xf32>,
    } else {
    }
    return
  }
  func.func @transform_0(%arg0: i32, %arg1: i32) -> (i32, i32, i32) {
    %c1_i32 = arith.constant 1 : i32
    %0 = arith.subi %c1_i32, %arg0 : i32
    %1 = arith.muli %arg1, %0 : i32
    %c0_i32 = arith.constant 0 : i32
    %2 = arith.muli %c0_i32, %arg0 : i32
    %3 = arith.addi %1, %2 : i32
    %c0_i32_0 = arith.constant 0 : i32
    %c0_i32_1 = arith.constant 0 : i32
    %c0_i32_2 = arith.constant 0 : i32
    return %3, %c0_i32_0, %c0_i32_1 : i32, i32, i32
  }
  func.func @transform_1(%arg0: i32, %arg1: i32) -> (i32, i32, i32) {
    %c0_i32 = arith.constant 0 : i32
    %c0_i32_0 = arith.constant 0 : i32
    %c0_i32_1 = arith.constant 0 : i32
    %c0_i32_2 = arith.constant 0 : i32
    return %c0_i32, %c0_i32_0, %c0_i32_1 : i32, i32, i32
  }
  func.func @transform_2(%arg0: i32, %arg1: i32) -> (i32, i32) {
    %c0_i32 = arith.constant 0 : i32
    %c0_i32_0 = arith.constant 0 : i32
    %c0_i32_1 = arith.constant 0 : i32
    return %c0_i32, %c0_i32_0 : i32, i32
  }
  func.func @transform_3(%arg0: i32, %arg1: i32) -> (i32, i32) {
    %c0_i32 = arith.constant 0 : i32
    %c0_i32_0 = arith.constant 0 : i32
    %c0_i32_1 = arith.constant 0 : i32
    return %c0_i32, %c0_i32_0 : i32, i32
  }
  func.func @transform_4(%arg0: i32, %arg1: i32) -> (i32, i32) {
    %c0_i32 = arith.constant 0 : i32
    %c0_i32_0 = arith.constant 0 : i32
    %c0_i32_1 = arith.constant 0 : i32
    return %c0_i32, %c0_i32_0 : i32, i32
  }
  func.func @transform_5(%arg0: i32, %arg1: i32) -> (i32, i32) {
    %c0_i32 = arith.constant 0 : i32
    %c0_i32_0 = arith.constant 0 : i32
    %c0_i32_1 = arith.constant 0 : i32
    return %c0_i32, %c0_i32_0 : i32, i32
  }
  func.func @transform_6(%arg0: i32, %arg1: i32) -> (i32, i32) {
    %c0_i32 = arith.constant 0 : i32
    %c0_i32_0 = arith.constant 0 : i32
    %c0_i32_1 = arith.constant 0 : i32
    return %c0_i32, %c0_i32_0 : i32, i32
  }
  func.func @transform_7(%arg0: i32, %arg1: i32) -> (i32, i32, i32) {
    %0 = arith.muli %arg1, %arg0 : i32
    %c0_i32 = arith.constant 0 : i32
    %c0_i32_0 = arith.constant 0 : i32
    %c0_i32_1 = arith.constant 0 : i32
    return %0, %c0_i32, %c0_i32_0 : i32, i32, i32
  }
}

</mosaic_0001>

<llo_original>
// kernel: tile.8
$region0: #{tile.8}
  #allocation0 [shape = 's32[1]{0}', space=sflag, size = 0x4, scoped, tag = 'scoped memory for tile.8']
  %s0 = inlined_call_operand.vmem [shape: f32[24], index: 0, kind: input, shape index: {}]
  %s1 = inlined_call_operand.vmem [shape: f32[16,24], index: 1, kind: output, shape index: {}]
  // Predicated region
  $region2: #{tile.8} parent=0 // pred_check
    _
  $region3: #{tile.8} parent=0 // pred_check_branch
    %3 = sbr.rel (0) target = $region5
  $region4: #{tile.8} parent=0 // pred_region
    _
  $region5: #{tile.8} parent=0 // pred_fallthru
    _
  %v4 = vld [vmem:[%s0] ss:$0 sm:$0xff]
  %5 = vst [vmem:[%s1] sm:$0xff] %v4
  %s6 = scalar_lea.vmem %s1, 8
  %7 = vst [vmem:[%s6] sm:$0xff] %v4

// kernel: tile.9
$region0: #{tile.9}
  %s0 = inlined_call_operand.vmem [shape: f32[16,24], index: 0, kind: input, shape index: {}]
  %s1 = inlined_call_operand.vmem [shape: f32[1,384], index: 1, kind: output, shape index: {}]
  $region1: #{tile.9} parent=0
    #allocation0 [shape = 'u8[12288]{0}', space=vmem, size = 0x3000, scoped, tag = 'scoped mem for output reshape']
    %v2 = vld [vmem:[%s0] sm:$0x1]
    %vm3 = vcmask 195584
    %4 = vst.msk [vmem:[#allocation0] sm:$0x1] %vm3, %v2
    %s5 = scalar_lea.vmem %s0, 5
    %v6 = vld [vmem:[%s5] sm:$0x1]
    %s7 = scalar_lea.vmem %s0, 5
    %v8 = vld [vmem:[%s7] sm:$0x1]
    %vm9 = vcmask 64512
    %v10 = vsel %vm9, %v8, %v6
    %11 = vrot.lane.b32.xlu0 %v10, 120
    %v12 = vpop.permute.xlu0 %11
    %vm13 = vcmask 130048
    %s14 = scalar_lea.vmem [#allocation0], 8
    %15 = vst.msk [vmem:[%s14] sm:$0x1] %vm13, %v12
    %vm16 = vcmask 1048512
    %17 = vst.msk [vmem:[#allocation0] sm:$0x1] %vm16, %v12
    %s18 = scalar_lea.vmem %s0, 10
    %v19 = vld [vmem:[%s18] sm:$0x1]
    %s20 = scalar_lea.vmem %s0, 10
    %v21 = vld [vmem:[%s20] sm:$0x1]
    %vm22 = vcmask 130048
    %v23 = vsel %vm22, %v21, %v19
    %24 = vrot.lane.b32.xlu0 %v23, 112
    %v25 = vpop.permute.xlu0 %24
    %vm26 = vcmask 64512
    %s27 = scalar_lea.vmem [#allocation0], 16
    %28 = vst.msk [vmem:[%s27] sm:$0x1] %vm26, %v25
    %vm29 = vcmask 1048448
    %s30 = scalar_lea.vmem [#allocation0], 8
    %31 = vst.msk [vmem:[%s30] sm:$0x1] %vm29, %v25
    %s32 = scalar_lea.vmem %s0, 15
    %v33 = vld [vmem:[%s32] sm:$0x1]
    %34 = vrot.lane.b32.xlu0 %v33, 104
    %v35 = vpop.permute.xlu0 %34
    %vm36 = vcmask 1048384
    %s37 = scalar_lea.vmem [#allocation0], 16
    %38 = vst.msk [vmem:[%s37] sm:$0x1] %vm36, %v35
    %s39 = scalar_lea.vmem %s0, 4
    %v40 = vld [vmem:[%s39] sm:$0x1]
    %41 = vrot.lane.b32.xlu0 %v40, 96
    %v42 = vpop.permute.xlu0 %41
    %vm43 = vcmask 982784
    %44 = vst.msk [vmem:[#allocation0] sm:$0x1] %vm43, %v42
    %s45 = scalar_lea.vmem %s0, 9
    %v46 = vld [vmem:[%s45] sm:$0x1]
    %47 = vrot.lane.b32.xlu0 %v46, 88
    %v48 = vpop.permute.xlu0 %47
    %vm49 = vcmask 917184
    %s50 = scalar_lea.vmem [#allocation0], 8
    %51 = vst.msk [vmem:[%s50] sm:$0x1] %vm49, %v48
    %s52 = scalar_lea.vmem %s0, 14
    %v53 = vld [vmem:[%s52] sm:$0x1]
    %54 = vrot.lane.b32.xlu0 %v53, 80
    %v55 = vpop.permute.xlu0 %54
    %vm56 = vcmask 851584
    %s57 = scalar_lea.vmem [#allocation0], 16
    %58 = vst.msk [vmem:[%s57] sm:$0x1] %vm56, %v55
    %s59 = scalar_lea.vmem %s0, 3
    %v60 = vld [vmem:[%s59] sm:$0x1]
    %61 = vrot.lane.b32.xlu0 %v60, 72
    %v62 = vpop.permute.xlu0 %61
    %vm63 = vcmask 785984
    %64 = vst.msk [vmem:[#allocation0] sm:$0x1] %vm63, %v62
    %s65 = scalar_lea.vmem %s0, 8
    %v66 = vld [vmem:[%s65] sm:$0x1]
    %67 = vrot.lane.b32.xlu0 %v66, 64
    %v68 = vpop.permute.xlu0 %67
    %vm69 = vcmask 720384
    %s70 = scalar_lea.vmem [#allocation0], 8
    %71 = vst.msk [vmem:[%s70] sm:$0x1] %vm69, %v68
    %s72 = scalar_lea.vmem %s0, 13
    %v73 = vld [vmem:[%s72] sm:$0x1]
    %74 = vrot.lane.b32.xlu0 %v73, 56
    %v75 = vpop.permute.xlu0 %74
    %vm76 = vcmask 654784
    %s77 = scalar_lea.vmem [#allocation0], 16
    %78 = vst.msk [vmem:[%s77] sm:$0x1] %vm76, %v75
    %s79 = scalar_lea.vmem %s0, 2
    %v80 = vld [vmem:[%s79] sm:$0x1]
    %81 = vrot.lane.b32.xlu0 %v80, 48
    %v82 = vpop.permute.xlu0 %81
    %vm83 = vcmask 589184
    %84 = vst.msk [vmem:[#allocation0] sm:$0x1] %vm83, %v82
    %s85 = scalar_lea.vmem %s0, 7
    %v86 = vld [vmem:[%s85] sm:$0x1]
    %87 = vrot.lane.b32.xlu0 %v86, 40
    %v88 = vpop.permute.xlu0 %87
    %vm89 = vcmask 523584
    %s90 = scalar_lea.vmem [#allocation0], 8
    %91 = vst.msk [vmem:[%s90] sm:$0x1] %vm89, %v88
    %s92 = scalar_lea.vmem %s0, 12
    %v93 = vld [vmem:[%s92] sm:$0x1]
    %94 = vrot.lane.b32.xlu0 %v93, 32
    %v95 = vpop.permute.xlu0 %94
    %vm96 = vcmask 457984
    %s97 = scalar_lea.vmem [#allocation0], 16
    %98 = vst.msk [vmem:[%s97] sm:$0x1] %vm96, %v95
    %s99 = scalar_lea.vmem %s0, 1
    %v100 = vld [vmem:[%s99] sm:$0x1]
    %101 = vrot.lane.b32.xlu0 %v100, 24
    %v102 = vpop.permute.xlu0 %101
    %vm103 = vcmask 392384
    %104 = vst.msk [vmem:[#allocation0] sm:$0x1] %vm103, %v102
    %s105 = scalar_lea.vmem %s0, 6
    %v106 = vld [vmem:[%s105] sm:$0x1]
    %107 = vrot.lane.b32.xlu0 %v106, 16
    %v108 = vpop.permute.xlu0 %107
    %vm109 = vcmask 326784
    %s110 = scalar_lea.vmem [#allocation0], 8
    %111 = vst.msk [vmem:[%s110] sm:$0x1] %vm109, %v108
    %s112 = scalar_lea.vmem %s0, 11
    %v113 = vld [vmem:[%s112] sm:$0x1]
    %114 = vrot.lane.b32.xlu0 %v113, 8
    %v115 = vpop.permute.xlu0 %114
    %vm116 = vcmask 261184
    %s117 = scalar_lea.vmem [#allocation0], 16
    %118 = vst.msk [vmem:[%s117] sm:$0x1] %vm116, %v115
    %s120 = sshllo.u32 0, 1
    %v122 = vld [vmem:[#allocation0] sm:%s120]
    %s123 = sshllo.u32 0, 1
    %124 = vst [vmem:[%s1] sm:%s123] %v122
    %s125 = scalar_lea.vmem [#allocation0], 8
    %v126 = vld [vmem:[%s125] sm:%s120]
    %s127 = sshllo.u32 0, 1
    %s128 = scalar_lea.vmem %s1, 1
    %129 = vst [vmem:[%s128] sm:%s127] %v126
    %s130 = scalar_lea.vmem [#allocation0], 16
    %v131 = vld [vmem:[%s130] sm:%s120]
    %s132 = sshllo.u32 0, 1
    %s133 = smul.addr 1, 2
    %s134 = scalar_lea.vmem %s1, %s133
    %135 = vst [vmem:[%s134] sm:%s132] %v131

// kernel: multi_scale_block.1
$region0: #{multi_scale_block.1}
  #allocation0 [shape = 'u32[]', space=smem, size = 0x4, offset = 0x4, fixed_abs, tag = 'smem constant byte address 0x4 - core index']
  #allocation1 [shape = 'u32[144,128]{1,0:T(1,128)}', space=vmem, size = 0x12000, scoped, tag = 'internal scratch']
  #allocation2 [shape = 'f32[1,32,384]{2,1,0:T(8,128)}', space=vmem, size = 0xc000, scoped, tag = 'scratch operand']
  #allocation3 [shape = 'f32[1,384]{1,0:T(1,128)}', space=vmem, size = 0x600, scoped, tag = 'scratch operand']
  #allocation4 [shape = 'f32[1,384]{1,0:T(1,128)}', space=vmem, size = 0x600, scoped, tag = 'scratch operand']
  #allocation5 [shape = 'f32[1,384]{1,0:T(1,128)}', space=vmem, size = 0x600, scoped, tag = 'scratch operand']
  %s0 = inlined_call_operand.vmem [shape: bf16[1,44,128], index: 0, kind: input, shape index: {}]
  %s1 = inlined_call_operand.vmem [shape: bf16[7,128,384], index: 1, kind: input, shape index: {}]
  %s2 = inlined_call_operand.vmem [shape: f32[1,384], index: 2, kind: input, shape index: {}]
  %s3 = inlined_call_operand.vmem [shape: f32[1,24], index: 3, kind: input, shape index: {}]
  %s4 = inlined_call_operand.vmem [shape: f32[1,24], index: 4, kind: input, shape index: {}]
  %s5 = inlined_call_operand.vmem [shape: f32[384,24], index: 5, kind: input, shape index: {}]
  %s6 = inlined_call_operand.vmem [shape: f32[24,384], index: 6, kind: input, shape index: {}]
  %s7 = inlined_call_operand.vmem [shape: f32[1,32,384], index: 7, kind: output, shape index: {}]
  %s8 = sld [smem:[#allocation0]]
  $region77: #{multi_scale_block.1} parent=0
    _
  %s10 = ssub.s32 1, %s8
  %s11 = scalar_select 0, %s10, %s8
  loop: start=0, step=1, limit=4
  $region2: #{multi_scale_block.1} parent=0 // loop_pre_header
    _
  $region3: #{multi_scale_block.1} parent=0 // loop_header
    %s13 = sphi 0, %s17
    %p14 = scmp.ge.s32.totalorder %s13, 4
    %s20 = sphi 0, %s32
    %s21 = sphi 0, %s28
    %s22 = sphi 0, %s20
    %s23 = sphi 0, %s21
    %s24 = sphi 0, %s22
    %s25 = sphi 0, %s23
    %s39 = sphi 0, %s41
    %s42 = sphi 0, %s39
    %s43 = sphi 0, %s42
    %s59 = sphi 0, %s43
    %s63 = sphi 0, %s63
    %s65 = sphi 0, %s63
    %s66 = sphi 0, %s65
    %s80 = sphi 0, %s66
    %s84 = sphi 0, %s84
    %s86 = sphi 0, %s84
    %s87 = sphi 0, %s86
    %s101 = sphi 0, %s87
    %s105 = sphi 0, %s105
    %s107 = sphi 0, %s105
    %s108 = sphi 0, %s107
    %s122 = sphi 0, %s108
    %s126 = sphi 0, %s126
    %s128 = sphi 0, %s126
    %s129 = sphi 0, %s128
    %s143 = sphi 0, %s129
    %s147 = sphi 0, %s147
    %s149 = sphi 0, %s147
    %s150 = sphi 0, %s149
    %s164 = sphi 0, %s150
    %s168 = sphi 0, %s168
    %s170 = sphi 0, %s168
    %s171 = sphi 0, %s170
    %s185 = sphi 0, %s171
    %s193 = sphi 0, %s195
    %s196 = sphi 0, %s193
    %s197 = sphi 0, %s196
    %s213 = sphi 0, %s197
  $region4: #{multi_scale_block.1} parent=0 // loop_header_branch
    %16 = sbr.rel (%p14) target = $region8
  $region5: #{multi_scale_block.1} parent=0 // loop_body
    %s18 = ssub.s32 %s13, 1
    %s19 = ssub.s32 %s13, 2
    %s26 = sadd.s32 1, %s21
    %p27 = scmp.ge.s32.totalorder %s26, 1
    %s28 = scalar_select %p27, 0, %s26
    %s29 = sadd.s32 1, %s20
    %s30 = scalar_select %p27, %s29, %s20
    %p31 = scmp.ge.s32.totalorder %s30, 2
    %s32 = scalar_select %p31, 0, %s30
    %s33 = ssub.s32 1, %s20
    %s34 = smul.u32 %s21, %s33
    %s35 = ssub.s32 1, %s32
    %s36 = smul.u32 %s28, %s35
    %s37 = ssub.s32 %s34, %s36
    %p38 = scmp.eq.s32.totalorder %s37, 0
    %s40 = sadd.s32 %s39, 1
    %s41 = scalar_select %p38, %s39, %s40
    %p44 = pneg %p38
    %p45 = scmp.eq.s32.totalorder %s13, 1
    %p46 = por %p44, %p45
    %p47 = scmp.ne.s32.totalorder %s39, %s42
    %p48 = scmp.eq.s32.totalorder %s13, 0
    %p49 = por %p47, %p48
    %p50 = scmp.ne.s32.totalorder %s39, %s42
    %p51 = scmp.eq.s32.totalorder %s18, 1
    %p52 = por %p50, %p51
    %p53 = scmp.ne.s32.totalorder %s42, %s43
    %p54 = scmp.eq.s32.totalorder %s18, 0
    %p55 = por %p53, %p54
    %p56 = scmp.ne.s32.totalorder %s42, %s43
    %p57 = scmp.eq.s32.totalorder %s19, 1
    %p58 = por %p56, %p57
    %p60 = scmp.ne.s32.totalorder %s43, %s59
    %p61 = scmp.eq.s32.totalorder %s19, 0
    %p62 = por %p60, %p61
    %s64 = sadd.s32 %s63, 1
    %p67 = scmp.eq.s32.totalorder %s13, 1
    %p68 = scmp.ne.s32.totalorder %s63, %s65
    %p69 = scmp.eq.s32.totalorder %s13, 0
    %p70 = por %p68, %p69
    %p71 = scmp.ne.s32.totalorder %s63, %s65
    %p72 = scmp.eq.s32.totalorder %s18, 1
    %p73 = por %p71, %p72
    %p74 = scmp.ne.s32.totalorder %s65, %s66
    %p75 = scmp.eq.s32.totalorder %s18, 0
    %p76 = por %p74, %p75
    %p77 = scmp.ne.s32.totalorder %s65, %s66
    %p78 = scmp.eq.s32.totalorder %s19, 1
    %p79 = por %p77, %p78
    %p81 = scmp.ne.s32.totalorder %s66, %s80
    %p82 = scmp.eq.s32.totalorder %s19, 0
    %p83 = por %p81, %p82
    %s85 = sadd.s32 %s84, 1
    %p88 = scmp.eq.s32.totalorder %s13, 1
    %p89 = scmp.ne.s32.totalorder %s84, %s86
    %p90 = scmp.eq.s32.totalorder %s13, 0
    %p91 = por %p89, %p90
    %p92 = scmp.ne.s32.totalorder %s84, %s86
    %p93 = scmp.eq.s32.totalorder %s18, 1
    %p94 = por %p92, %p93
    %p95 = scmp.ne.s32.totalorder %s86, %s87
    %p96 = scmp.eq.s32.totalorder %s18, 0
    %p97 = por %p95, %p96
    %p98 = scmp.ne.s32.totalorder %s86, %s87
    %p99 = scmp.eq.s32.totalorder %s19, 1
    %p100 = por %p98, %p99
    %p102 = scmp.ne.s32.totalorder %s87, %s101
    %p103 = scmp.eq.s32.totalorder %s19, 0
    %p104 = por %p102, %p103
    %s106 = sadd.s32 %s105, 1
    %p109 = scmp.eq.s32.totalorder %s13, 1
    %p110 = scmp.ne.s32.totalorder %s105, %s107
    %p111 = scmp.eq.s32.totalorder %s13, 0
    %p112 = por %p110, %p111
    %p113 = scmp.ne.s32.totalorder %s105, %s107
    %p114 = scmp.eq.s32.totalorder %s18, 1
    %p115 = por %p113, %p114
    %p116 = scmp.ne.s32.totalorder %s107, %s108
    %p117 = scmp.eq.s32.totalorder %s18, 0
    %p118 = por %p116, %p117
    %p119 = scmp.ne.s32.totalorder %s107, %s108
    %p120 = scmp.eq.s32.totalorder %s19, 1
    %p121 = por %p119, %p120
    %p123 = scmp.ne.s32.totalorder %s108, %s122
    %p124 = scmp.eq.s32.totalorder %s19, 0
    %p125 = por %p123, %p124
    %s127 = sadd.s32 %s126, 1
    %p130 = scmp.eq.s32.totalorder %s13, 1
    %p131 = scmp.ne.s32.totalorder %s126, %s128
    %p132 = scmp.eq.s32.totalorder %s13, 0
    %p133 = por %p131, %p132
    %p134 = scmp.ne.s32.totalorder %s126, %s128
    %p135 = scmp.eq.s32.totalorder %s18, 1
    %p136 = por %p134, %p135
    %p137 = scmp.ne.s32.totalorder %s128, %s129
    %p138 = scmp.eq.s32.totalorder %s18, 0
    %p139 = por %p137, %p138
    %p140 = scmp.ne.s32.totalorder %s128, %s129
    %p141 = scmp.eq.s32.totalorder %s19, 1
    %p142 = por %p140, %p141
    %p144 = scmp.ne.s32.totalorder %s129, %s143
    %p145 = scmp.eq.s32.totalorder %s19, 0
    %p146 = por %p144, %p145
    %s148 = sadd.s32 %s147, 1
    %p151 = scmp.eq.s32.totalorder %s13, 1
    %p152 = scmp.ne.s32.totalorder %s147, %s149
    %p153 = scmp.eq.s32.totalorder %s13, 0
    %p154 = por %p152, %p153
    %p155 = scmp.ne.s32.totalorder %s147, %s149
    %p156 = scmp.eq.s32.totalorder %s18, 1
    %p157 = por %p155, %p156
    %p158 = scmp.ne.s32.totalorder %s149, %s150
    %p159 = scmp.eq.s32.totalorder %s18, 0
    %p160 = por %p158, %p159
    %p161 = scmp.ne.s32.totalorder %s149, %s150
    %p162 = scmp.eq.s32.totalorder %s19, 1
    %p163 = por %p161, %p162
    %p165 = scmp.ne.s32.totalorder %s150, %s164
    %p166 = scmp.eq.s32.totalorder %s19, 0
    %p167 = por %p165, %p166
    %s169 = sadd.s32 %s168, 1
    %p172 = scmp.eq.s32.totalorder %s13, 1
    %p173 = scmp.ne.s32.totalorder %s168, %s170
    %p174 = scmp.eq.s32.totalorder %s13, 0
    %p175 = por %p173, %p174
    %p176 = scmp.ne.s32.totalorder %s168, %s170
    %p177 = scmp.eq.s32.totalorder %s18, 1
    %p178 = por %p176, %p177
    %p179 = scmp.ne.s32.totalorder %s170, %s171
    %p180 = scmp.eq.s32.totalorder %s18, 0
    %p181 = por %p179, %p180
    %p182 = scmp.ne.s32.totalorder %s170, %s171
    %p183 = scmp.eq.s32.totalorder %s19, 1
    %p184 = por %p182, %p183
    %p186 = scmp.ne.s32.totalorder %s171, %s185
    %p187 = scmp.eq.s32.totalorder %s19, 0
    %p188 = por %p186, %p187
    %s189 = smul.u32 %s21, %s20
    %s190 = smul.u32 %s28, %s32
    %s191 = ssub.s32 %s189, %s190
    %p192 = scmp.eq.s32.totalorder %s191, 0
    %s194 = sadd.s32 %s193, 1
    %s195 = scalar_select %p192, %s193, %s194
    %p198 = pneg %p192
    %p199 = scmp.eq.s32.totalorder %s13, 1
    %p200 = por %p198, %p199
    %p201 = scmp.ne.s32.totalorder %s193, %s196
    %p202 = scmp.eq.s32.totalorder %s13, 0
    %p203 = por %p201, %p202
    %p204 = scmp.ne.s32.totalorder %s193, %s196
    %p205 = scmp.eq.s32.totalorder %s18, 1
    %p206 = por %p204, %p205
    %p207 = scmp.ne.s32.totalorder %s196, %s197
    %p208 = scmp.eq.s32.totalorder %s18, 0
    %p209 = por %p207, %p208
    %p210 = scmp.ne.s32.totalorder %s196, %s197
    %p211 = scmp.eq.s32.totalorder %s19, 1
    %p212 = por %p210, %p211
    %p214 = scmp.ne.s32.totalorder %s197, %s213
    %p215 = scmp.eq.s32.totalorder %s19, 0
    %p216 = por %p214, %p215
    %p217 = scmp.le.s32.totalorder 1, %s13
    %p218 = scmp.lt.s32.totalorder %s13, 3
    %p219 = pnand %p217, %p218
    %p220 = pneg %p219
    // Predicated region
    $region9: #{multi_scale_block.1} parent=5 // pred_check
      _
    $region10: #{multi_scale_block.1} parent=5 // pred_check_branch
      %222 = sbr.rel (%p219) target = $region12
    $region11: #{multi_scale_block.1} parent=5 // pred_region
      %s223 = ssub.s32 %s13, 1
      // Predicated region
      $region13: #{multi_scale_block.1} parent=11 // pred_check
        %p224 = pneg %p76
      $region14: #{multi_scale_block.1} parent=11 // pred_check_branch
        %226 = sbr.rel (%p224) target = $region16
      $region15: #{multi_scale_block.1} parent=11 // pred_region
        _
      $region16: #{multi_scale_block.1} parent=11 // pred_fallthru
        _
      // Predicated region
      $region17: #{multi_scale_block.1} parent=11 // pred_check
        %p227 = pneg %p97
      $region18: #{multi_scale_block.1} parent=11 // pred_check_branch
        %229 = sbr.rel (%p227) target = $region20
      $region19: #{multi_scale_block.1} parent=11 // pred_region
        _
      $region20: #{multi_scale_block.1} parent=11 // pred_fallthru
        _
      // Predicated region
      $region21: #{multi_scale_block.1} parent=11 // pred_check
        %p230 = pneg %p118
      $region22: #{multi_scale_block.1} parent=11 // pred_check_branch
        %232 = sbr.rel (%p230) target = $region24
      $region23: #{multi_scale_block.1} parent=11 // pred_region
        _
      $region24: #{multi_scale_block.1} parent=11 // pred_fallthru
        _
      // Predicated region
      $region25: #{multi_scale_block.1} parent=11 // pred_check
        %p233 = pneg %p139
      $region26: #{multi_scale_block.1} parent=11 // pred_check_branch
        %235 = sbr.rel (%p233) target = $region28
      $region27: #{multi_scale_block.1} parent=11 // pred_region
        _
      $region28: #{multi_scale_block.1} parent=11 // pred_fallthru
        _
      // Predicated region
      $region29: #{multi_scale_block.1} parent=11 // pred_check
        %p236 = pneg %p160
      $region30: #{multi_scale_block.1} parent=11 // pred_check_branch
        %238 = sbr.rel (%p236) target = $region32
      $region31: #{multi_scale_block.1} parent=11 // pred_region
        _
      $region32: #{multi_scale_block.1} parent=11 // pred_fallthru
        _
      // Predicated region
      $region33: #{multi_scale_block.1} parent=11 // pred_check
        %p239 = pneg %p181
      $region34: #{multi_scale_block.1} parent=11 // pred_check_branch
        %241 = sbr.rel (%p239) target = $region36
      $region35: #{multi_scale_block.1} parent=11 // pred_region
        _
      $region36: #{multi_scale_block.1} parent=11 // pred_fallthru
        _
    $region12: #{multi_scale_block.1} parent=5 // pred_fallthru
      _
    %p242 = scmp.lt.s32.totalorder %s13, 2
    // Predicated region
    $region37: #{multi_scale_block.1} parent=5 // pred_check
      %p243 = pneg %p242
    $region38: #{multi_scale_block.1} parent=5 // pred_check_branch
      %245 = sbr.rel (%p243) target = $region40
    $region39: #{multi_scale_block.1} parent=5 // pred_region
      // Predicated region
      $region41: #{multi_scale_block.1} parent=39 // pred_check
        %p246 = pneg %p49
      $region42: #{multi_scale_block.1} parent=39 // pred_check_branch
        %248 = sbr.rel (%p246) target = $region44
      $region43: #{multi_scale_block.1} parent=39 // pred_region
        %s249 = ssub.s32 1, %s20
        %s250 = smul.u32 %s21, %s249
        %p251 = scmp.lt.s32.totalorder %s250, 0
        %s252 = scalar_select %p251, %s250, 0
        %s253 = smul.addr %s252, 6
        %s254 = smul.addr %s253, 4
        %s255 = scalar_lea.vmem %s0, %s254
        %s256 = ssub.s32 1, %s20
        %s257 = smul.u32 %s21, %s256
      $region44: #{multi_scale_block.1} parent=39 // pred_fallthru
        _
    $region40: #{multi_scale_block.1} parent=5 // pred_fallthru
      _
    %p258 = scmp.le.s32.totalorder 1, %s13
    %p259 = scmp.lt.s32.totalorder %s13, 3
    %p260 = pnand %p258, %p259
    %p261 = pneg %p260
    // Predicated region
    $region45: #{multi_scale_block.1} parent=5 // pred_check
      _
    $region46: #{multi_scale_block.1} parent=5 // pred_check_branch
      %263 = sbr.rel (%p260) target = $region48
    $region47: #{multi_scale_block.1} parent=5 // pred_region
      %s264 = ssub.s32 %s13, 1
      %s265 = ssub.s32 1, %s22
      %s266 = smul.u32 %s23, %s265
      %p267 = scmp.lt.s32.totalorder %s266, 0
      %s268 = scalar_select %p267, %s266, 0
      %s269 = smul.addr %s268, 6
      %s270 = smul.addr %s269, 4
      %s271 = scalar_lea.vmem %s0, %s270
      %p272 = pneg %p55
      %p273 = pneg %p52
      %p274 = pneg %p76
      %p275 = pneg %p73
      %p276 = pneg %p97
      %p277 = pneg %p94
      %p278 = pneg %p118
      %p279 = pneg %p115
      %p280 = pneg %p139
      %p281 = pneg %p136
      %p282 = pneg %p160
      %p283 = pneg %p157
      %p284 = pneg %p181
      %p285 = pneg %p178
      %p286 = pneg %p209
      %p287 = pneg %p206
      %s288 = smul.u32 %s23, %s22
      %p289 = scmp.lt.s32.totalorder %s288, 0
      %s290 = scalar_select %p289, %s288, 0
      %s291 = smul.addr %s290, 12
      %s292 = smul.addr %s291, 8
      %s293 = scalar_lea.vmem %s7, %s292
      %s294 = ssub.s32 1, %s22
      %s295 = smul.u32 %s23, %s294
      %p296 = scmp.lt.s32.totalorder %s295, 0
      %s297 = scalar_select %p296, %s295, 0
      %s298 = smul.addr %s297, 6
      %s299 = smul.addr %s298, 4
      %s300 = scalar_lea.vmem %s0, %s299
      %s301 = ssub.s32 1, %s22
      %s302 = smul.u32 %s23, %s301
      %s303 = smul.u32 %s23, %s22
      %p304 = scmp.lt.s32.totalorder %s303, 0
      %s305 = scalar_select %p304, %s303, 0
      %s306 = smul.addr %s305, 12
      %s307 = smul.addr %s306, 8
      %s308 = scalar_lea.vmem %s7, %s307
      %s309 = smul.u32 %s23, %s22
      %p311 = scmp.eq.s32.totalorder %s22, 0
      // Predicated region
      $region49: #{multi_scale_block.1} parent=47 // pred_check
        %p312 = pneg %p311
      $region50: #{multi_scale_block.1} parent=47 // pred_check_branch
        %314 = sbr.rel (%p312) target = $region52
      $region51: #{multi_scale_block.1} parent=47 // pred_region
        %p315 = scmp.eq.s32.totalorder %s23, 0
        // Predicated region
        $region53: #{multi_scale_block.1} parent=51 // pred_check
          %p316 = pneg %p315
        $region54: #{multi_scale_block.1} parent=51 // pred_check_branch
          %318 = sbr.rel (%p316) target = $region56
        $region55: #{multi_scale_block.1} parent=51 // pred_region
          %v319 = vlaneseq
          %vm320 = vcmp.ge.s32.totalorder %v319, 0
          %vm321 = vcmp.lt.s32.totalorder %v319, 384
          %vm322 = vmand %vm320, %vm321
          %323 = vst.msk [vmem:[#allocation3] sm:$0x7] %vm322, 0.0
        $region56: #{multi_scale_block.1} parent=51 // pred_fallthru
          _
        %v324 = vld [vmem:[%s300] sm:$0xf]
        %v325 = vld [vmem:[%s300 + $0x4] sm:$0xf]
        %v326 = vld [vmem:[%s300 + $0x8] sm:$0xf]
        %v327 = vld [vmem:[%s300 + $0xc] sm:$0xf]
        %v328 = vld [vmem:[%s300 + $0x10] sm:$0xf]
        %v329 = vld [vmem:[%s300 + $0x14] sm:$0x3]
        %v330 = vld [vmem:[%s1] sm:$0xff]
        %v331 = vld [vmem:[%s1 + $0x8] sm:$0xf]
        %v332 = vld [vmem:[%s1 + $0xc] sm:$0xff]
        %v333 = vld [vmem:[%s1 + $0x14] sm:$0xf]
        %v334 = vld [vmem:[%s1 + $0x18] sm:$0xff]
        %v335 = vld [vmem:[%s1 + $0x20] sm:$0xf]
        %v336 = vld [vmem:[%s1 + $0x24] sm:$0xff]
        %v337 = vld [vmem:[%s1 + $0x2c] sm:$0xf]
        %v338 = vld [vmem:[%s1 + $0x30] sm:$0xff]
        %v339 = vld [vmem:[%s1 + $0x38] sm:$0xf]
        %v340 = vld [vmem:[%s1 + $0x3c] sm:$0xff]
        %v341 = vld [vmem:[%s1 + $0x44] sm:$0xf]
        %v342 = vld [vmem:[%s1 + $0x48] sm:$0xff]
        %v343 = vld [vmem:[%s1 + $0x50] sm:$0xf]
        %v344 = vld [vmem:[%s1 + $0x54] sm:$0xff]
        %v345 = vld [vmem:[%s1 + $0x5c] sm:$0xf]
        %v346 = vld [vmem:[%s1 + $0x60] sm:$0xff]
        %v347 = vld [vmem:[%s1 + $0x68] sm:$0xf]
        %v348 = vld [vmem:[%s1 + $0x6c] sm:$0xff]
        %v349 = vld [vmem:[%s1 + $0x74] sm:$0xf]
        %v350 = vld [vmem:[%s1 + $0x78] sm:$0xff]
        %v351 = vld [vmem:[%s1 + $0x80] sm:$0xf]
        %v352 = vld [vmem:[%s1 + $0x84] sm:$0xff]
        %v353 = vld [vmem:[%s1 + $0x8c] sm:$0xf]
        %v354 = vld [vmem:[%s1 + $0x90] sm:$0xff]
        %v355 = vld [vmem:[%s1 + $0x98] sm:$0xf]
        %v356 = vld [vmem:[%s1 + $0x9c] sm:$0xff]
        %v357 = vld [vmem:[%s1 + $0xa4] sm:$0xf]
        %v358 = vld [vmem:[%s1 + $0xa8] sm:$0xff]
        %v359 = vld [vmem:[%s1 + $0xb0] sm:$0xf]
        %v360 = vld [vmem:[%s1 + $0xb4] sm:$0xff]
        %v361 = vld [vmem:[%s1 + $0xbc] sm:$0xf]
        %s362 = scalar_lea.vmem %s1, 192
        %v363 = vld [vmem:[%s362] sm:$0xff]
        %v364 = vld [vmem:[%s362 + $0x8] sm:$0xf]
        %v365 = vld [vmem:[%s362 + $0xc] sm:$0xff]
        %v366 = vld [vmem:[%s362 + $0x14] sm:$0xf]
        %v367 = vld [vmem:[%s362 + $0x18] sm:$0xff]
        %v368 = vld [vmem:[%s362 + $0x20] sm:$0xf]
        %v369 = vld [vmem:[%s362 + $0x24] sm:$0xff]
        %v370 = vld [vmem:[%s362 + $0x2c] sm:$0xf]
        %v371 = vld [vmem:[%s362 + $0x30] sm:$0xff]
        %v372 = vld [vmem:[%s362 + $0x38] sm:$0xf]
        %v373 = vld [vmem:[%s362 + $0x3c] sm:$0xff]
        %v374 = vld [vmem:[%s362 + $0x44] sm:$0xf]
        %v375 = vld [vmem:[%s362 + $0x48] sm:$0xff]
        %v376 = vld [vmem:[%s362 + $0x50] sm:$0xf]
        %v377 = vld [vmem:[%s362 + $0x54] sm:$0xff]
        %v378 = vld [vmem:[%s362 + $0x5c] sm:$0xf]
        %v379 = vld [vmem:[%s362 + $0x60] sm:$0xff]
        %v380 = vld [vmem:[%s362 + $0x68] sm:$0xf]
        %v381 = vld [vmem:[%s362 + $0x6c] sm:$0xff]
        %v382 = vld [vmem:[%s362 + $0x74] sm:$0xf]
        %v383 = vld [vmem:[%s362 + $0x78] sm:$0xff]
        %v384 = vld [vmem:[%s362 + $0x80] sm:$0xf]
        %v385 = vld [vmem:[%s362 + $0x84] sm:$0xff]
        %v386 = vld [vmem:[%s362 + $0x8c] sm:$0xf]
        %v387 = vld [vmem:[%s362 + $0x90] sm:$0xff]
        %v388 = vld [vmem:[%s362 + $0x98] sm:$0xf]
        %v389 = vld [vmem:[%s362 + $0x9c] sm:$0xff]
        %v390 = vld [vmem:[%s362 + $0xa4] sm:$0xf]
        %v391 = vld [vmem:[%s362 + $0xa8] sm:$0xff]
        %v392 = vld [vmem:[%s362 + $0xb0] sm:$0xf]
        %v393 = vld [vmem:[%s362 + $0xb4] sm:$0xff]
        %v394 = vld [vmem:[%s362 + $0xbc] sm:$0xf]
        %v400 = vunpack.c.l.b16 %v324
        %v401 = vunpack.c.l.b16 %v325
        %v402 = vunpack.c.l.b16 %v326
        %v403 = vunpack.c.l.b16 %v327
        %v404 = vunpack.c.l.b16 %v328
        %v405 = vpack.c.b16 %v401, %v400
        %v406 = vpack.c.b16 %v403, %v402
        %v407 = vpack.c.b16 %v404, %v404
        %vm408 = vcmask 1046528
        %v409 = vrot.slane %v405, 1
        %v410 = vrot.slane %v406, 1
        %v411 = vsel %vm408, %v409, %v410
        %v412 = vrot.slane %v407, 1
        %v413 = vsel %vm408, %v410, %v412
        %v432 = vunpack.c.l.b16 %v363
        %v433 = vunpack.c.l.b16 %v365
        %v434 = vunpack.c.l.b16 %v367
        %v435 = vunpack.c.l.b16 %v369
        %v436 = vunpack.c.l.b16 %v371
        %v437 = vunpack.c.l.b16 %v373
        %v438 = vunpack.c.l.b16 %v375
        %v439 = vunpack.c.l.b16 %v377
        %v440 = vunpack.c.l.b16 %v379
        %v441 = vunpack.c.l.b16 %v381
        %v442 = vunpack.c.l.b16 %v383
        %v443 = vunpack.c.l.b16 %v385
        %v444 = vunpack.c.l.b16 %v387
        %v445 = vunpack.c.l.b16 %v389
        %v446 = vunpack.c.l.b16 %v391
        %v447 = vunpack.c.l.b16 %v393
        %v448 = vpack.c.b16 %v433, %v432
        %v449 = vpack.c.b16 %v435, %v434
        %v450 = vpack.c.b16 %v437, %v436
        %v451 = vpack.c.b16 %v439, %v438
        %v452 = vpack.c.b16 %v441, %v440
        %v453 = vpack.c.b16 %v443, %v442
        %v454 = vpack.c.b16 %v445, %v444
        %v455 = vpack.c.b16 %v447, %v446
        %464 = vmatprep.subr.bf16.mxu0 0
        %465 = vmatpush1.bf16.msra.mxu0 %v448
        %466 = vmatprep.subr.bf16.mxu0 0
        %467 = vmatpush1.bf16.msra.mxu0 %v449
        %468 = vmatprep.subr.bf16.mxu0 0
        %469 = vmatpush1.bf16.msra.mxu0 %v450
        %470 = vmatprep.subr.bf16.mxu0 0
        %471 = vmatpush1.bf16.msra.mxu0 %v451
        %472 = vmatprep.subr.bf16.mxu0 0
        %473 = vmatpush1.bf16.msra.mxu0 %v452
        %474 = vmatprep.subr.bf16.mxu0 0
        %475 = vmatpush1.bf16.msra.mxu0 %v453
        %476 = vmatprep.subr.bf16.mxu0 0
        %477 = vmatpush1.bf16.msra.mxu0 %v454
        %478 = vmatprep.subr.bf16.mxu0 0
        %479 = vmatpush1.bf16.msra.mxu0 %v455
        %480 = vmatprep.subr.bf16.mxu0 0
        %481 = vmatpush1.bf16.msra.mxu0 0
        %482 = vmatprep.subr.bf16.mxu0 0
        %483 = vmatpush1.bf16.msra.mxu0 0
        %484 = vmatprep.subr.bf16.mxu0 0
        %485 = vmatpush1.bf16.msra.mxu0 0
        %486 = vmatprep.subr.bf16.mxu0 0
        %487 = vmatpush1.bf16.msra.mxu0 0
        %488 = vmatprep.subr.bf16.mxu0 0
        %489 = vmatpush1.bf16.msra.mxu0 0
        %490 = vmatprep.subr.bf16.mxu0 0
        %491 = vmatpush1.bf16.msra.mxu0 0
        %492 = vmatprep.subr.bf16.mxu0 0
        %493 = vmatpush1.bf16.msra.mxu0 0
        %494 = vmatprep.subr.bf16.mxu0 0
        %495 = vmatpush1.bf16.msra.mxu0 0
        %496 = vmatprep.mubr.bf16.mxu0 0
        %497 = vmatmul.mubr.bf16.gmra.mrb[0].mxu0 %v411
        %v498 = vpop.f32.mrb[0].mxu0
        %v499 = vadd.f32 0.0, %v498
        %v500 = vpop.f32.mrb[0].mxu0
        %v501 = vpop.f32.mrb[0].mxu0
        %v502 = vadd.f32 0.0, %v501
        %v503 = vpop.f32.mrb[0].mxu0
        %504 = vmatprep.mubr.bf16.mxu0 0
        %505 = vmatmul.mubr.bf16.gmra.mrb[0].mxu0 %v413
        %v506 = vpop.f32.mrb[0].mxu0
        %v507 = vadd.f32 0.0, %v506
        %v508 = vpop.f32.mrb[0].mxu0
        %v509 = vpop.f32.mrb[0].mxu0
        %v510 = vadd.f32 0.0, %v509
        %v511 = vpop.f32.mrb[0].mxu0
        %512 = vdwg.mxu0
        %v531 = vunpack.c.l.b16 %v330
        %v532 = vunpack.c.l.b16 %v332
        %v533 = vunpack.c.l.b16 %v334
        %v534 = vunpack.c.l.b16 %v336
        %v535 = vunpack.c.l.b16 %v338
        %v536 = vunpack.c.l.b16 %v340
        %v537 = vunpack.c.l.b16 %v342
        %v538 = vunpack.c.l.b16 %v344
        %v539 = vunpack.c.l.b16 %v346
        %v540 = vunpack.c.l.b16 %v348
        %v541 = vunpack.c.l.b16 %v350
        %v542 = vunpack.c.l.b16 %v352
        %v543 = vunpack.c.l.b16 %v354
        %v544 = vunpack.c.l.b16 %v356
        %v545 = vunpack.c.l.b16 %v358
        %v546 = vunpack.c.l.b16 %v360
        %v547 = vpack.c.b16 %v532, %v531
        %v548 = vpack.c.b16 %v534, %v533
        %v549 = vpack.c.b16 %v536, %v535
        %v550 = vpack.c.b16 %v538, %v537
        %v551 = vpack.c.b16 %v540, %v539
        %v552 = vpack.c.b16 %v542, %v541
        %v553 = vpack.c.b16 %v544, %v543
        %v554 = vpack.c.b16 %v546, %v545
        %563 = vmatprep.subr.bf16.mxu0 0
        %564 = vmatpush1.bf16.msra.mxu0 %v547
        %565 = vmatprep.subr.bf16.mxu0 0
        %566 = vmatpush1.bf16.msra.mxu0 %v548
        %567 = vmatprep.subr.bf16.mxu0 0
        %568 = vmatpush1.bf16.msra.mxu0 %v549
        %569 = vmatprep.subr.bf16.mxu0 0
        %570 = vmatpush1.bf16.msra.mxu0 %v550
        %571 = vmatprep.subr.bf16.mxu0 0
        %572 = vmatpush1.bf16.msra.mxu0 %v551
        %573 = vmatprep.subr.bf16.mxu0 0
        %574 = vmatpush1.bf16.msra.mxu0 %v552
        %575 = vmatprep.subr.bf16.mxu0 0
        %576 = vmatpush1.bf16.msra.mxu0 %v553
        %577 = vmatprep.subr.bf16.mxu0 0
        %578 = vmatpush1.bf16.msra.mxu0 %v554
        %579 = vmatprep.subr.bf16.mxu0 0
        %580 = vmatpush1.bf16.msra.mxu0 0
        %581 = vmatprep.subr.bf16.mxu0 0
        %582 = vmatpush1.bf16.msra.mxu0 0
        %583 = vmatprep.subr.bf16.mxu0 0
        %584 = vmatpush1.bf16.msra.mxu0 0
        %585 = vmatprep.subr.bf16.mxu0 0
        %586 = vmatpush1.bf16.msra.mxu0 0
        %587 = vmatprep.subr.bf16.mxu0 0
        %588 = vmatpush1.bf16.msra.mxu0 0
        %589 = vmatprep.subr.bf16.mxu0 0
        %590 = vmatpush1.bf16.msra.mxu0 0
        %591 = vmatprep.subr.bf16.mxu0 0
        %592 = vmatpush1.bf16.msra.mxu0 0
        %593 = vmatprep.subr.bf16.mxu0 0
        %594 = vmatpush1.bf16.msra.mxu0 0
        %595 = vmatprep.mubr.bf16.mxu0 0
        %596 = vmatmul.mubr.bf16.gmra.mrb[0].mxu0 %v405
        %v597 = vpop.f32.mrb[0].mxu0
        %v598 = vadd.f32 %v499, %v597
        %v599 = vpop.f32.mrb[0].mxu0
        %v600 = vpop.f32.mrb[0].mxu0
        %v601 = vadd.f32 %v502, %v600
        %v602 = vpop.f32.mrb[0].mxu0
        %603 = vmatprep.mubr.bf16.mxu0 0
        %604 = vmatmul.mubr.bf16.gmra.mrb[0].mxu0 %v406
        %v605 = vpop.f32.mrb[0].mxu0
        %v606 = vadd.f32 %v507, %v605
        %v607 = vpop.f32.mrb[0].mxu0
        %v608 = vpop.f32.mrb[0].mxu0
        %v609 = vadd.f32 %v510, %v608
        %v610 = vpop.f32.mrb[0].mxu0
        %611 = vdwg.mxu0
        %v612 = vunpack.c.h.b16 %v363
        %v613 = vunpack.c.h.b16 %v365
        %v614 = vunpack.c.h.b16 %v367
        %v615 = vunpack.c.h.b16 %v369
        %v616 = vunpack.c.h.b16 %v371
        %v617 = vunpack.c.h.b16 %v373
        %v618 = vunpack.c.h.b16 %v375
        %v619 = vunpack.c.h.b16 %v377
        %v620 = vunpack.c.h.b16 %v379
        %v621 = vunpack.c.h.b16 %v381
        %v622 = vunpack.c.h.b16 %v383
        %v623 = vunpack.c.h.b16 %v385
        %v624 = vunpack.c.h.b16 %v387
        %v625 = vunpack.c.h.b16 %v389
        %v626 = vunpack.c.h.b16 %v391
        %v627 = vunpack.c.h.b16 %v393
        %v628 = vpack.c.b16 %v613, %v612
        %v629 = vpack.c.b16 %v615, %v614
        %v630 = vpack.c.b16 %v617, %v616
        %v631 = vpack.c.b16 %v619, %v618
        %v632 = vpack.c.b16 %v621, %v620
        %v633 = vpack.c.b16 %v623, %v622
        %v634 = vpack.c.b16 %v625, %v624
        %v635 = vpack.c.b16 %v627, %v626
        %644 = vmatprep.subr.bf16.mxu0 0
        %645 = vmatpush1.bf16.msra.mxu0 %v628
        %646 = vmatprep.subr.bf16.mxu0 0
        %647 = vmatpush1.bf16.msra.mxu0 %v629
        %648 = vmatprep.subr.bf16.mxu0 0
        %649 = vmatpush1.bf16.msra.mxu0 %v630
        %650 = vmatprep.subr.bf16.mxu0 0
        %651 = vmatpush1.bf16.msra.mxu0 %v631
        %652 = vmatprep.subr.bf16.mxu0 0
        %653 = vmatpush1.bf16.msra.mxu0 %v632
        %654 = vmatprep.subr.bf16.mxu0 0
        %655 = vmatpush1.bf16.msra.mxu0 %v633
        %656 = vmatprep.subr.bf16.mxu0 0
        %657 = vmatpush1.bf16.msra.mxu0 %v634
        %658 = vmatprep.subr.bf16.mxu0 0
        %659 = vmatpush1.bf16.msra.mxu0 %v635
        %660 = vmatprep.subr.bf16.mxu0 0
        %661 = vmatpush1.bf16.msra.mxu0 0
        %662 = vmatprep.subr.bf16.mxu0 0
        %663 = vmatpush1.bf16.msra.mxu0 0
        %664 = vmatprep.subr.bf16.mxu0 0
        %665 = vmatpush1.bf16.msra.mxu0 0
        %666 = vmatprep.subr.bf16.mxu0 0
        %667 = vmatpush1.bf16.msra.mxu0 0
        %668 = vmatprep.subr.bf16.mxu0 0
        %669 = vmatpush1.bf16.msra.mxu0 0
        %670 = vmatprep.subr.bf16.mxu0 0
        %671 = vmatpush1.bf16.msra.mxu0 0
        %672 = vmatprep.subr.bf16.mxu0 0
        %673 = vmatpush1.bf16.msra.mxu0 0
        %674 = vmatprep.subr.bf16.mxu0 0
        %675 = vmatpush1.bf16.msra.mxu0 0
        %676 = vmatprep.mubr.bf16.mxu0 0
        %677 = vmatmul.mubr.bf16.gmra.mrb[0].mxu0 %v411
        %v678 = vpop.f32.mrb[0].mxu0
        %v679 = vadd.f32 0.0, %v678
        %v680 = vpop.f32.mrb[0].mxu0
        %v681 = vpop.f32.mrb[0].mxu0
        %v682 = vadd.f32 0.0, %v681
        %v683 = vpop.f32.mrb[0].mxu0
        %684 = vmatprep.mubr.bf16.mxu0 0
        %685 = vmatmul.mubr.bf16.gmra.mrb[0].mxu0 %v413
        %v686 = vpop.f32.mrb[0].mxu0
        %v687 = vadd.f32 0.0, %v686
        %v688 = vpop.f32.mrb[0].mxu0
        %v689 = vpop.f32.mrb[0].mxu0
        %v690 = vadd.f32 0.0, %v689
        %v691 = vpop.f32.mrb[0].mxu0
        %692 = vdwg.mxu0
        %v693 = vunpack.c.h.b16 %v330
        %v694 = vunpack.c.h.b16 %v332
        %v695 = vunpack.c.h.b16 %v334
        %v696 = vunpack.c.h.b16 %v336
        %v697 = vunpack.c.h.b16 %v338
        %v698 = vunpack.c.h.b16 %v340
        %v699 = vunpack.c.h.b16 %v342
        %v700 = vunpack.c.h.b16 %v344
        %v701 = vunpack.c.h.b16 %v346
        %v702 = vunpack.c.h.b16 %v348
        %v703 = vunpack.c.h.b16 %v350
        %v704 = vunpack.c.h.b16 %v352
        %v705 = vunpack.c.h.b16 %v354
        %v706 = vunpack.c.h.b16 %v356
        %v707 = vunpack.c.h.b16 %v358
        %v708 = vunpack.c.h.b16 %v360
        %v709 = vpack.c.b16 %v694, %v693
        %v710 = vpack.c.b16 %v696, %v695
        %v711 = vpack.c.b16 %v698, %v697
        %v712 = vpack.c.b16 %v700, %v699
        %v713 = vpack.c.b16 %v702, %v701
        %v714 = vpack.c.b16 %v704, %v703
        %v715 = vpack.c.b16 %v706, %v705
        %v716 = vpack.c.b16 %v708, %v707
        %725 = vmatprep.subr.bf16.mxu0 0
        %726 = vmatpush1.bf16.msra.mxu0 %v709
        %727 = vmatprep.subr.bf16.mxu0 0
        %728 = vmatpush1.bf16.msra.mxu0 %v710
        %729 = vmatprep.subr.bf16.mxu0 0
        %730 = vmatpush1.bf16.msra.mxu0 %v711
        %731 = vmatprep.subr.bf16.mxu0 0
        %732 = vmatpush1.bf16.msra.mxu0 %v712
        %733 = vmatprep.subr.bf16.mxu0 0
        %734 = vmatpush1.bf16.msra.mxu0 %v713
        %735 = vmatprep.subr.bf16.mxu0 0
        %736 = vmatpush1.bf16.msra.mxu0 %v714
        %737 = vmatprep.subr.bf16.mxu0 0
        %738 = vmatpush1.bf16.msra.mxu0 %v715
        %739 = vmatprep.subr.bf16.mxu0 0
        %740 = vmatpush1.bf16.msra.mxu0 %v716
        %741 = vmatprep.subr.bf16.mxu0 0
        %742 = vmatpush1.bf16.msra.mxu0 0
        %743 = vmatprep.subr.bf16.mxu0 0
        %744 = vmatpush1.bf16.msra.mxu0 0
        %745 = vmatprep.subr.bf16.mxu0 0
        %746 = vmatpush1.bf16.msra.mxu0 0
        %747 = vmatprep.subr.bf16.mxu0 0
        %748 = vmatpush1.bf16.msra.mxu0 0
        %749 = vmatprep.subr.bf16.mxu0 0
        %750 = vmatpush1.bf16.msra.mxu0 0
        %751 = vmatprep.subr.bf16.mxu0 0
        %752 = vmatpush1.bf16.msra.mxu0 0
        %753 = vmatprep.subr.bf16.mxu0 0
        %754 = vmatpush1.bf16.msra.mxu0 0
        %755 = vmatprep.subr.bf16.mxu0 0
        %756 = vmatpush1.bf16.msra.mxu0 0
        %757 = vmatprep.mubr.bf16.mxu0 0
        %758 = vmatmul.mubr.bf16.gmra.mrb[0].mxu0 %v405
        %v759 = vpop.f32.mrb[0].mxu0
        %v760 = vadd.f32 %v679, %v759
        %v761 = vpop.f32.mrb[0].mxu0
        %v762 = vpop.f32.mrb[0].mxu0
        %v763 = vadd.f32 %v682, %v762
        %v764 = vpop.f32.mrb[0].mxu0
        %765 = vmatprep.mubr.bf16.mxu0 0
        %766 = vmatmul.mubr.bf16.gmra.mrb[0].mxu0 %v406
        %v767 = vpop.f32.mrb[0].mxu0
        %v768 = vadd.f32 %v687, %v767
        %v769 = vpop.f32.mrb[0].mxu0
        %v770 = vpop.f32.mrb[0].mxu0
        %v771 = vadd.f32 %v690, %v770
        %v772 = vpop.f32.mrb[0].mxu0
        %773 = vdwg.mxu0
        %v790 = vunpack.c.l.b16 %v364
        %v791 = vunpack.c.l.b16 %v366
        %v792 = vunpack.c.l.b16 %v368
        %v793 = vunpack.c.l.b16 %v370
        %v794 = vunpack.c.l.b16 %v372
        %v795 = vunpack.c.l.b16 %v374
        %v796 = vunpack.c.l.b16 %v376
        %v797 = vunpack.c.l.b16 %v378
        %v798 = vunpack.c.l.b16 %v380
        %v799 = vunpack.c.l.b16 %v382
        %v800 = vunpack.c.l.b16 %v384
        %v801 = vunpack.c.l.b16 %v386
        %v802 = vunpack.c.l.b16 %v388
        %v803 = vunpack.c.l.b16 %v390
        %v804 = vunpack.c.l.b16 %v392
        %v805 = vunpack.c.l.b16 %v394
        %v806 = vpack.c.b16 %v791, %v790
        %v807 = vpack.c.b16 %v793, %v792
        %v808 = vpack.c.b16 %v795, %v794
        %v809 = vpack.c.b16 %v797, %v796
        %v810 = vpack.c.b16 %v799, %v798
        %v811 = vpack.c.b16 %v801, %v800
        %v812 = vpack.c.b16 %v803, %v802
        %v813 = vpack.c.b16 %v805, %v804
        %822 = vmatprep.subr.bf16.mxu0 0
        %823 = vmatpush1.bf16.msra.mxu0 %v806
        %824 = vmatprep.subr.bf16.mxu0 0
        %825 = vmatpush1.bf16.msra.mxu0 %v807
        %826 = vmatprep.subr.bf16.mxu0 0
        %827 = vmatpush1.bf16.msra.mxu0 %v808
        %828 = vmatprep.subr.bf16.mxu0 0
        %829 = vmatpush1.bf16.msra.mxu0 %v809
        %830 = vmatprep.subr.bf16.mxu0 0
        %831 = vmatpush1.bf16.msra.mxu0 %v810
        %832 = vmatprep.subr.bf16.mxu0 0
        %833 = vmatpush1.bf16.msra.mxu0 %v811
        %834 = vmatprep.subr.bf16.mxu0 0
        %835 = vmatpush1.bf16.msra.mxu0 %v812
        %836 = vmatprep.subr.bf16.mxu0 0
        %837 = vmatpush1.bf16.msra.mxu0 %v813
        %838 = vmatprep.subr.bf16.mxu0 0
        %839 = vmatpush1.bf16.msra.mxu0 0
        %840 = vmatprep.subr.bf16.mxu0 0
        %841 = vmatpush1.bf16.msra.mxu0 0
        %842 = vmatprep.subr.bf16.mxu0 0
        %843 = vmatpush1.bf16.msra.mxu0 0
        %844 = vmatprep.subr.bf16.mxu0 0
        %845 = vmatpush1.bf16.msra.mxu0 0
        %846 = vmatprep.subr.bf16.mxu0 0
        %847 = vmatpush1.bf16.msra.mxu0 0
        %848 = vmatprep.subr.bf16.mxu0 0
        %849 = vmatpush1.bf16.msra.mxu0 0
        %850 = vmatprep.subr.bf16.mxu0 0
        %851 = vmatpush1.bf16.msra.mxu0 0
        %852 = vmatprep.subr.bf16.mxu0 0
        %853 = vmatpush1.bf16.msra.mxu0 0
        %854 = vmatprep.mubr.bf16.mxu0 0
        %855 = vmatmul.mubr.bf16.gmra.mrb[0].mxu0 %v411
        %v856 = vpop.f32.mrb[0].mxu0
        %v857 = vadd.f32 0.0, %v856
        %v858 = vpop.f32.mrb[0].mxu0
        %v859 = vpop.f32.mrb[0].mxu0
        %v860 = vadd.f32 0.0, %v859
        %v861 = vpop.f32.mrb[0].mxu0
        %862 = vmatprep.mubr.bf16.mxu0 0
        %863 = vmatmul.mubr.bf16.gmra.mrb[0].mxu0 %v413
        %v864 = vpop.f32.mrb[0].mxu0
        %v865 = vadd.f32 0.0, %v864
        %v866 = vpop.f32.mrb[0].mxu0
        %v867 = vpop.f32.mrb[0].mxu0
        %v868 = vadd.f32 0.0, %v867
        %v869 = vpop.f32.mrb[0].mxu0
        %870 = vdwg.mxu0
        %v887 = vunpack.c.l.b16 %v331
        %v888 = vunpack.c.l.b16 %v333
        %v889 = vunpack.c.l.b16 %v335
        %v890 = vunpack.c.l.b16 %v337
        %v891 = vunpack.c.l.b16 %v339
        %v892 = vunpack.c.l.b16 %v341
        %v893 = vunpack.c.l.b16 %v343
        %v894 = vunpack.c.l.b16 %v345
        %v895 = vunpack.c.l.b16 %v347
        %v896 = vunpack.c.l.b16 %v349
        %v897 = vunpack.c.l.b16 %v351
        %v898 = vunpack.c.l.b16 %v353
        %v899 = vunpack.c.l.b16 %v355
        %v900 = vunpack.c.l.b16 %v357
        %v901 = vunpack.c.l.b16 %v359
        %v902 = vunpack.c.l.b16 %v361
        %v903 = vpack.c.b16 %v888, %v887
        %v904 = vpack.c.b16 %v890, %v889
        %v905 = vpack.c.b16 %v892, %v891
        %v906 = vpack.c.b16 %v894, %v893
        %v907 = vpack.c.b16 %v896, %v895
        %v908 = vpack.c.b16 %v898, %v897
        %v909 = vpack.c.b16 %v900, %v899
        %v910 = vpack.c.b16 %v902, %v901
        %919 = vmatprep.subr.bf16.mxu0 0
        %920 = vmatpush1.bf16.msra.mxu0 %v903
        %921 = vmatprep.subr.bf16.mxu0 0
        %922 = vmatpush1.bf16.msra.mxu0 %v904
        %923 = vmatprep.subr.bf16.mxu0 0
        %924 = vmatpush1.bf16.msra.mxu0 %v905
        %925 = vmatprep.subr.bf16.mxu0 0
        %926 = vmatpush1.bf16.msra.mxu0 %v906
        %927 = vmatprep.subr.bf16.mxu0 0
        %928 = vmatpush1.bf16.msra.mxu0 %v907
        %929 = vmatprep.subr.bf16.mxu0 0
        %930 = vmatpush1.bf16.msra.mxu0 %v908
        %931 = vmatprep.subr.bf16.mxu0 0
        %932 = vmatpush1.bf16.msra.mxu0 %v909
        %933 = vmatprep.subr.bf16.mxu0 0
        %934 = vmatpush1.bf16.msra.mxu0 %v910
        %935 = vmatprep.subr.bf16.mxu0 0
        %936 = vmatpush1.bf16.msra.mxu0 0
        %937 = vmatprep.subr.bf16.mxu0 0
        %938 = vmatpush1.bf16.msra.mxu0 0
        %939 = vmatprep.subr.bf16.mxu0 0
        %940 = vmatpush1.bf16.msra.mxu0 0
        %941 = vmatprep.subr.bf16.mxu0 0
        %942 = vmatpush1.bf16.msra.mxu0 0
        %943 = vmatprep.subr.bf16.mxu0 0
        %944 = vmatpush1.bf16.msra.mxu0 0
        %945 = vmatprep.subr.bf16.mxu0 0
        %946 = vmatpush1.bf16.msra.mxu0 0
        %947 = vmatprep.subr.bf16.mxu0 0
        %948 = vmatpush1.bf16.msra.mxu0 0
        %949 = vmatprep.subr.bf16.mxu0 0
        %950 = vmatpush1.bf16.msra.mxu0 0
        %951 = vmatprep.mubr.bf16.mxu0 0
        %952 = vmatmul.mubr.bf16.gmra.mrb[0].mxu0 %v405
        %v953 = vpop.f32.mrb[0].mxu0
        %v954 = vadd.f32 %v857, %v953
        %v955 = vpop.f32.mrb[0].mxu0
        %v956 = vpop.f32.mrb[0].mxu0
        %v957 = vadd.f32 %v860, %v956
        %v958 = vpop.f32.mrb[0].mxu0
        %959 = vmatprep.mubr.bf16.mxu0 0
        %960 = vmatmul.mubr.bf16.gmra.mrb[0].mxu0 %v406
        %v961 = vpop.f32.mrb[0].mxu0
        %v962 = vadd.f32 %v865, %v961
        %v963 = vpop.f32.mrb[0].mxu0
        %v964 = vpop.f32.mrb[0].mxu0
        %v965 = vadd.f32 %v868, %v964
        %v966 = vpop.f32.mrb[0].mxu0
        %967 = vdwg.mxu0
        %s968 = scalar_lea.vmem %s1, 384
        %v969 = vld [vmem:[%s968] sm:$0xff]
        %v970 = vld [vmem:[%s968 + $0x8] sm:$0xf]
        %v971 = vld [vmem:[%s968 + $0xc] sm:$0xff]
        %v972 = vld [vmem:[%s968 + $0x14] sm:$0xf]
        %v973 = vld [vmem:[%s968 + $0x18] sm:$0xff]
        %v974 = vld [vmem:[%s968 + $0x20] sm:$0xf]
        %v975 = vld [vmem:[%s968 + $0x24] sm:$0xff]
        %v976 = vld [vmem:[%s968 + $0x2c] sm:$0xf]
        %v977 = vld [vmem:[%s968 + $0x30] sm:$0xff]
        %v978 = vld [vmem:[%s968 + $0x38] sm:$0xf]
        %v979 = vld [vmem:[%s968 + $0x3c] sm:$0xff]
        %v980 = vld [vmem:[%s968 + $0x44] sm:$0xf]
        %v981 = vld [vmem:[%s968 + $0x48] sm:$0xff]
        %v982 = vld [vmem:[%s968 + $0x50] sm:$0xf]
        %v983 = vld [vmem:[%s968 + $0x54] sm:$0xff]
        %v984 = vld [vmem:[%s968 + $0x5c] sm:$0xf]
        %v985 = vld [vmem:[%s968 + $0x60] sm:$0xff]
        %v986 = vld [vmem:[%s968 + $0x68] sm:$0xf]
        %v987 = vld [vmem:[%s968 + $0x6c] sm:$0xff]
        %v988 = vld [vmem:[%s968 + $0x74] sm:$0xf]
        %v989 = vld [vmem:[%s968 + $0x78] sm:$0xff]
        %v990 = vld [vmem:[%s968 + $0x80] sm:$0xf]
        %v991 = vld [vmem:[%s968 + $0x84] sm:$0xff]
        %v992 = vld [vmem:[%s968 + $0x8c] sm:$0xf]
        %v993 = vld [vmem:[%s968 + $0x90] sm:$0xff]
        %v994 = vld [vmem:[%s968 + $0x98] sm:$0xf]
        %v995 = vld [vmem:[%s968 + $0x9c] sm:$0xff]
        %v996 = vld [vmem:[%s968 + $0xa4] sm:$0xf]
        %v997 = vld [vmem:[%s968 + $0xa8] sm:$0xff]
        %v998 = vld [vmem:[%s968 + $0xb0] sm:$0xf]
        %v999 = vld [vmem:[%s968 + $0xb4] sm:$0xff]
        %v1000 = vld [vmem:[%s968 + $0xbc] sm:$0xf]
        %vm1001 = vcmask 1045504
        %v1002 = vrot.slane %v405, 2
        %v1003 = vrot.slane %v406, 2
        %v1004 = vsel %vm1001, %v1002, %v1003
        %v1005 = vrot.slane %v407, 2
        %v1006 = vsel %vm1001, %v1003, %v1005
        %v1025 = vunpack.c.l.b16 %v969
        %v1026 = vunpack.c.l.b16 %v971
        %v1027 = vunpack.c.l.b16 %v973
        %v1028 = vunpack.c.l.b16 %v975
        %v1029 = vunpack.c.l.b16 %v977
        %v1030 = vunpack.c.l.b16 %v979
        %v1031 = vunpack.c.l.b16 %v981
        %v1032 = vunpack.c.l.b16 %v983
        %v1033 = vunpack.c.l.b16 %v985
        %v1034 = vunpack.c.l.b16 %v987
        %v1035 = vunpack.c.l.b16 %v989
        %v1036 = vunpack.c.l.b16 %v991
        %v1037 = vunpack.c.l.b16 %v993
        %v1038 = vunpack.c.l.b16 %v995
        %v1039 = vunpack.c.l.b16 %v997
        %v1040 = vunpack.c.l.b16 %v999
        %v1041 = vpack.c.b16 %v1026, %v1025
        %v1042 = vpack.c.b16 %v1028, %v1027
        %v1043 = vpack.c.b16 %v1030, %v1029
        %v1044 = vpack.c.b16 %v1032, %v1031
        %v1045 = vpack.c.b16 %v1034, %v1033
        %v1046 = vpack.c.b16 %v1036, %v1035
        %v1047 = vpack.c.b16 %v1038, %v1037
        %v1048 = vpack.c.b16 %v1040, %v1039
        %1057 = vmatprep.subr.bf16.mxu0 0
        %1058 = vmatpush1.bf16.msra.mxu0 %v1041
        %1059 = vmatprep.subr.bf16.mxu0 0
        %1060 = vmatpush1.bf16.msra.mxu0 %v1042
        %1061 = vmatprep.subr.bf16.mxu0 0
        %1062 = vmatpush1.bf16.msra.mxu0 %v1043
        %1063 = vmatprep.subr.bf16.mxu0 0
        %1064 = vmatpush1.bf16.msra.mxu0 %v1044
        %1065 = vmatprep.subr.bf16.mxu0 0
        %1066 = vmatpush1.bf16.msra.mxu0 %v1045
        %1067 = vmatprep.subr.bf16.mxu0 0
        %1068 = vmatpush1.bf16.msra.mxu0 %v1046
        %1069 = vmatprep.subr.bf16.mxu0 0
        %1070 = vmatpush1.bf16.msra.mxu0 %v1047
        %1071 = vmatprep.subr.bf16.mxu0 0
        %1072 = vmatpush1.bf16.msra.mxu0 %v1048
        %1073 = vmatprep.subr.bf16.mxu0 0
        %1074 = vmatpush1.bf16.msra.mxu0 0
        %1075 = vmatprep.subr.bf16.mxu0 0
        %1076 = vmatpush1.bf16.msra.mxu0 0
        %1077 = vmatprep.subr.bf16.mxu0 0
        %1078 = vmatpush1.bf16.msra.mxu0 0
        %1079 = vmatprep.subr.bf16.mxu0 0
        %1080 = vmatpush1.bf16.msra.mxu0 0
        %1081 = vmatprep.subr.bf16.mxu0 0
        %1082 = vmatpush1.bf16.msra.mxu0 0
        %1083 = vmatprep.subr.bf16.mxu0 0
        %1084 = vmatpush1.bf16.msra.mxu0 0
        %1085 = vmatprep.subr.bf16.mxu0 0
        %1086 = vmatpush1.bf16.msra.mxu0 0
        %1087 = vmatprep.subr.bf16.mxu0 0
        %1088 = vmatpush1.bf16.msra.mxu0 0
        %1089 = vmatprep.mubr.bf16.mxu0 0
        %1090 = vmatmul.mubr.bf16.gmra.mrb[0].mxu0 %v1004
        %v1091 = vpop.f32.mrb[0].mxu0
        %v1092 = vadd.f32 0.0, %v1091
        %v1093 = vpop.f32.mrb[0].mxu0
        %v1094 = vpop.f32.mrb[0].mxu0
        %v1095 = vadd.f32 0.0, %v1094
        %v1096 = vpop.f32.mrb[0].mxu0
        %1097 = vmatprep.mubr.bf16.mxu0 0
        %1098 = vmatmul.mubr.bf16.gmra.mrb[0].mxu0 %v1006
        %v1099 = vpop.f32.mrb[0].mxu0
        %v1100 = vadd.f32 0.0, %v1099
        %v1101 = vpop.f32.mrb[0].mxu0
        %v1102 = vpop.f32.mrb[0].mxu0
        %v1103 = vadd.f32 0.0, %v1102
        %v1104 = vpop.f32.mrb[0].mxu0
        %1105 = vdwg.mxu0
        %v1106 = vadd.f32 %v598, %v1092
        %v1107 = vadd.f32 %v601, %v1095
        %v1108 = vadd.f32 %v606, %v1100
        %v1109 = vadd.f32 %v609, %v1103
        %v1110 = vunpack.c.h.b16 %v969
        %v1111 = vunpack.c.h.b16 %v971
        %v1112 = vunpack.c.h.b16 %v973
        %v1113 = vunpack.c.h.b16 %v975
        %v1114 = vunpack.c.h.b16 %v977
        %v1115 = vunpack.c.h.b16 %v979
        %v1116 = vunpack.c.h.b16 %v981
        %v1117 = vunpack.c.h.b16 %v983
        %v1118 = vunpack.c.h.b16 %v985
        %v1119 = vunpack.c.h.b16 %v987
        %v1120 = vunpack.c.h.b16 %v989
        %v1121 = vunpack.c.h.b16 %v991
        %v1122 = vunpack.c.h.b16 %v993
        %v1123 = vunpack.c.h.b16 %v995
        %v1124 = vunpack.c.h.b16 %v997
        %v1125 = vunpack.c.h.b16 %v999
        %v1126 = vpack.c.b16 %v1111, %v1110
        %v1127 = vpack.c.b16 %v1113, %v1112
        %v1128 = vpack.c.b16 %v1115, %v1114
        %v1129 = vpack.c.b16 %v1117, %v1116
        %v1130 = vpack.c.b16 %v1119, %v1118
        %v1131 = vpack.c.b16 %v1121, %v1120
        %v1132 = vpack.c.b16 %v1123, %v1122
        %v1133 = vpack.c.b16 %v1125, %v1124
        %1142 = vmatprep.subr.bf16.mxu0 0
        %1143 = vmatpush1.bf16.msra.mxu0 %v1126
        %1144 = vmatprep.subr.bf16.mxu0 0
        %1145 = vmatpush1.bf16.msra.mxu0 %v1127
        %1146 = vmatprep.subr.bf16.mxu0 0
        %1147 = vmatpush1.bf16.msra.mxu0 %v1128
        %1148 = vmatprep.subr.bf16.mxu0 0
        %1149 = vmatpush1.bf16.msra.mxu0 %v1129
        %1150 = vmatprep.subr.bf16.mxu0 0
        %1151 = vmatpush1.bf16.msra.mxu0 %v1130
        %1152 = vmatprep.subr.bf16.mxu0 0
        %1153 = vmatpush1.bf16.msra.mxu0 %v1131
        %1154 = vmatprep.subr.bf16.mxu0 0
        %1155 = vmatpush1.bf16.msra.mxu0 %v1132
        %1156 = vmatprep.subr.bf16.mxu0 0
        %1157 = vmatpush1.bf16.msra.mxu0 %v1133
        %1158 = vmatprep.subr.bf16.mxu0 0
        %1159 = vmatpush1.bf16.msra.mxu0 0
        %1160 = vmatprep.subr.bf16.mxu0 0
        %1161 = vmatpush1.bf16.msra.mxu0 0
        %1162 = vmatprep.subr.bf16.mxu0 0
        %1163 = vmatpush1.bf16.msra.mxu0 0
        %1164 = vmatprep.subr.bf16.mxu0 0
        %1165 = vmatpush1.bf16.msra.mxu0 0
        %1166 = vmatprep.subr.bf16.mxu0 0
        %1167 = vmatpush1.bf16.msra.mxu0 0
        %1168 = vmatprep.subr.bf16.mxu0 0
        %1169 = vmatpush1.bf16.msra.mxu0 0
        %1170 = vmatprep.subr.bf16.mxu0 0
        %1171 = vmatpush1.bf16.msra.mxu0 0
        %1172 = vmatprep.subr.bf16.mxu0 0
        %1173 = vmatpush1.bf16.msra.mxu0 0
        %1174 = vmatprep.mubr.bf16.mxu0 0
        %1175 = vmatmul.mubr.bf16.gmra.mrb[0].mxu0 %v1004
        %v1176 = vpop.f32.mrb[0].mxu0
        %v1177 = vadd.f32 0.0, %v1176
        %v1178 = vpop.f32.mrb[0].mxu0
        %v1179 = vpop.f32.mrb[0].mxu0
        %v1180 = vadd.f32 0.0, %v1179
        %v1181 = vpop.f32.mrb[0].mxu0
        %1182 = vmatprep.mubr.bf16.mxu0 0
        %1183 = vmatmul.mubr.bf16.gmra.mrb[0].mxu0 %v1006
        %v1184 = vpop.f32.mrb[0].mxu0
        %v1185 = vadd.f32 0.0, %v1184
        %v1186 = vpop.f32.mrb[0].mxu0
        %v1187 = vpop.f32.mrb[0].mxu0
        %v1188 = vadd.f32 0.0, %v1187
        %v1189 = vpop.f32.mrb[0].mxu0
        %1190 = vdwg.mxu0
        %v1191 = vadd.f32 %v760, %v1177
        %v1192 = vadd.f32 %v763, %v1180
        %v1193 = vadd.f32 %v768, %v1185
        %v1194 = vadd.f32 %v771, %v1188
        %v1211 = vunpack.c.l.b16 %v970
        %v1212 = vunpack.c.l.b16 %v972
        %v1213 = vunpack.c.l.b16 %v974
        %v1214 = vunpack.c.l.b16 %v976
        %v1215 = vunpack.c.l.b16 %v978
        %v1216 = vunpack.c.l.b16 %v980
        %v1217 = vunpack.c.l.b16 %v982
        %v1218 = vunpack.c.l.b16 %v984
        %v1219 = vunpack.c.l.b16 %v986
        %v1220 = vunpack.c.l.b16 %v988
        %v1221 = vunpack.c.l.b16 %v990
        %v1222 = vunpack.c.l.b16 %v992
        %v1223 = vunpack.c.l.b16 %v994
        %v1224 = vunpack.c.l.b16 %v996
        %v1225 = vunpack.c.l.b16 %v998
        %v1226 = vunpack.c.l.b16 %v1000
        %v1227 = vpack.c.b16 %v1212, %v1211
        %v1228 = vpack.c.b16 %v1214, %v1213
        %v1229 = vpack.c.b16 %v1216, %v1215
        %v1230 = vpack.c.b16 %v1218, %v1217
        %v1231 = vpack.c.b16 %v1220, %v1219
        %v1232 = vpack.c.b16 %v1222, %v1221
        %v1233 = vpack.c.b16 %v1224, %v1223
        %v1234 = vpack.c.b16 %v1226, %v1225
        %1243 = vmatprep.subr.bf16.mxu0 0
        %1244 = vmatpush1.bf16.msra.mxu0 %v1227
        %1245 = vmatprep.subr.bf16.mxu0 0
        %1246 = vmatpush1.bf16.msra.mxu0 %v1228
        %1247 = vmatprep.subr.bf16.mxu0 0
        %1248 = vmatpush1.bf16.msra.mxu0 %v1229
        %1249 = vmatprep.subr.bf16.mxu0 0
        %1250 = vmatpush1.bf16.msra.mxu0 %v1230
        %1251 = vmatprep.subr.bf16.mxu0 0
        %1252 = vmatpush1.bf16.msra.mxu0 %v1231
        %1253 = vmatprep.subr.bf16.mxu0 0
        %1254 = vmatpush1.bf16.msra.mxu0 %v1232
        %1255 = vmatprep.subr.bf16.mxu0 0
        %1256 = vmatpush1.bf16.msra.mxu0 %v1233
        %1257 = vmatprep.subr.bf16.mxu0 0
        %1258 = vmatpush1.bf16.msra.mxu0 %v1234
        %1259 = vmatprep.subr.bf16.mxu0 0
        %1260 = vmatpush1.bf16.msra.mxu0 0
        %1261 = vmatprep.subr.bf16.mxu0 0
        %1262 = vmatpush1.bf16.msra.mxu0 0
        %1263 = vmatprep.subr.bf16.mxu0 0
        %1264 = vmatpush1.bf16.msra.mxu0 0
        %1265 = vmatprep.subr.bf16.mxu0 0
        %1266 = vmatpush1.bf16.msra.mxu0 0
        %1267 = vmatprep.subr.bf16.mxu0 0
        %1268 = vmatpush1.bf16.msra.mxu0 0
        %1269 = vmatprep.subr.bf16.mxu0 0
        %1270 = vmatpush1.bf16.msra.mxu0 0
        %1271 = vmatprep.subr.bf16.mxu0 0
        %1272 = vmatpush1.bf16.msra.mxu0 0
        %1273 = vmatprep.subr.bf16.mxu0 0
        %1274 = vmatpush1.bf16.msra.mxu0 0
        %1275 = vmatprep.mubr.bf16.mxu0 0
        %1276 = vmatmul.mubr.bf16.gmra.mrb[0].mxu0 %v1004
        %v1277 = vpop.f32.mrb[0].mxu0
        %v1278 = vadd.f32 0.0, %v1277
        %v1279 = vpop.f32.mrb[0].mxu0
        %v1280 = vpop.f32.mrb[0].mxu0
        %v1281 = vadd.f32 0.0, %v1280
        %v1282 = vpop.f32.mrb[0].mxu0
        %1283 = vmatprep.mubr.bf16.mxu0 0
        %1284 = vmatmul.mubr.bf16.gmra.mrb[0].mxu0 %v1006
        %v1285 = vpop.f32.mrb[0].mxu0
        %v1286 = vadd.f32 0.0, %v1285
        %v1287 = vpop.f32.mrb[0].mxu0
        %v1288 = vpop.f32.mrb[0].mxu0
        %v1289 = vadd.f32 0.0, %v1288
        %v1290 = vpop.f32.mrb[0].mxu0
        %1291 = vdwg.mxu0
        %v1292 = vadd.f32 %v954, %v1278
        %v1293 = vadd.f32 %v957, %v1281
        %v1294 = vadd.f32 %v962, %v1286
        %v1295 = vadd.f32 %v965, %v1289
        %s1296 = scalar_lea.vmem %s1, 576
        %v1297 = vld [vmem:[%s1296] sm:$0xff]
        %v1298 = vld [vmem:[%s1296 + $0x8] sm:$0xf]
        %v1299 = vld [vmem:[%s1296 + $0xc] sm:$0xff]
        %v1300 = vld [vmem:[%s1296 + $0x14] sm:$0xf]
        %v1301 = vld [vmem:[%s1296 + $0x18] sm:$0xff]
        %v1302 = vld [vmem:[%s1296 + $0x20] sm:$0xf]
        %v1303 = vld [vmem:[%s1296 + $0x24] sm:$0xff]
        %v1304 = vld [vmem:[%s1296 + $0x2c] sm:$0xf]
        %v1305 = vld [vmem:[%s1296 + $0x30] sm:$0xff]
        %v1306 = vld [vmem:[%s1296 + $0x38] sm:$0xf]
        %v1307 = vld [vmem:[%s1296 + $0x3c] sm:$0xff]
        %v1308 = vld [vmem:[%s1296 + $0x44] sm:$0xf]
        %v1309 = vld [vmem:[%s1296 + $0x48] sm:$0xff]
        %v1310 = vld [vmem:[%s1296 + $0x50] sm:$0xf]
        %v1311 = vld [vmem:[%s1296 + $0x54] sm:$0xff]
        %v1312 = vld [vmem:[%s1296 + $0x5c] sm:$0xf]
        %v1313 = vld [vmem:[%s1296 + $0x60] sm:$0xff]
        %v1314 = vld [vmem:[%s1296 + $0x68] sm:$0xf]
        %v1315 = vld [vmem:[%s1296 + $0x6c] sm:$0xff]
        %v1316 = vld [vmem:[%s1296 + $0x74] sm:$0xf]
        %v1317 = vld [vmem:[%s1296 + $0x78] sm:$0xff]
        %v1318 = vld [vmem:[%s1296 + $0x80] sm:$0xf]
        %v1319 = vld [vmem:[%s1296 + $0x84] sm:$0xff]
        %v1320 = vld [vmem:[%s1296 + $0x8c] sm:$0xf]
        %v1321 = vld [vmem:[%s1296 + $0x90] sm:$0xff]
        %v1322 = vld [vmem:[%s1296 + $0x98] sm:$0xf]
        %v1323 = vld [vmem:[%s1296 + $0x9c] sm:$0xff]
        %v1324 = vld [vmem:[%s1296 + $0xa4] sm:$0xf]
        %v1325 = vld [vmem:[%s1296 + $0xa8] sm:$0xff]
        %v1326 = vld [vmem:[%s1296 + $0xb0] sm:$0xf]
        %v1327 = vld [vmem:[%s1296 + $0xb4] sm:$0xff]
        %v1328 = vld [vmem:[%s1296 + $0xbc] sm:$0xf]
        %vm1329 = vcmask 1044480
        %v1330 = vrot.slane %v405, 3
        %v1331 = vrot.slane %v406, 3
        %v1332 = vsel %vm1329, %v1330, %v1331
        %v1333 = vrot.slane %v407, 3
        %v1334 = vsel %vm1329, %v1331, %v1333
        %v1353 = vunpack.c.l.b16 %v1297
        %v1354 = vunpack.c.l.b16 %v1299
        %v1355 = vunpack.c.l.b16 %v1301
        %v1356 = vunpack.c.l.b16 %v1303
        %v1357 = vunpack.c.l.b16 %v1305
        %v1358 = vunpack.c.l.b16 %v1307
        %v1359 = vunpack.c.l.b16 %v1309
        %v1360 = vunpack.c.l.b16 %v1311
        %v1361 = vunpack.c.l.b16 %v1313
        %v1362 = vunpack.c.l.b16 %v1315
        %v1363 = vunpack.c.l.b16 %v1317
        %v1364 = vunpack.c.l.b16 %v1319
        %v1365 = vunpack.c.l.b16 %v1321
        %v1366 = vunpack.c.l.b16 %v1323
        %v1367 = vunpack.c.l.b16 %v1325
        %v1368 = vunpack.c.l.b16 %v1327
        %v1369 = vpack.c.b16 %v1354, %v1353
        %v1370 = vpack.c.b16 %v1356, %v1355
        %v1371 = vpack.c.b16 %v1358, %v1357
        %v1372 = vpack.c.b16 %v1360, %v1359
        %v1373 = vpack.c.b16 %v1362, %v1361
        %v1374 = vpack.c.b16 %v1364, %v1363
        %v1375 = vpack.c.b16 %v1366, %v1365
        %v1376 = vpack.c.b16 %v1368, %v1367
        %1385 = vmatprep.subr.bf16.mxu0 0
        %1386 = vmatpush1.bf16.msra.mxu0 %v1369
        %1387 = vmatprep.subr.bf16.mxu0 0
        %1388 = vmatpush1.bf16.msra.mxu0 %v1370
        %1389 = vmatprep.subr.bf16.mxu0 0
        %1390 = vmatpush1.bf16.msra.mxu0 %v1371
        %1391 = vmatprep.subr.bf16.mxu0 0
        %1392 = vmatpush1.bf16.msra.mxu0 %v1372
        %1393 = vmatprep.subr.bf16.mxu0 0
        %1394 = vmatpush1.bf16.msra.mxu0 %v1373
        %1395 = vmatprep.subr.bf16.mxu0 0
        %1396 = vmatpush1.bf16.msra.mxu0 %v1374
        %1397 = vmatprep.subr.bf16.mxu0 0
        %1398 = vmatpush1.bf16.msra.mxu0 %v1375
        %1399 = vmatprep.subr.bf16.mxu0 0
        %1400 = vmatpush1.bf16.msra.mxu0 %v1376
        %1401 = vmatprep.subr.bf16.mxu0 0
        %1402 = vmatpush1.bf16.msra.mxu0 0
        %1403 = vmatprep.subr.bf16.mxu0 0
        %1404 = vmatpush1.bf16.msra.mxu0 0
        %1405 = vmatprep.subr.bf16.mxu0 0
        %1406 = vmatpush1.bf16.msra.mxu0 0
        %1407 = vmatprep.subr.bf16.mxu0 0
        %1408 = vmatpush1.bf16.msra.mxu0 0
        %1409 = vmatprep.subr.bf16.mxu0 0
        %1410 = vmatpush1.bf16.msra.mxu0 0
        %1411 = vmatprep.subr.bf16.mxu0 0
        %1412 = vmatpush1.bf16.msra.mxu0 0
        %1413 = vmatprep.subr.bf16.mxu0 0
        %1414 = vmatpush1.bf16.msra.mxu0 0
        %1415 = vmatprep.subr.bf16.mxu0 0
        %1416 = vmatpush1.bf16.msra.mxu0 0
        %1417 = vmatprep.mubr.bf16.mxu0 0
        %1418 = vmatmul.mubr.bf16.gmra.mrb[0].mxu0 %v1332
        %v1419 = vpop.f32.mrb[0].mxu0
        %v1420 = vadd.f32 0.0, %v1419
        %v1421 = vpop.f32.mrb[0].mxu0
        %v1422 = vpop.f32.mrb[0].mxu0
        %v1423 = vadd.f32 0.0, %v1422
        %v1424 = vpop.f32.mrb[0].mxu0
        %1425 = vmatprep.mubr.bf16.mxu0 0
        %1426 = vmatmul.mubr.bf16.gmra.mrb[0].mxu0 %v1334
        %v1427 = vpop.f32.mrb[0].mxu0
        %v1428 = vadd.f32 0.0, %v1427
        %v1429 = vpop.f32.mrb[0].mxu0
        %v1430 = vpop.f32.mrb[0].mxu0
        %v1431 = vadd.f32 0.0, %v1430
        %v1432 = vpop.f32.mrb[0].mxu0
        %1433 = vdwg.mxu0
        %v1434 = vadd.f32 %v1106, %v1420
        %v1435 = vadd.f32 %v1107, %v1423
        %v1436 = vadd.f32 %v1108, %v1428
        %v1437 = vadd.f32 %v1109, %v1431
        %v1438 = vunpack.c.h.b16 %v1297
        %v1439 = vunpack.c.h.b16 %v1299
        %v1440 = vunpack.c.h.b16 %v1301
        %v1441 = vunpack.c.h.b16 %v1303
        %v1442 = vunpack.c.h.b16 %v1305
        %v1443 = vunpack.c.h.b16 %v1307
        %v1444 = vunpack.c.h.b16 %v1309
        %v1445 = vunpack.c.h.b16 %v1311
        %v1446 = vunpack.c.h.b16 %v1313
        %v1447 = vunpack.c.h.b16 %v1315
        %v1448 = vunpack.c.h.b16 %v1317
        %v1449 = vunpack.c.h.b16 %v1319
        %v1450 = vunpack.c.h.b16 %v1321
        %v1451 = vunpack.c.h.b16 %v1323
        %v1452 = vunpack.c.h.b16 %v1325
        %v1453 = vunpack.c.h.b16 %v1327
        %v1454 = vpack.c.b16 %v1439, %v1438
        %v1455 = vpack.c.b16 %v1441, %v1440
        %v1456 = vpack.c.b16 %v1443, %v1442
        %v1457 = vpack.c.b16 %v1445, %v1444
        %v1458 = vpack.c.b16 %v1447, %v1446
        %v1459 = vpack.c.b16 %v1449, %v1448
        %v1460 = vpack.c.b16 %v1451, %v1450
        %v1461 = vpack.c.b16 %v1453, %v1452
        %1470 = vmatprep.subr.bf16.mxu0 0
        %1471 = vmatpush1.bf16.msra.mxu0 %v1454
        %1472 = vmatprep.subr.bf16.mxu0 0
        %1473 = vmatpush1.bf16.msra.mxu0 %v1455
        %1474 = vmatprep.subr.bf16.mxu0 0
        %1475 = vmatpush1.bf16.msra.mxu0 %v1456
        %1476 = vmatprep.subr.bf16.mxu0 0
        %1477 = vmatpush1.bf16.msra.mxu0 %v1457
        %1478 = vmatprep.subr.bf16.mxu0 0
        %1479 = vmatpush1.bf16.msra.mxu0 %v1458
        %1480 = vmatprep.subr.bf16.mxu0 0
        %1481 = vmatpush1.bf16.msra.mxu0 %v1459
        %1482 = vmatprep.subr.bf16.mxu0 0
        %1483 = vmatpush1.bf16.msra.mxu0 %v1460
        %1484 = vmatprep.subr.bf16.mxu0 0
        %1485 = vmatpush1.bf16.msra.mxu0 %v1461
        %1486 = vmatprep.subr.bf16.mxu0 0
        %1487 = vmatpush1.bf16.msra.mxu0 0
        %1488 = vmatprep.subr.bf16.mxu0 0
        %1489 = vmatpush1.bf16.msra.mxu0 0
        %1490 = vmatprep.subr.bf16.mxu0 0
        %1491 = vmatpush1.bf16.msra.mxu0 0
        %1492 = vmatprep.subr.bf16.mxu0 0
        %1493 = vmatpush1.bf16.msra.mxu0 0
        %1494 = vmatprep.subr.bf16.mxu0 0
        %1495 = vmatpush1.bf16.msra.mxu0 0
        %1496 = vmatprep.subr.bf16.mxu0 0
        %1497 = vmatpush1.bf16.msra.mxu0 0
        %1498 = vmatprep.subr.bf16.mxu0 0
        %1499 = vmatpush1.bf16.msra.mxu0 0
        %1500 = vmatprep.subr.bf16.mxu0 0
        %1501 = vmatpush1.bf16.msra.mxu0 0
        %1502 = vmatprep.mubr.bf16.mxu0 0
        %1503 = vmatmul.mubr.bf16.gmra.mrb[0].mxu0 %v1332
        %v1504 = vpop.f32.mrb[0].mxu0
        %v1505 = vadd.f32 0.0, %v1504
        %v1506 = vpop.f32.mrb[0].mxu0
        %v1507 = vpop.f32.mrb[0].mxu0
        %v1508 = vadd.f32 0.0, %v1507
        %v1509 = vpop.f32.mrb[0].mxu0
        %1510 = vmatprep.mubr.bf16.mxu0 0
        %1511 = vmatmul.mubr.bf16.gmra.mrb[0].mxu0 %v1334
        %v1512 = vpop.f32.mrb[0].mxu0
        %v1513 = vadd.f32 0.0, %v1512
        %v1514 = vpop.f32.mrb[0].mxu0
        %v1515 = vpop.f32.mrb[0].mxu0
        %v1516 = vadd.f32 0.0, %v1515
        %v1517 = vpop.f32.mrb[0].mxu0
        %1518 = vdwg.mxu0
        %v1519 = vadd.f32 %v1191, %v1505
        %v1520 = vadd.f32 %v1192, %v1508
        %v1521 = vadd.f32 %v1193, %v1513
        %v1522 = vadd.f32 %v1194, %v1516
        %v1539 = vunpack.c.l.b16 %v1298
        %v1540 = vunpack.c.l.b16 %v1300
        %v1541 = vunpack.c.l.b16 %v1302
        %v1542 = vunpack.c.l.b16 %v1304
        %v1543 = vunpack.c.l.b16 %v1306
        %v1544 = vunpack.c.l.b16 %v1308
        %v1545 = vunpack.c.l.b16 %v1310
        %v1546 = vunpack.c.l.b16 %v1312
        %v1547 = vunpack.c.l.b16 %v1314
        %v1548 = vunpack.c.l.b16 %v1316
        %v1549 = vunpack.c.l.b16 %v1318
        %v1550 = vunpack.c.l.b16 %v1320
        %v1551 = vunpack.c.l.b16 %v1322
        %v1552 = vunpack.c.l.b16 %v1324
        %v1553 = vunpack.c.l.b16 %v1326
        %v1554 = vunpack.c.l.b16 %v1328
        %v1555 = vpack.c.b16 %v1540, %v1539
        %v1556 = vpack.c.b16 %v1542, %v1541
        %v1557 = vpack.c.b16 %v1544, %v1543
        %v1558 = vpack.c.b16 %v1546, %v1545
        %v1559 = vpack.c.b16 %v1548, %v1547
        %v1560 = vpack.c.b16 %v1550, %v1549
        %v1561 = vpack.c.b16 %v1552, %v1551
        %v1562 = vpack.c.b16 %v1554, %v1553
        %1571 = vmatprep.subr.bf16.mxu0 0
        %1572 = vmatpush1.bf16.msra.mxu0 %v1555
        %1573 = vmatprep.subr.bf16.mxu0 0
        %1574 = vmatpush1.bf16.msra.mxu0 %v1556
        %1575 = vmatprep.subr.bf16.mxu0 0
        %1576 = vmatpush1.bf16.msra.mxu0 %v1557
        %1577 = vmatprep.subr.bf16.mxu0 0
        %1578 = vmatpush1.bf16.msra.mxu0 %v1558
        %1579 = vmatprep.subr.bf16.mxu0 0
        %1580 = vmatpush1.bf16.msra.mxu0 %v1559
        %1581 = vmatprep.subr.bf16.mxu0 0
        %1582 = vmatpush1.bf16.msra.mxu0 %v1560
        %1583 = vmatprep.subr.bf16.mxu0 0
        %1584 = vmatpush1.bf16.msra.mxu0 %v1561
        %1585 = vmatprep.subr.bf16.mxu0 0
        %1586 = vmatpush1.bf16.msra.mxu0 %v1562
        %1587 = vmatprep.subr.bf16.mxu0 0
        %1588 = vmatpush1.bf16.msra.mxu0 0
        %1589 = vmatprep.subr.bf16.mxu0 0
        %1590 = vmatpush1.bf16.msra.mxu0 0
        %1591 = vmatprep.subr.bf16.mxu0 0
        %1592 = vmatpush1.bf16.msra.mxu0 0
        %1593 = vmatprep.subr.bf16.mxu0 0
        %1594 = vmatpush1.bf16.msra.mxu0 0
        %1595 = vmatprep.subr.bf16.mxu0 0
        %1596 = vmatpush1.bf16.msra.mxu0 0
        %1597 = vmatprep.subr.bf16.mxu0 0
        %1598 = vmatpush1.bf16.msra.mxu0 0
        %1599 = vmatprep.subr.bf16.mxu0 0
        %1600 = vmatpush1.bf16.msra.mxu0 0
        %1601 = vmatprep.subr.bf16.mxu0 0
        %1602 = vmatpush1.bf16.msra.mxu0 0
        %1603 = vmatprep.mubr.bf16.mxu0 0
        %1604 = vmatmul.mubr.bf16.gmra.mrb[0].mxu0 %v1332
        %v1605 = vpop.f32.mrb[0].mxu0
        %v1606 = vadd.f32 0.0, %v1605
        %v1607 = vpop.f32.mrb[0].mxu0
        %v1608 = vpop.f32.mrb[0].mxu0
        %v1609 = vadd.f32 0.0, %v1608
        %v1610 = vpop.f32.mrb[0].mxu0
        %1611 = vmatprep.mubr.bf16.mxu0 0
        %1612 = vmatmul.mubr.bf16.gmra.mrb[0].mxu0 %v1334
        %v1613 = vpop.f32.mrb[0].mxu0
        %v1614 = vadd.f32 0.0, %v1613
        %v1615 = vpop.f32.mrb[0].mxu0
        %v1616 = vpop.f32.mrb[0].mxu0
        %v1617 = vadd.f32 0.0, %v1616
        %v1618 = vpop.f32.mrb[0].mxu0
        %1619 = vdwg.mxu0
        %v1620 = vadd.f32 %v1292, %v1606
        %v1621 = vadd.f32 %v1293, %v1609
        %v1622 = vadd.f32 %v1294, %v1614
        %v1623 = vadd.f32 %v1295, %v1617
        %s1624 = scalar_lea.vmem %s1, 768
        %v1625 = vld [vmem:[%s1624] sm:$0xff]
        %v1626 = vld [vmem:[%s1624 + $0x8] sm:$0xf]
        %v1627 = vld [vmem:[%s1624 + $0xc] sm:$0xff]
        %v1628 = vld [vmem:[%s1624 + $0x14] sm:$0xf]
        %v1629 = vld [vmem:[%s1624 + $0x18] sm:$0xff]
        %v1630 = vld [vmem:[%s1624 + $0x20] sm:$0xf]
        %v1631 = vld [vmem:[%s1624 + $0x24] sm:$0xff]
        %v1632 = vld [vmem:[%s1624 + $0x2c] sm:$0xf]
        %v1633 = vld [vmem:[%s1624 + $0x30] sm:$0xff]
        %v1634 = vld [vmem:[%s1624 + $0x38] sm:$0xf]
        %v1635 = vld [vmem:[%s1624 + $0x3c] sm:$0xff]
        %v1636 = vld [vmem:[%s1624 + $0x44] sm:$0xf]
        %v1637 = vld [vmem:[%s1624 + $0x48] sm:$0xff]
        %v1638 = vld [vmem:[%s1624 + $0x50] sm:$0xf]
        %v1639 = vld [vmem:[%s1624 + $0x54] sm:$0xff]
        %v1640 = vld [vmem:[%s1624 + $0x5c] sm:$0xf]
        %v1641 = vld [vmem:[%s1624 + $0x60] sm:$0xff]
        %v1642 = vld [vmem:[%s1624 + $0x68] sm:$0xf]
        %v1643 = vld [vmem:[%s1624 + $0x6c] sm:$0xff]
        %v1644 = vld [vmem:[%s1624 + $0x74] sm:$0xf]
        %v1645 = vld [vmem:[%s1624 + $0x78] sm:$0xff]
        %v1646 = vld [vmem:[%s1624 + $0x80] sm:$0xf]
        %v1647 = vld [vmem:[%s1624 + $0x84] sm:$0xff]
        %v1648 = vld [vmem:[%s1624 + $0x8c] sm:$0xf]
        %v1649 = vld [vmem:[%s1624 + $0x90] sm:$0xff]
        %v1650 = vld [vmem:[%s1624 + $0x98] sm:$0xf]
        %v1651 = vld [vmem:[%s1624 + $0x9c] sm:$0xff]
        %v1652 = vld [vmem:[%s1624 + $0xa4] sm:$0xf]
        %v1653 = vld [vmem:[%s1624 + $0xa8] sm:$0xff]
        %v1654 = vld [vmem:[%s1624 + $0xb0] sm:$0xf]
        %v1655 = vld [vmem:[%s1624 + $0xb4] sm:$0xff]
        %v1656 = vld [vmem:[%s1624 + $0xbc] sm:$0xf]
        %v1657 = vpack.c.b16 %v402, %v401
        %v1658 = vpack.c.b16 %v404, %v403
        %v1677 = vunpack.c.l.b16 %v1625
        %v1678 = vunpack.c.l.b16 %v1627
        %v1679 = vunpack.c.l.b16 %v1629
        %v1680 = vunpack.c.l.b16 %v1631
        %v1681 = vunpack.c.l.b16 %v1633
        %v1682 = vunpack.c.l.b16 %v1635
        %v1683 = vunpack.c.l.b16 %v1637
        %v1684 = vunpack.c.l.b16 %v1639
        %v1685 = vunpack.c.l.b16 %v1641
        %v1686 = vunpack.c.l.b16 %v1643
        %v1687 = vunpack.c.l.b16 %v1645
        %v1688 = vunpack.c.l.b16 %v1647
        %v1689 = vunpack.c.l.b16 %v1649
        %v1690 = vunpack.c.l.b16 %v1651
        %v1691 = vunpack.c.l.b16 %v1653
        %v1692 = vunpack.c.l.b16 %v1655
        %v1693 = vpack.c.b16 %v1678, %v1677
        %v1694 = vpack.c.b16 %v1680, %v1679
        %v1695 = vpack.c.b16 %v1682, %v1681
        %v1696 = vpack.c.b16 %v1684, %v1683
        %v1697 = vpack.c.b16 %v1686, %v1685
        %v1698 = vpack.c.b16 %v1688, %v1687
        %v1699 = vpack.c.b16 %v1690, %v1689
        %v1700 = vpack.c.b16 %v1692, %v1691
        %1709 = vmatprep.subr.bf16.mxu0 0
        %1710 = vmatpush1.bf16.msra.mxu0 %v1693
        %1711 = vmatprep.subr.bf16.mxu0 0
        %1712 = vmatpush1.bf16.msra.mxu0 %v1694
        %1713 = vmatprep.subr.bf16.mxu0 0
        %1714 = vmatpush1.bf16.msra.mxu0 %v1695
        %1715 = vmatprep.subr.bf16.mxu0 0
        %1716 = vmatpush1.bf16.msra.mxu0 %v1696
        %1717 = vmatprep.subr.bf16.mxu0 0
        %1718 = vmatpush1.bf16.msra.mxu0 %v1697
        %1719 = vmatprep.subr.bf16.mxu0 0
        %1720 = vmatpush1.bf16.msra.mxu0 %v1698
        %1721 = vmatprep.subr.bf16.mxu0 0
        %1722 = vmatpush1.bf16.msra.mxu0 %v1699
        %1723 = vmatprep.subr.bf16.mxu0 0
        %1724 = vmatpush1.bf16.msra.mxu0 %v1700
        %1725 = vmatprep.subr.bf16.mxu0 0
        %1726 = vmatpush1.bf16.msra.mxu0 0
        %1727 = vmatprep.subr.bf16.mxu0 0
        %1728 = vmatpush1.bf16.msra.mxu0 0
        %1729 = vmatprep.subr.bf16.mxu0 0
        %1730 = vmatpush1.bf16.msra.mxu0 0
        %1731 = vmatprep.subr.bf16.mxu0 0
        %1732 = vmatpush1.bf16.msra.mxu0 0
        %1733 = vmatprep.subr.bf16.mxu0 0
        %1734 = vmatpush1.bf16.msra.mxu0 0
        %1735 = vmatprep.subr.bf16.mxu0 0
        %1736 = vmatpush1.bf16.msra.mxu0 0
        %1737 = vmatprep.subr.bf16.mxu0 0
        %1738 = vmatpush1.bf16.msra.mxu0 0
        %1739 = vmatprep.subr.bf16.mxu0 0
        %1740 = vmatpush1.bf16.msra.mxu0 0
        %1741 = vmatprep.mubr.bf16.mxu0 0
        %1742 = vmatmul.mubr.bf16.gmra.mrb[0].mxu0 %v1657
        %v1743 = vpop.f32.mrb[0].mxu0
        %v1744 = vadd.f32 0.0, %v1743
        %v1745 = vpop.f32.mrb[0].mxu0
        %v1746 = vpop.f32.mrb[0].mxu0
        %v1747 = vadd.f32 0.0, %v1746
        %v1748 = vpop.f32.mrb[0].mxu0
        %1749 = vmatprep.mubr.bf16.mxu0 0
        %1750 = vmatmul.mubr.bf16.gmra.mrb[0].mxu0 %v1658
        %v1751 = vpop.f32.mrb[0].mxu0
        %v1752 = vadd.f32 0.0, %v1751
        %v1753 = vpop.f32.mrb[0].mxu0
        %v1754 = vpop.f32.mrb[0].mxu0
        %v1755 = vadd.f32 0.0, %v1754
        %v1756 = vpop.f32.mrb[0].mxu0
        %1757 = vdwg.mxu0
        %v1758 = vadd.f32 %v1434, %v1744
        %v1759 = vadd.f32 %v1435, %v1747
        %v1760 = vadd.f32 %v1436, %v1752
        %v1761 = vadd.f32 %v1437, %v1755
        %v1762 = vunpack.c.h.b16 %v1625
        %v1763 = vunpack.c.h.b16 %v1627
        %v1764 = vunpack.c.h.b16 %v1629
        %v1765 = vunpack.c.h.b16 %v1631
        %v1766 = vunpack.c.h.b16 %v1633
        %v1767 = vunpack.c.h.b16 %v1635
        %v1768 = vunpack.c.h.b16 %v1637
        %v1769 = vunpack.c.h.b16 %v1639
        %v1770 = vunpack.c.h.b16 %v1641
        %v1771 = vunpack.c.h.b16 %v1643
        %v1772 = vunpack.c.h.b16 %v1645
        %v1773 = vunpack.c.h.b16 %v1647
        %v1774 = vunpack.c.h.b16 %v1649
        %v1775 = vunpack.c.h.b16 %v1651
        %v1776 = vunpack.c.h.b16 %v1653
        %v1777 = vunpack.c.h.b16 %v1655
        %v1778 = vpack.c.b16 %v1763, %v1762
        %v1779 = vpack.c.b16 %v1765, %v1764
        %v1780 = vpack.c.b16 %v1767, %v1766
        %v1781 = vpack.c.b16 %v1769, %v1768
        %v1782 = vpack.c.b16 %v1771, %v1770
        %v1783 = vpack.c.b16 %v1773, %v1772
        %v1784 = vpack.c.b16 %v1775, %v1774
        %v1785 = vpack.c.b16 %v1777, %v1776
        %1794 = vmatprep.subr.bf16.mxu0 0
        %1795 = vmatpush1.bf16.msra.mxu0 %v1778
        %1796 = vmatprep.subr.bf16.mxu0 0
        %1797 = vmatpush1.bf16.msra.mxu0 %v1779
        %1798 = vmatprep.subr.bf16.mxu0 0
        %1799 = vmatpush1.bf16.msra.mxu0 %v1780
        %1800 = vmatprep.subr.bf16.mxu0 0
        %1801 = vmatpush1.bf16.msra.mxu0 %v1781
        %1802 = vmatprep.subr.bf16.mxu0 0
        %1803 = vmatpush1.bf16.msra.mxu0 %v1782
        %1804 = vmatprep.subr.bf16.mxu0 0
        %1805 = vmatpush1.bf16.msra.mxu0 %v1783
        %1806 = vmatprep.subr.bf16.mxu0 0
        %1807 = vmatpush1.bf16.msra.mxu0 %v1784
        %1808 = vmatprep.subr.bf16.mxu0 0
        %1809 = vmatpush1.bf16.msra.mxu0 %v1785
        %1810 = vmatprep.subr.bf16.mxu0 0
        %1811 = vmatpush1.bf16.msra.mxu0 0
        %1812 = vmatprep.subr.bf16.mxu0 0
        %1813 = vmatpush1.bf16.msra.mxu0 0
        %1814 = vmatprep.subr.bf16.mxu0 0
        %1815 = vmatpush1.bf16.msra.mxu0 0
        %1816 = vmatprep.subr.bf16.mxu0 0
        %1817 = vmatpush1.bf16.msra.mxu0 0
        %1818 = vmatprep.subr.bf16.mxu0 0
        %1819 = vmatpush1.bf16.msra.mxu0 0
        %1820 = vmatprep.subr.bf16.mxu0 0
        %1821 = vmatpush1.bf16.msra.mxu0 0
        %1822 = vmatprep.subr.bf16.mxu0 0
        %1823 = vmatpush1.bf16.msra.mxu0 0
        %1824 = vmatprep.subr.bf16.mxu0 0
        %1825 = vmatpush1.bf16.msra.mxu0 0
        %1826 = vmatprep.mubr.bf16.mxu0 0
        %1827 = vmatmul.mubr.bf16.gmra.mrb[0].mxu0 %v1657
        %v1828 = vpop.f32.mrb[0].mxu0
        %v1829 = vadd.f32 0.0, %v1828
        %v1830 = vpop.f32.mrb[0].mxu0
        %v1831 = vpop.f32.mrb[0].mxu0
        %v1832 = vadd.f32 0.0, %v1831
        %v1833 = vpop.f32.mrb[0].mxu0
        %1834 = vmatprep.mubr.bf16.mxu0 0
        %1835 = vmatmul.mubr.bf16.gmra.mrb[0].mxu0 %v1658
        %v1836 = vpop.f32.mrb[0].mxu0
        %v1837 = vadd.f32 0.0, %v1836
        %v1838 = vpop.f32.mrb[0].mxu0
        %v1839 = vpop.f32.mrb[0].mxu0
        %v1840 = vadd.f32 0.0, %v1839
        %v1841 = vpop.f32.mrb[0].mxu0
        %1842 = vdwg.mxu0
        %v1843 = vadd.f32 %v1519, %v1829
        %v1844 = vadd.f32 %v1520, %v1832
        %v1845 = vadd.f32 %v1521, %v1837
        %v1846 = vadd.f32 %v1522, %v1840
        %v1863 = vunpack.c.l.b16 %v1626
        %v1864 = vunpack.c.l.b16 %v1628
        %v1865 = vunpack.c.l.b16 %v1630
        %v1866 = vunpack.c.l.b16 %v1632
        %v1867 = vunpack.c.l.b16 %v1634
        %v1868 = vunpack.c.l.b16 %v1636
        %v1869 = vunpack.c.l.b16 %v1638
        %v1870 = vunpack.c.l.b16 %v1640
        %v1871 = vunpack.c.l.b16 %v1642
        %v1872 = vunpack.c.l.b16 %v1644
        %v1873 = vunpack.c.l.b16 %v1646
        %v1874 = vunpack.c.l.b16 %v1648
        %v1875 = vunpack.c.l.b16 %v1650
        %v1876 = vunpack.c.l.b16 %v1652
        %v1877 = vunpack.c.l.b16 %v1654
        %v1878 = vunpack.c.l.b16 %v1656
        %v1879 = vpack.c.b16 %v1864, %v1863
        %v1880 = vpack.c.b16 %v1866, %v1865
        %v1881 = vpack.c.b16 %v1868, %v1867
        %v1882 = vpack.c.b16 %v1870, %v1869
        %v1883 = vpack.c.b16 %v1872, %v1871
        %v1884 = vpack.c.b16 %v1874, %v1873
        %v1885 = vpack.c.b16 %v1876, %v1875
        %v1886 = vpack.c.b16 %v1878, %v1877
        %1895 = vmatprep.subr.bf16.mxu0 0
        %1896 = vmatpush1.bf16.msra.mxu0 %v1879
        %1897 = vmatprep.subr.bf16.mxu0 0
        %1898 = vmatpush1.bf16.msra.mxu0 %v1880
        %1899 = vmatprep.subr.bf16.mxu0 0
        %1900 = vmatpush1.bf16.msra.mxu0 %v1881
        %1901 = vmatprep.subr.bf16.mxu0 0
        %1902 = vmatpush1.bf16.msra.mxu0 %v1882
        %1903 = vmatprep.subr.bf16.mxu0 0
        %1904 = vmatpush1.bf16.msra.mxu0 %v1883
        %1905 = vmatprep.subr.bf16.mxu0 0
        %1906 = vmatpush1.bf16.msra.mxu0 %v1884
        %1907 = vmatprep.subr.bf16.mxu0 0
        %1908 = vmatpush1.bf16.msra.mxu0 %v1885
        %1909 = vmatprep.subr.bf16.mxu0 0
        %1910 = vmatpush1.bf16.msra.mxu0 %v1886
        %1911 = vmatprep.subr.bf16.mxu0 0
        %1912 = vmatpush1.bf16.msra.mxu0 0
        %1913 = vmatprep.subr.bf16.mxu0 0
        %1914 = vmatpush1.bf16.msra.mxu0 0
        %1915 = vmatprep.subr.bf16.mxu0 0
        %1916 = vmatpush1.bf16.msra.mxu0 0
        %1917 = vmatprep.subr.bf16.mxu0 0
        %1918 = vmatpush1.bf16.msra.mxu0 0
        %1919 = vmatprep.subr.bf16.mxu0 0
        %1920 = vmatpush1.bf16.msra.mxu0 0
        %1921 = vmatprep.subr.bf16.mxu0 0
        %1922 = vmatpush1.bf16.msra.mxu0 0
        %1923 = vmatprep.subr.bf16.mxu0 0
        %1924 = vmatpush1.bf16.msra.mxu0 0
        %1925 = vmatprep.subr.bf16.mxu0 0
        %1926 = vmatpush1.bf16.msra.mxu0 0
        %1927 = vmatprep.mubr.bf16.mxu0 0
        %1928 = vmatmul.mubr.bf16.gmra.mrb[0].mxu0 %v1657
        %v1929 = vpop.f32.mrb[0].mxu0
        %v1930 = vadd.f32 0.0, %v1929
        %v1931 = vpop.f32.mrb[0].mxu0
        %v1932 = vpop.f32.mrb[0].mxu0
        %v1933 = vadd.f32 0.0, %v1932
        %v1934 = vpop.f32.mrb[0].mxu0
        %1935 = vmatprep.mubr.bf16.mxu0 0
        %1936 = vmatmul.mubr.bf16.gmra.mrb[0].mxu0 %v1658
        %v1937 = vpop.f32.mrb[0].mxu0
        %v1938 = vadd.f32 0.0, %v1937
        %v1939 = vpop.f32.mrb[0].mxu0
        %v1940 = vpop.f32.mrb[0].mxu0
        %v1941 = vadd.f32 0.0, %v1940
        %v1942 = vpop.f32.mrb[0].mxu0
        %1943 = vdwg.mxu0
        %v1944 = vadd.f32 %v1620, %v1930
        %v1945 = vadd.f32 %v1621, %v1933
        %v1946 = vadd.f32 %v1622, %v1938
        %v1947 = vadd.f32 %v1623, %v1941
        %s1948 = scalar_lea.vmem %s1, 960
        %v1949 = vld [vmem:[%s1948] sm:$0xff]
        %v1950 = vld [vmem:[%s1948 + $0x8] sm:$0xf]
        %v1951 = vld [vmem:[%s1948 + $0xc] sm:$0xff]
        %v1952 = vld [vmem:[%s1948 + $0x14] sm:$0xf]
        %v1953 = vld [vmem:[%s1948 + $0x18] sm:$0xff]
        %v1954 = vld [vmem:[%s1948 + $0x20] sm:$0xf]
        %v1955 = vld [vmem:[%s1948 + $0x24] sm:$0xff]
        %v1956 = vld [vmem:[%s1948 + $0x2c] sm:$0xf]
        %v1957 = vld [vmem:[%s1948 + $0x30] sm:$0xff]
        %v1958 = vld [vmem:[%s1948 + $0x38] sm:$0xf]
        %v1959 = vld [vmem:[%s1948 + $0x3c] sm:$0xff]
        %v1960 = vld [vmem:[%s1948 + $0x44] sm:$0xf]
        %v1961 = vld [vmem:[%s1948 + $0x48] sm:$0xff]
        %v1962 = vld [vmem:[%s1948 + $0x50] sm:$0xf]
        %v1963 = vld [vmem:[%s1948 + $0x54] sm:$0xff]
        %v1964 = vld [vmem:[%s1948 + $0x5c] sm:$0xf]
        %v1965 = vld [vmem:[%s1948 + $0x60] sm:$0xff]
        %v1966 = vld [vmem:[%s1948 + $0x68] sm:$0xf]
        %v1967 = vld [vmem:[%s1948 + $0x6c] sm:$0xff]
        %v1968 = vld [vmem:[%s1948 + $0x74] sm:$0xf]
        %v1969 = vld [vmem:[%s1948 + $0x78] sm:$0xff]
        %v1970 = vld [vmem:[%s1948 + $0x80] sm:$0xf]
        %v1971 = vld [vmem:[%s1948 + $0x84] sm:$0xff]
        %v1972 = vld [vmem:[%s1948 + $0x8c] sm:$0xf]
        %v1973 = vld [vmem:[%s1948 + $0x90] sm:$0xff]
        %v1974 = vld [vmem:[%s1948 + $0x98] sm:$0xf]
        %v1975 = vld [vmem:[%s1948 + $0x9c] sm:$0xff]
        %v1976 = vld [vmem:[%s1948 + $0xa4] sm:$0xf]
        %v1977 = vld [vmem:[%s1948 + $0xa8] sm:$0xff]
        %v1978 = vld [vmem:[%s1948 + $0xb0] sm:$0xf]
        %v1979 = vld [vmem:[%s1948 + $0xb4] sm:$0xff]
        %v1980 = vld [vmem:[%s1948 + $0xbc] sm:$0xf]
        %v1982 = vunpack.c.l.b16 %v329
        %v1983 = vpack.c.b16 %v1982, %v1982
        %v1984 = vrot.slane %v1657, 1
        %v1985 = vrot.slane %v1658, 1
        %v1986 = vsel %vm408, %v1984, %v1985
        %v1987 = vrot.slane %v1983, 1
        %v1988 = vsel %vm408, %v1985, %v1987
        %v2007 = vunpack.c.l.b16 %v1949
        %v2008 = vunpack.c.l.b16 %v1951
        %v2009 = vunpack.c.l.b16 %v1953
        %v2010 = vunpack.c.l.b16 %v1955
        %v2011 = vunpack.c.l.b16 %v1957
        %v2012 = vunpack.c.l.b16 %v1959
        %v2013 = vunpack.c.l.b16 %v1961
        %v2014 = vunpack.c.l.b16 %v1963
        %v2015 = vunpack.c.l.b16 %v1965
        %v2016 = vunpack.c.l.b16 %v1967
        %v2017 = vunpack.c.l.b16 %v1969
        %v2018 = vunpack.c.l.b16 %v1971
        %v2019 = vunpack.c.l.b16 %v1973
        %v2020 = vunpack.c.l.b16 %v1975
        %v2021 = vunpack.c.l.b16 %v1977
        %v2022 = vunpack.c.l.b16 %v1979
        %v2023 = vpack.c.b16 %v2008, %v2007
        %v2024 = vpack.c.b16 %v2010, %v2009
        %v2025 = vpack.c.b16 %v2012, %v2011
        %v2026 = vpack.c.b16 %v2014, %v2013
        %v2027 = vpack.c.b16 %v2016, %v2015
        %v2028 = vpack.c.b16 %v2018, %v2017
        %v2029 = vpack.c.b16 %v2020, %v2019
        %v2030 = vpack.c.b16 %v2022, %v2021
        %2039 = vmatprep.subr.bf16.mxu0 0
        %2040 = vmatpush1.bf16.msra.mxu0 %v2023
        %2041 = vmatprep.subr.bf16.mxu0 0
        %2042 = vmatpush1.bf16.msra.mxu0 %v2024
        %2043 = vmatprep.subr.bf16.mxu0 0
        %2044 = vmatpush1.bf16.msra.mxu0 %v2025
        %2045 = vmatprep.subr.bf16.mxu0 0
        %2046 = vmatpush1.bf16.msra.mxu0 %v2026
        %2047 = vmatprep.subr.bf16.mxu0 0
        %2048 = vmatpush1.bf16.msra.mxu0 %v2027
        %2049 = vmatprep.subr.bf16.mxu0 0
        %2050 = vmatpush1.bf16.msra.mxu0 %v2028
        %2051 = vmatprep.subr.bf16.mxu0 0
        %2052 = vmatpush1.bf16.msra.mxu0 %v2029
        %2053 = vmatprep.subr.bf16.mxu0 0
        %2054 = vmatpush1.bf16.msra.mxu0 %v2030
        %2055 = vmatprep.subr.bf16.mxu0 0
        %2056 = vmatpush1.bf16.msra.mxu0 0
        %2057 = vmatprep.subr.bf16.mxu0 0
        %2058 = vmatpush1.bf16.msra.mxu0 0
        %2059 = vmatprep.subr.bf16.mxu0 0
        %2060 = vmatpush1.bf16.msra.mxu0 0
        %2061 = vmatprep.subr.bf16.mxu0 0
        %2062 = vmatpush1.bf16.msra.mxu0 0
        %2063 = vmatprep.subr.bf16.mxu0 0
        %2064 = vmatpush1.bf16.msra.mxu0 0
        %2065 = vmatprep.subr.bf16.mxu0 0
        %2066 = vmatpush1.bf16.msra.mxu0 0
        %2067 = vmatprep.subr.bf16.mxu0 0
        %2068 = vmatpush1.bf16.msra.mxu0 0
        %2069 = vmatprep.subr.bf16.mxu0 0
        %2070 = vmatpush1.bf16.msra.mxu0 0
        %2071 = vmatprep.mubr.bf16.mxu0 0
        %2072 = vmatmul.mubr.bf16.gmra.mrb[0].mxu0 %v1986
        %v2073 = vpop.f32.mrb[0].mxu0
        %v2074 = vadd.f32 0.0, %v2073
        %v2075 = vpop.f32.mrb[0].mxu0
        %v2076 = vpop.f32.mrb[0].mxu0
        %v2077 = vadd.f32 0.0, %v2076
        %v2078 = vpop.f32.mrb[0].mxu0
        %2079 = vmatprep.mubr.bf16.mxu0 0
        %2080 = vmatmul.mubr.bf16.gmra.mrb[0].mxu0 %v1988
        %v2081 = vpop.f32.mrb[0].mxu0
        %v2082 = vadd.f32 0.0, %v2081
        %v2083 = vpop.f32.mrb[0].mxu0
        %v2084 = vpop.f32.mrb[0].mxu0
        %v2085 = vadd.f32 0.0, %v2084
        %v2086 = vpop.f32.mrb[0].mxu0
        %2087 = vdwg.mxu0
        %v2088 = vadd.f32 %v1758, %v2074
        %v2089 = vadd.f32 %v1759, %v2077
        %v2090 = vadd.f32 %v1760, %v2082
        %v2091 = vadd.f32 %v1761, %v2085
        %v2092 = vunpack.c.h.b16 %v1949
        %v2093 = vunpack.c.h.b16 %v1951
        %v2094 = vunpack.c.h.b16 %v1953
        %v2095 = vunpack.c.h.b16 %v1955
        %v2096 = vunpack.c.h.b16 %v1957
        %v2097 = vunpack.c.h.b16 %v1959
        %v2098 = vunpack.c.h.b16 %v1961
        %v2099 = vunpack.c.h.b16 %v1963
        %v2100 = vunpack.c.h.b16 %v1965
        %v2101 = vunpack.c.h.b16 %v1967
        %v2102 = vunpack.c.h.b16 %v1969
        %v2103 = vunpack.c.h.b16 %v1971
        %v2104 = vunpack.c.h.b16 %v1973
        %v2105 = vunpack.c.h.b16 %v1975
        %v2106 = vunpack.c.h.b16 %v1977
        %v2107 = vunpack.c.h.b16 %v1979
        %v2108 = vpack.c.b16 %v2093, %v2092
        %v2109 = vpack.c.b16 %v2095, %v2094
        %v2110 = vpack.c.b16 %v2097, %v2096
        %v2111 = vpack.c.b16 %v2099, %v2098
        %v2112 = vpack.c.b16 %v2101, %v2100
        %v2113 = vpack.c.b16 %v2103, %v2102
        %v2114 = vpack.c.b16 %v2105, %v2104
        %v2115 = vpack.c.b16 %v2107, %v2106
        %2124 = vmatprep.subr.bf16.mxu0 0
        %2125 = vmatpush1.bf16.msra.mxu0 %v2108
        %2126 = vmatprep.subr.bf16.mxu0 0
        %2127 = vmatpush1.bf16.msra.mxu0 %v2109
        %2128 = vmatprep.subr.bf16.mxu0 0
        %2129 = vmatpush1.bf16.msra.mxu0 %v2110
        %2130 = vmatprep.subr.bf16.mxu0 0
        %2131 = vmatpush1.bf16.msra.mxu0 %v2111
        %2132 = vmatprep.subr.bf16.mxu0 0
        %2133 = vmatpush1.bf16.msra.mxu0 %v2112
        %2134 = vmatprep.subr.bf16.mxu0 0
        %2135 = vmatpush1.bf16.msra.mxu0 %v2113
        %2136 = vmatprep.subr.bf16.mxu0 0
        %2137 = vmatpush1.bf16.msra.mxu0 %v2114
        %2138 = vmatprep.subr.bf16.mxu0 0
        %2139 = vmatpush1.bf16.msra.mxu0 %v2115
        %2140 = vmatprep.subr.bf16.mxu0 0
        %2141 = vmatpush1.bf16.msra.mxu0 0
        %2142 = vmatprep.subr.bf16.mxu0 0
        %2143 = vmatpush1.bf16.msra.mxu0 0
        %2144 = vmatprep.subr.bf16.mxu0 0
        %2145 = vmatpush1.bf16.msra.mxu0 0
        %2146 = vmatprep.subr.bf16.mxu0 0
        %2147 = vmatpush1.bf16.msra.mxu0 0
        %2148 = vmatprep.subr.bf16.mxu0 0
        %2149 = vmatpush1.bf16.msra.mxu0 0
        %2150 = vmatprep.subr.bf16.mxu0 0
        %2151 = vmatpush1.bf16.msra.mxu0 0
        %2152 = vmatprep.subr.bf16.mxu0 0
        %2153 = vmatpush1.bf16.msra.mxu0 0
        %2154 = vmatprep.subr.bf16.mxu0 0
        %2155 = vmatpush1.bf16.msra.mxu0 0
        %2156 = vmatprep.mubr.bf16.mxu0 0
        %2157 = vmatmul.mubr.bf16.gmra.mrb[0].mxu0 %v1986
        %v2158 = vpop.f32.mrb[0].mxu0
        %v2159 = vadd.f32 0.0, %v2158
        %v2160 = vpop.f32.mrb[0].mxu0
        %v2161 = vpop.f32.mrb[0].mxu0
        %v2162 = vadd.f32 0.0, %v2161
        %v2163 = vpop.f32.mrb[0].mxu0
        %2164 = vmatprep.mubr.bf16.mxu0 0
        %2165 = vmatmul.mubr.bf16.gmra.mrb[0].mxu0 %v1988
        %v2166 = vpop.f32.mrb[0].mxu0
        %v2167 = vadd.f32 0.0, %v2166
        %v2168 = vpop.f32.mrb[0].mxu0
        %v2169 = vpop.f32.mrb[0].mxu0
        %v2170 = vadd.f32 0.0, %v2169
        %v2171 = vpop.f32.mrb[0].mxu0
        %2172 = vdwg.mxu0
        %v2173 = vadd.f32 %v1843, %v2159
        %v2174 = vadd.f32 %v1844, %v2162
        %v2175 = vadd.f32 %v1845, %v2167
        %v2176 = vadd.f32 %v1846, %v2170
        %v2193 = vunpack.c.l.b16 %v1950
        %v2194 = vunpack.c.l.b16 %v1952
        %v2195 = vunpack.c.l.b16 %v1954
        %v2196 = vunpack.c.l.b16 %v1956
        %v2197 = vunpack.c.l.b16 %v1958
        %v2198 = vunpack.c.l.b16 %v1960
        %v2199 = vunpack.c.l.b16 %v1962
        %v2200 = vunpack.c.l.b16 %v1964
        %v2201 = vunpack.c.l.b16 %v1966
        %v2202 = vunpack.c.l.b16 %v1968
        %v2203 = vunpack.c.l.b16 %v1970
        %v2204 = vunpack.c.l.b16 %v1972
        %v2205 = vunpack.c.l.b16 %v1974
        %v2206 = vunpack.c.l.b16 %v1976
        %v2207 = vunpack.c.l.b16 %v1978
        %v2208 = vunpack.c.l.b16 %v1980
        %v2209 = vpack.c.b16 %v2194, %v2193
        %v2210 = vpack.c.b16 %v2196, %v2195
        %v2211 = vpack.c.b16 %v2198, %v2197
        %v2212 = vpack.c.b16 %v2200, %v2199
        %v2213 = vpack.c.b16 %v2202, %v2201
        %v2214 = vpack.c.b16 %v2204, %v2203
        %v2215 = vpack.c.b16 %v2206, %v2205
        %v2216 = vpack.c.b16 %v2208, %v2207
        %2225 = vmatprep.subr.bf16.mxu0 0
        %2226 = vmatpush1.bf16.msra.mxu0 %v2209
        %2227 = vmatprep.subr.bf16.mxu0 0
        %2228 = vmatpush1.bf16.msra.mxu0 %v2210
        %2229 = vmatprep.subr.bf16.mxu0 0
        %2230 = vmatpush1.bf16.msra.mxu0 %v2211
        %2231 = vmatprep.subr.bf16.mxu0 0
        %2232 = vmatpush1.bf16.msra.mxu0 %v2212
        %2233 = vmatprep.subr.bf16.mxu0 0
        %2234 = vmatpush1.bf16.msra.mxu0 %v2213
        %2235 = vmatprep.subr.bf16.mxu0 0
        %2236 = vmatpush1.bf16.msra.mxu0 %v2214
        %2237 = vmatprep.subr.bf16.mxu0 0
        %2238 = vmatpush1.bf16.msra.mxu0 %v2215
        %2239 = vmatprep.subr.bf16.mxu0 0
        %2240 = vmatpush1.bf16.msra.mxu0 %v2216
        %2241 = vmatprep.subr.bf16.mxu0 0
        %2242 = vmatpush1.bf16.msra.mxu0 0
        %2243 = vmatprep.subr.bf16.mxu0 0
        %2244 = vmatpush1.bf16.msra.mxu0 0
        %2245 = vmatprep.subr.bf16.mxu0 0
        %2246 = vmatpush1.bf16.msra.mxu0 0
        %2247 = vmatprep.subr.bf16.mxu0 0
        %2248 = vmatpush1.bf16.msra.mxu0 0
        %2249 = vmatprep.subr.bf16.mxu0 0
        %2250 = vmatpush1.bf16.msra.mxu0 0
        %2251 = vmatprep.subr.bf16.mxu0 0
        %2252 = vmatpush1.bf16.msra.mxu0 0
        %2253 = vmatprep.subr.bf16.mxu0 0
        %2254 = vmatpush1.bf16.msra.mxu0 0
        %2255 = vmatprep.subr.bf16.mxu0 0
        %2256 = vmatpush1.bf16.msra.mxu0 0
        %2257 = vmatprep.mubr.bf16.mxu0 0
        %2258 = vmatmul.mubr.bf16.gmra.mrb[0].mxu0 %v1986
        %v2259 = vpop.f32.mrb[0].mxu0
        %v2260 = vadd.f32 0.0, %v2259
        %v2261 = vpop.f32.mrb[0].mxu0
        %v2262 = vpop.f32.mrb[0].mxu0
        %v2263 = vadd.f32 0.0, %v2262
        %v2264 = vpop.f32.mrb[0].mxu0
        %2265 = vmatprep.mubr.bf16.mxu0 0
        %2266 = vmatmul.mubr.bf16.gmra.mrb[0].mxu0 %v1988
        %v2267 = vpop.f32.mrb[0].mxu0
        %v2268 = vadd.f32 0.0, %v2267
        %v2269 = vpop.f32.mrb[0].mxu0
        %v2270 = vpop.f32.mrb[0].mxu0
        %v2271 = vadd.f32 0.0, %v2270
        %v2272 = vpop.f32.mrb[0].mxu0
        %2273 = vdwg.mxu0
        %v2274 = vadd.f32 %v1944, %v2260
        %v2275 = vadd.f32 %v1945, %v2263
        %v2276 = vadd.f32 %v1946, %v2268
        %v2277 = vadd.f32 %v1947, %v2271
        %s2278 = scalar_lea.vmem %s1, 1152
        %v2279 = vld [vmem:[%s2278] sm:$0xff]
        %v2280 = vld [vmem:[%s2278 + $0x8] sm:$0xf]
        %v2281 = vld [vmem:[%s2278 + $0xc] sm:$0xff]
        %v2282 = vld [vmem:[%s2278 + $0x14] sm:$0xf]
        %v2283 = vld [vmem:[%s2278 + $0x18] sm:$0xff]
        %v2284 = vld [vmem:[%s2278 + $0x20] sm:$0xf]
        %v2285 = vld [vmem:[%s2278 + $0x24] sm:$0xff]
        %v2286 = vld [vmem:[%s2278 + $0x2c] sm:$0xf]
        %v2287 = vld [vmem:[%s2278 + $0x30] sm:$0xff]
        %v2288 = vld [vmem:[%s2278 + $0x38] sm:$0xf]
        %v2289 = vld [vmem:[%s2278 + $0x3c] sm:$0xff]
        %v2290 = vld [vmem:[%s2278 + $0x44] sm:$0xf]
        %v2291 = vld [vmem:[%s2278 + $0x48] sm:$0xff]
        %v2292 = vld [vmem:[%s2278 + $0x50] sm:$0xf]
        %v2293 = vld [vmem:[%s2278 + $0x54] sm:$0xff]
        %v2294 = vld [vmem:[%s2278 + $0x5c] sm:$0xf]
        %v2295 = vld [vmem:[%s2278 + $0x60] sm:$0xff]
        %v2296 = vld [vmem:[%s2278 + $0x68] sm:$0xf]
        %v2297 = vld [vmem:[%s2278 + $0x6c] sm:$0xff]
        %v2298 = vld [vmem:[%s2278 + $0x74] sm:$0xf]
        %v2299 = vld [vmem:[%s2278 + $0x78] sm:$0xff]
        %v2300 = vld [vmem:[%s2278 + $0x80] sm:$0xf]
        %v2301 = vld [vmem:[%s2278 + $0x84] sm:$0xff]
        %v2302 = vld [vmem:[%s2278 + $0x8c] sm:$0xf]
        %v2303 = vld [vmem:[%s2278 + $0x90] sm:$0xff]
        %v2304 = vld [vmem:[%s2278 + $0x98] sm:$0xf]
        %v2305 = vld [vmem:[%s2278 + $0x9c] sm:$0xff]
        %v2306 = vld [vmem:[%s2278 + $0xa4] sm:$0xf]
        %v2307 = vld [vmem:[%s2278 + $0xa8] sm:$0xff]
        %v2308 = vld [vmem:[%s2278 + $0xb0] sm:$0xf]
        %v2309 = vld [vmem:[%s2278 + $0xb4] sm:$0xff]
        %v2310 = vld [vmem:[%s2278 + $0xbc] sm:$0xf]
        %v2311 = vrot.slane %v1657, 2
        %v2312 = vrot.slane %v1658, 2
        %v2313 = vsel %vm1001, %v2311, %v2312
        %v2314 = vrot.slane %v1983, 2
        %v2315 = vsel %vm1001, %v2312, %v2314
        %v2334 = vunpack.c.l.b16 %v2279
        %v2335 = vunpack.c.l.b16 %v2281
        %v2336 = vunpack.c.l.b16 %v2283
        %v2337 = vunpack.c.l.b16 %v2285
        %v2338 = vunpack.c.l.b16 %v2287
        %v2339 = vunpack.c.l.b16 %v2289
        %v2340 = vunpack.c.l.b16 %v2291
        %v2341 = vunpack.c.l.b16 %v2293
        %v2342 = vunpack.c.l.b16 %v2295
        %v2343 = vunpack.c.l.b16 %v2297
        %v2344 = vunpack.c.l.b16 %v2299
        %v2345 = vunpack.c.l.b16 %v2301
        %v2346 = vunpack.c.l.b16 %v2303
        %v2347 = vunpack.c.l.b16 %v2305
        %v2348 = vunpack.c.l.b16 %v2307
        %v2349 = vunpack.c.l.b16 %v2309
        %v2350 = vpack.c.b16 %v2335, %v2334
        %v2351 = vpack.c.b16 %v2337, %v2336
        %v2352 = vpack.c.b16 %v2339, %v2338
        %v2353 = vpack.c.b16 %v2341, %v2340
        %v2354 = vpack.c.b16 %v2343, %v2342
        %v2355 = vpack.c.b16 %v2345, %v2344
        %v2356 = vpack.c.b16 %v2347, %v2346
        %v2357 = vpack.c.b16 %v2349, %v2348
        %2366 = vmatprep.subr.bf16.mxu0 0
        %2367 = vmatpush1.bf16.msra.mxu0 %v2350
        %2368 = vmatprep.subr.bf16.mxu0 0
        %2369 = vmatpush1.bf16.msra.mxu0 %v2351
        %2370 = vmatprep.subr.bf16.mxu0 0
        %2371 = vmatpush1.bf16.msra.mxu0 %v2352
        %2372 = vmatprep.subr.bf16.mxu0 0
        %2373 = vmatpush1.bf16.msra.mxu0 %v2353
        %2374 = vmatprep.subr.bf16.mxu0 0
        %2375 = vmatpush1.bf16.msra.mxu0 %v2354
        %2376 = vmatprep.subr.bf16.mxu0 0
        %2377 = vmatpush1.bf16.msra.mxu0 %v2355
        %2378 = vmatprep.subr.bf16.mxu0 0
        %2379 = vmatpush1.bf16.msra.mxu0 %v2356
        %2380 = vmatprep.subr.bf16.mxu0 0
        %2381 = vmatpush1.bf16.msra.mxu0 %v2357
        %2382 = vmatprep.subr.bf16.mxu0 0
        %2383 = vmatpush1.bf16.msra.mxu0 0
        %2384 = vmatprep.subr.bf16.mxu0 0
        %2385 = vmatpush1.bf16.msra.mxu0 0
        %2386 = vmatprep.subr.bf16.mxu0 0
        %2387 = vmatpush1.bf16.msra.mxu0 0
        %2388 = vmatprep.subr.bf16.mxu0 0
        %2389 = vmatpush1.bf16.msra.mxu0 0
        %2390 = vmatprep.subr.bf16.mxu0 0
        %2391 = vmatpush1.bf16.msra.mxu0 0
        %2392 = vmatprep.subr.bf16.mxu0 0
        %2393 = vmatpush1.bf16.msra.mxu0 0
        %2394 = vmatprep.subr.bf16.mxu0 0
        %2395 = vmatpush1.bf16.msra.mxu0 0
        %2396 = vmatprep.subr.bf16.mxu0 0
        %2397 = vmatpush1.bf16.msra.mxu0 0
        %2398 = vmatprep.mubr.bf16.mxu0 0
        %2399 = vmatmul.mubr.bf16.gmra.mrb[0].mxu0 %v2313
        %v2400 = vpop.f32.mrb[0].mxu0
        %v2401 = vadd.f32 0.0, %v2400
        %v2402 = vpop.f32.mrb[0].mxu0
        %v2403 = vpop.f32.mrb[0].mxu0
        %v2404 = vadd.f32 0.0, %v2403
        %v2405 = vpop.f32.mrb[0].mxu0
        %2406 = vmatprep.mubr.bf16.mxu0 0
        %2407 = vmatmul.mubr.bf16.gmra.mrb[0].mxu0 %v2315
        %v2408 = vpop.f32.mrb[0].mxu0
        %v2409 = vadd.f32 0.0, %v2408
        %v2410 = vpop.f32.mrb[0].mxu0
        %v2411 = vpop.f32.mrb[0].mxu0
        %v2412 = vadd.f32 0.0, %v2411
        %v2413 = vpop.f32.mrb[0].mxu0
        %2414 = vdwg.mxu0
        %v2415 = vadd.f32 %v2088, %v2401
        %v2416 = vadd.f32 %v2089, %v2404
        %v2417 = vadd.f32 %v2090, %v2409
        %v2418 = vadd.f32 %v2091, %v2412
        %v2419 = vunpack.c.h.b16 %v2279
        %v2420 = vunpack.c.h.b16 %v2281
        %v2421 = vunpack.c.h.b16 %v2283
        %v2422 = vunpack.c.h.b16 %v2285
        %v2423 = vunpack.c.h.b16 %v2287
        %v2424 = vunpack.c.h.b16 %v2289
        %v2425 = vunpack.c.h.b16 %v2291
        %v2426 = vunpack.c.h.b16 %v2293
        %v2427 = vunpack.c.h.b16 %v2295
        %v2428 = vunpack.c.h.b16 %v2297
        %v2429 = vunpack.c.h.b16 %v2299
        %v2430 = vunpack.c.h.b16 %v2301
        %v2431 = vunpack.c.h.b16 %v2303
        %v2432 = vunpack.c.h.b16 %v2305
        %v2433 = vunpack.c.h.b16 %v2307
        %v2434 = vunpack.c.h.b16 %v2309
        %v2435 = vpack.c.b16 %v2420, %v2419
        %v2436 = vpack.c.b16 %v2422, %v2421
        %v2437 = vpack.c.b16 %v2424, %v2423
        %v2438 = vpack.c.b16 %v2426, %v2425
        %v2439 = vpack.c.b16 %v2428, %v2427
        %v2440 = vpack.c.b16 %v2430, %v2429
        %v2441 = vpack.c.b16 %v2432, %v2431
        %v2442 = vpack.c.b16 %v2434, %v2433
        %2451 = vmatprep.subr.bf16.mxu0 0
        %2452 = vmatpush1.bf16.msra.mxu0 %v2435
        %2453 = vmatprep.subr.bf16.mxu0 0
        %2454 = vmatpush1.bf16.msra.mxu0 %v2436
        %2455 = vmatprep.subr.bf16.mxu0 0
        %2456 = vmatpush1.bf16.msra.mxu0 %v2437
        %2457 = vmatprep.subr.bf16.mxu0 0
        %2458 = vmatpush1.bf16.msra.mxu0 %v2438
        %2459 = vmatprep.subr.bf16.mxu0 0
        %2460 = vmatpush1.bf16.msra.mxu0 %v2439
        %2461 = vmatprep.subr.bf16.mxu0 0
        %2462 = vmatpush1.bf16.msra.mxu0 %v2440
        %2463 = vmatprep.subr.bf16.mxu0 0
        %2464 = vmatpush1.bf16.msra.mxu0 %v2441
        %2465 = vmatprep.subr.bf16.mxu0 0
        %2466 = vmatpush1.bf16.msra.mxu0 %v2442
        %2467 = vmatprep.subr.bf16.mxu0 0
        %2468 = vmatpush1.bf16.msra.mxu0 0
        %2469 = vmatprep.subr.bf16.mxu0 0
        %2470 = vmatpush1.bf16.msra.mxu0 0
        %2471 = vmatprep.subr.bf16.mxu0 0
        %2472 = vmatpush1.bf16.msra.mxu0 0
        %2473 = vmatprep.subr.bf16.mxu0 0
        %2474 = vmatpush1.bf16.msra.mxu0 0
        %2475 = vmatprep.subr.bf16.mxu0 0
        %2476 = vmatpush1.bf16.msra.mxu0 0
        %2477 = vmatprep.subr.bf16.mxu0 0
        %2478 = vmatpush1.bf16.msra.mxu0 0
        %2479 = vmatprep.subr.bf16.mxu0 0
        %2480 = vmatpush1.bf16.msra.mxu0 0
        %2481 = vmatprep.subr.bf16.mxu0 0
        %2482 = vmatpush1.bf16.msra.mxu0 0
        %2483 = vmatprep.mubr.bf16.mxu0 0
        %2484 = vmatmul.mubr.bf16.gmra.mrb[0].mxu0 %v2313
        %v2485 = vpop.f32.mrb[0].mxu0
        %v2486 = vadd.f32 0.0, %v2485
        %v2487 = vpop.f32.mrb[0].mxu0
        %v2488 = vpop.f32.mrb[0].mxu0
        %v2489 = vadd.f32 0.0, %v2488
        %v2490 = vpop.f32.mrb[0].mxu0
        %2491 = vmatprep.mubr.bf16.mxu0 0
        %2492 = vmatmul.mubr.bf16.gmra.mrb[0].mxu0 %v2315
        %v2493 = vpop.f32.mrb[0].mxu0
        %v2494 = vadd.f32 0.0, %v2493
        %v2495 = vpop.f32.mrb[0].mxu0
        %v2496 = vpop.f32.mrb[0].mxu0
        %v2497 = vadd.f32 0.0, %v2496
        %v2498 = vpop.f32.mrb[0].mxu0
        %2499 = vdwg.mxu0
        %v2500 = vadd.f32 %v2173, %v2486
        %v2501 = vadd.f32 %v2174, %v2489
        %v2502 = vadd.f32 %v2175, %v2494
        %v2503 = vadd.f32 %v2176, %v2497
        %v2520 = vunpack.c.l.b16 %v2280
        %v2521 = vunpack.c.l.b16 %v2282
        %v2522 = vunpack.c.l.b16 %v2284
        %v2523 = vunpack.c.l.b16 %v2286
        %v2524 = vunpack.c.l.b16 %v2288
        %v2525 = vunpack.c.l.b16 %v2290
        %v2526 = vunpack.c.l.b16 %v2292
        %v2527 = vunpack.c.l.b16 %v2294
        %v2528 = vunpack.c.l.b16 %v2296
        %v2529 = vunpack.c.l.b16 %v2298
        %v2530 = vunpack.c.l.b16 %v2300
        %v2531 = vunpack.c.l.b16 %v2302
        %v2532 = vunpack.c.l.b16 %v2304
        %v2533 = vunpack.c.l.b16 %v2306
        %v2534 = vunpack.c.l.b16 %v2308
        %v2535 = vunpack.c.l.b16 %v2310
        %v2536 = vpack.c.b16 %v2521, %v2520
        %v2537 = vpack.c.b16 %v2523, %v2522
        %v2538 = vpack.c.b16 %v2525, %v2524
        %v2539 = vpack.c.b16 %v2527, %v2526
        %v2540 = vpack.c.b16 %v2529, %v2528
        %v2541 = vpack.c.b16 %v2531, %v2530
        %v2542 = vpack.c.b16 %v2533, %v2532
        %v2543 = vpack.c.b16 %v2535, %v2534
        %2552 = vmatprep.subr.bf16.mxu0 0
        %2553 = vmatpush1.bf16.msra.mxu0 %v2536
        %2554 = vmatprep.subr.bf16.mxu0 0
        %2555 = vmatpush1.bf16.msra.mxu0 %v2537
        %2556 = vmatprep.subr.bf16.mxu0 0
        %2557 = vmatpush1.bf16.msra.mxu0 %v2538
        %2558 = vmatprep.subr.bf16.mxu0 0
        %2559 = vmatpush1.bf16.msra.mxu0 %v2539
        %2560 = vmatprep.subr.bf16.mxu0 0
        %2561 = vmatpush1.bf16.msra.mxu0 %v2540
        %2562 = vmatprep.subr.bf16.mxu0 0
        %2563 = vmatpush1.bf16.msra.mxu0 %v2541
        %2564 = vmatprep.subr.bf16.mxu0 0
        %2565 = vmatpush1.bf16.msra.mxu0 %v2542
        %2566 = vmatprep.subr.bf16.mxu0 0
        %2567 = vmatpush1.bf16.msra.mxu0 %v2543
        %2568 = vmatprep.subr.bf16.mxu0 0
        %2569 = vmatpush1.bf16.msra.mxu0 0
        %2570 = vmatprep.subr.bf16.mxu0 0
        %2571 = vmatpush1.bf16.msra.mxu0 0
        %2572 = vmatprep.subr.bf16.mxu0 0
        %2573 = vmatpush1.bf16.msra.mxu0 0
        %2574 = vmatprep.subr.bf16.mxu0 0
        %2575 = vmatpush1.bf16.msra.mxu0 0
        %2576 = vmatprep.subr.bf16.mxu0 0
        %2577 = vmatpush1.bf16.msra.mxu0 0
        %2578 = vmatprep.subr.bf16.mxu0 0
        %2579 = vmatpush1.bf16.msra.mxu0 0
        %2580 = vmatprep.subr.bf16.mxu0 0
        %2581 = vmatpush1.bf16.msra.mxu0 0
        %2582 = vmatprep.subr.bf16.mxu0 0
        %2583 = vmatpush1.bf16.msra.mxu0 0
        %2584 = vmatprep.mubr.bf16.mxu0 0
        %2585 = vmatmul.mubr.bf16.gmra.mrb[0].mxu0 %v2313
        %v2586 = vpop.f32.mrb[0].mxu0
        %v2587 = vadd.f32 0.0, %v2586
        %v2588 = vpop.f32.mrb[0].mxu0
        %v2589 = vpop.f32.mrb[0].mxu0
        %v2590 = vadd.f32 0.0, %v2589
        %v2591 = vpop.f32.mrb[0].mxu0
        %2592 = vmatprep.mubr.bf16.mxu0 0
        %2593 = vmatmul.mubr.bf16.gmra.mrb[0].mxu0 %v2315
        %v2594 = vpop.f32.mrb[0].mxu0
        %v2595 = vadd.f32 0.0, %v2594
        %v2596 = vpop.f32.mrb[0].mxu0
        %v2597 = vpop.f32.mrb[0].mxu0
        %v2598 = vadd.f32 0.0, %v2597
        %v2599 = vpop.f32.mrb[0].mxu0
        %2600 = vdwg.mxu0
        %v2601 = vadd.f32 %v2274, %v2587
        %v2602 = vadd.f32 %v2275, %v2590
        %v2603 = vadd.f32 %v2276, %v2595
        %v2604 = vadd.f32 %v2277, %v2598
        %v2605 = vld [vmem:[%s2] sm:$0x7]
        %v2607 = vlaneseq
        %v2608 = vshrl.u32 %v2607, 7
        %v2609 = vsub.s32 0, %v2608
        %v2610 = vrot.slane %v2605, %v2609
        %v2611 = vlaneseq
        %v2612 = vshrl.u32 %v2611, 7
        %v2613 = vsub.s32 1, %v2612
        %v2614 = vrot.slane %v2605, %v2613
        %v2615 = vlaneseq
        %v2616 = vshrl.u32 %v2615, 7
        %v2617 = vsub.s32 2, %v2616
        %v2618 = vrot.slane %v2605, %v2617
        %v2622 = vadd.f32 %v2415, %v2610
        %v2623 = vadd.f32 %v2500, %v2614
        %v2624 = vadd.f32 %v2601, %v2618
        %v2625 = vadd.f32 %v2416, %v2610
        %v2626 = vadd.f32 %v2501, %v2614
        %v2627 = vadd.f32 %v2602, %v2618
        %v2628 = vadd.f32 %v2417, %v2610
        %v2629 = vadd.f32 %v2502, %v2614
        %v2630 = vadd.f32 %v2603, %v2618
        %v2631 = vadd.f32 %v2418, %v2610
        %v2632 = vadd.f32 %v2503, %v2614
        %v2633 = vadd.f32 %v2604, %v2618
        %s2634 = smul.u32 %s23, 12
        %s2635 = smul.addr %s2634, 8
        %s2636 = scalar_lea.vmem [#allocation2], %s2635
        %2637 = vst [vmem:[%s2636] sm:$0xff] %v2622
        %2638 = vst [vmem:[%s2636 + $0x8] sm:$0xff] %v2623
        %2639 = vst [vmem:[%s2636 + $0x10] sm:$0xff] %v2624
        %2640 = vst [vmem:[%s2636 + $0x18] sm:$0xff] %v2625
        %2641 = vst [vmem:[%s2636 + $0x20] sm:$0xff] %v2626
        %2642 = vst [vmem:[%s2636 + $0x28] sm:$0xff] %v2627
        %2643 = vst [vmem:[%s2636 + $0x30] sm:$0xff] %v2628
        %2644 = vst [vmem:[%s2636 + $0x38] sm:$0xff] %v2629
        %2645 = vst [vmem:[%s2636 + $0x40] sm:$0xff] %v2630
        %2646 = vst [vmem:[%s2636 + $0x48] sm:$0xff] %v2631
        %2647 = vst [vmem:[%s2636 + $0x50] sm:$0xff] %v2632
        %2648 = vst [vmem:[%s2636 + $0x58] sm:$0xff] %v2633
        %v2649 = vld [vmem:[#allocation3] sm:$0x7]
        %v2650 = vadd.f32 %v2622, %v2625
        %v2651 = vadd.f32 %v2650, %v2628
        %v2652 = vadd.f32 %v2651, %v2631
        %v2653 = vrot.slane %v2652, 4
        %v2654 = vadd.f32 %v2652, %v2653
        %v2655 = vrot.slane %v2654, 2
        %v2656 = vadd.f32 %v2654, %v2655
        %v2657 = vrot.slane %v2656, 1
        %v2658 = vadd.f32 %v2656, %v2657
        %v2659 = vadd.f32 %v2623, %v2626
        %v2660 = vadd.f32 %v2659, %v2629
        %v2661 = vadd.f32 %v2660, %v2632
        %v2662 = vrot.slane %v2661, 4
        %v2663 = vadd.f32 %v2661, %v2662
        %v2664 = vrot.slane %v2663, 2
        %v2665 = vadd.f32 %v2663, %v2664
        %v2666 = vrot.slane %v2665, 1
        %v2667 = vadd.f32 %v2665, %v2666
        %v2668 = vadd.f32 %v2624, %v2627
        %v2669 = vadd.f32 %v2668, %v2630
        %v2670 = vadd.f32 %v2669, %v2633
        %v2671 = vrot.slane %v2670, 4
        %v2672 = vadd.f32 %v2670, %v2671
        %v2673 = vrot.slane %v2672, 2
        %v2674 = vadd.f32 %v2672, %v2673
        %v2675 = vrot.slane %v2674, 1
        %v2676 = vadd.f32 %v2674, %v2675
        %v2680 = vcombine.low %v2658, %v2667
        %v2682 = vunpack.c.l.s4 1966171168
        %v2683 = vunpack.c.0.s8 %v2682
        %v2684 = vlaneseq
        %v2685 = vshrl.u32 %v2684, 7
        %v2686 = vsub.s32 %v2683, %v2685
        %v2687 = vrot.slane %v2680, %v2686
        %v2689 = vunpack.c.l.s4 1966171168
        %v2690 = vunpack.c.0.s8 %v2689
        %v2691 = vlaneseq
        %v2692 = vshrl.u32 %v2691, 7
        %v2693 = vsub.s32 %v2690, %v2692
        %v2694 = vrot.slane %v2676, %v2693
        %v2695 = vcombine.low %v2687, %v2694
        %v2697 = vunpack.c.l.s4 1966171168
        %v2698 = vunpack.c.0.s8 %v2697
        %v2699 = vlaneseq
        %v2700 = vshrl.u32 %v2699, 7
        %v2701 = vsub.s32 %v2698, %v2700
        %v2702 = vrot.slane %v2695, %v2701
        %v2704 = vadd.f32 %v2649, %v2702
        %v2705 = vlaneseq
        %vm2706 = vcmp.ge.s32.totalorder %v2705, 0
        %vm2707 = vcmp.lt.s32.totalorder %v2705, 384
        %vm2708 = vmand %vm2706, %vm2707
        %2709 = vst.msk [vmem:[#allocation3] sm:$0x7] %vm2708, %v2704
      $region52: #{multi_scale_block.1} parent=47 // pred_fallthru
        _
      %p2710 = scmp.eq.s32.totalorder %s22, 1
      // Predicated region
      $region57: #{multi_scale_block.1} parent=47 // pred_check
        %p2711 = pneg %p2710
      $region58: #{multi_scale_block.1} parent=47 // pred_check_branch
        %2713 = sbr.rel (%p2711) target = $region60
      $region59: #{multi_scale_block.1} parent=47 // pred_region
        %p2714 = scmp.eq.s32.totalorder %s23, 0
        // Predicated region
        $region61: #{multi_scale_block.1} parent=59 // pred_check
          %p2715 = pneg %p2714
        $region62: #{multi_scale_block.1} parent=59 // pred_check_branch
          %2717 = sbr.rel (%p2715) target = $region64
        $region63: #{multi_scale_block.1} parent=59 // pred_region
          %v2718 = vld [vmem:[%s5] sm:$0xff]
          %v2719 = vld [vmem:[%s5 + $0x8] sm:$0xff]
          %v2720 = vld [vmem:[%s5 + $0x10] sm:$0xff]
          %v2721 = vld [vmem:[%s5 + $0x18] sm:$0xff]
          %v2722 = vld [vmem:[%s5 + $0x20] sm:$0xff]
          %v2723 = vld [vmem:[%s5 + $0x28] sm:$0xff]
          %v2724 = vld [vmem:[%s5 + $0x30] sm:$0xff]
          %v2725 = vld [vmem:[%s5 + $0x38] sm:$0xff]
          %v2726 = vld [vmem:[%s5 + $0x40] sm:$0xff]
          %v2727 = vld [vmem:[%s5 + $0x48] sm:$0xff]
          %v2728 = vld [vmem:[%s5 + $0x50] sm:$0xff]
          %v2729 = vld [vmem:[%s5 + $0x58] sm:$0xff]
          %v2730 = vld [vmem:[%s5 + $0x60] sm:$0xff]
          %v2731 = vld [vmem:[%s5 + $0x68] sm:$0xff]
          %v2732 = vld [vmem:[%s5 + $0x70] sm:$0xff]
          %v2733 = vld [vmem:[%s5 + $0x78] sm:$0xff]
          %v2734 = vld [vmem:[%s5 + $0x80] sm:$0xff]
          %v2735 = vld [vmem:[%s5 + $0x88] sm:$0xff]
          %v2736 = vld [vmem:[%s5 + $0x90] sm:$0xff]
          %v2737 = vld [vmem:[%s5 + $0x98] sm:$0xff]
          %v2738 = vld [vmem:[%s5 + $0xa0] sm:$0xff]
          %v2739 = vld [vmem:[%s5 + $0xa8] sm:$0xff]
          %v2740 = vld [vmem:[%s5 + $0xb0] sm:$0xff]
          %v2741 = vld [vmem:[%s5 + $0xb8] sm:$0xff]
          %v2742 = vld [vmem:[%s5 + $0xc0] sm:$0xff]
          %v2743 = vld [vmem:[%s5 + $0xc8] sm:$0xff]
          %v2744 = vld [vmem:[%s5 + $0xd0] sm:$0xff]
          %v2745 = vld [vmem:[%s5 + $0xd8] sm:$0xff]
          %v2746 = vld [vmem:[%s5 + $0xe0] sm:$0xff]
          %v2747 = vld [vmem:[%s5 + $0xe8] sm:$0xff]
          %v2748 = vld [vmem:[%s5 + $0xf0] sm:$0xff]
          %v2749 = vld [vmem:[%s5 + $0xf8] sm:$0xff]
          %v2750 = vld [vmem:[%s5 + $0x100] sm:$0xff]
          %v2751 = vld [vmem:[%s5 + $0x108] sm:$0xff]
          %v2752 = vld [vmem:[%s5 + $0x110] sm:$0xff]
          %v2753 = vld [vmem:[%s5 + $0x118] sm:$0xff]
          %v2754 = vld [vmem:[%s5 + $0x120] sm:$0xff]
          %v2755 = vld [vmem:[%s5 + $0x128] sm:$0xff]
          %v2756 = vld [vmem:[%s5 + $0x130] sm:$0xff]
          %v2757 = vld [vmem:[%s5 + $0x138] sm:$0xff]
          %v2758 = vld [vmem:[%s5 + $0x140] sm:$0xff]
          %v2759 = vld [vmem:[%s5 + $0x148] sm:$0xff]
          %v2760 = vld [vmem:[%s5 + $0x150] sm:$0xff]
          %v2761 = vld [vmem:[%s5 + $0x158] sm:$0xff]
          %v2762 = vld [vmem:[%s5 + $0x160] sm:$0xff]
          %v2763 = vld [vmem:[%s5 + $0x168] sm:$0xff]
          %v2764 = vld [vmem:[%s5 + $0x170] sm:$0xff]
          %v2765 = vld [vmem:[%s5 + $0x178] sm:$0xff]
          %v2766 = vld [vmem:[%s6] sm:$0xff]
          %v2767 = vld [vmem:[%s6 + $0x8] sm:$0xff]
          %v2768 = vld [vmem:[%s6 + $0x10] sm:$0xff]
          %v2769 = vld [vmem:[%s6 + $0x18] sm:$0xff]
          %v2770 = vld [vmem:[%s6 + $0x20] sm:$0xff]
          %v2771 = vld [vmem:[%s6 + $0x28] sm:$0xff]
          %v2772 = vld [vmem:[%s6 + $0x30] sm:$0xff]
          %v2773 = vld [vmem:[%s6 + $0x38] sm:$0xff]
          %v2774 = vld [vmem:[%s6 + $0x40] sm:$0xff]
          %v2775 = vld [vmem:[#allocation3] sm:$0x7]
          %v2777 = vlaneseq
          %v2778 = vshrl.u32 %v2777, 7
          %v2779 = vsub.s32 0, %v2778
          %v2780 = vrot.slane %v2775, %v2779
          %v2781 = vlaneseq
          %v2782 = vshrl.u32 %v2781, 7
          %v2783 = vsub.s32 1, %v2782
          %v2784 = vrot.slane %v2775, %v2783
          %v2785 = vlaneseq
          %v2786 = vshrl.u32 %v2785, 7
          %v2787 = vsub.s32 2, %v2786
          %v2788 = vrot.slane %v2775, %v2787
          %2792 = vmatprep.subr.mxu0 0.0
          %2793 = vmatpush1.msra.mxu0 %v2718
          %2794 = vmatprep.subr.mxu0 0.0
          %2795 = vmatpush1.msra.mxu0 %v2719
          %2796 = vmatprep.subr.mxu0 0.0
          %2797 = vmatpush1.msra.mxu0 %v2720
          %2798 = vmatprep.subr.mxu0 0.0
          %2799 = vmatpush1.msra.mxu0 %v2721
          %2800 = vmatprep.subr.mxu0 0.0
          %2801 = vmatpush1.msra.mxu0 %v2722
          %2802 = vmatprep.subr.mxu0 0.0
          %2803 = vmatpush1.msra.mxu0 %v2723
          %2804 = vmatprep.subr.mxu0 0.0
          %2805 = vmatpush1.msra.mxu0 %v2724
          %2806 = vmatprep.subr.mxu0 0.0
          %2807 = vmatpush1.msra.mxu0 %v2725
          %2808 = vmatprep.subr.mxu0 0.0
          %2809 = vmatpush1.msra.mxu0 %v2726
          %2810 = vmatprep.subr.mxu0 0.0
          %2811 = vmatpush1.msra.mxu0 %v2727
          %2812 = vmatprep.subr.mxu0 0.0
          %2813 = vmatpush1.msra.mxu0 %v2728
          %2814 = vmatprep.subr.mxu0 0.0
          %2815 = vmatpush1.msra.mxu0 %v2729
          %2816 = vmatprep.subr.mxu0 0.0
          %2817 = vmatpush1.msra.mxu0 %v2730
          %2818 = vmatprep.subr.mxu0 0.0
          %2819 = vmatpush1.msra.mxu0 %v2731
          %2820 = vmatprep.subr.mxu0 0.0
          %2821 = vmatpush1.msra.mxu0 %v2732
          %2822 = vmatprep.subr.mxu0 0.0
          %2823 = vmatpush1.msra.mxu0 %v2733
          %2824 = vmatprep.subr.mxu0 0.0
          %2825 = vmatpush1.msra.mxu0 %v2734
          %2826 = vmatprep.subr.mxu0 0.0
          %2827 = vmatpush1.msra.mxu0 %v2735
          %2828 = vmatprep.subr.mxu0 0.0
          %2829 = vmatpush1.msra.mxu0 %v2736
          %2830 = vmatprep.subr.mxu0 0.0
          %2831 = vmatpush1.msra.mxu0 %v2737
          %2832 = vmatprep.subr.mxu0 0.0
          %2833 = vmatpush1.msra.mxu0 %v2738
          %2834 = vmatprep.subr.mxu0 0.0
          %2835 = vmatpush1.msra.mxu0 %v2739
          %2836 = vmatprep.subr.mxu0 0.0
          %2837 = vmatpush1.msra.mxu0 %v2740
          %2838 = vmatprep.subr.mxu0 0.0
          %2839 = vmatpush1.msra.mxu0 %v2741
          %2840 = vmatprep.subr.mxu0 0.0
          %2841 = vmatpush1.msra.mxu0 %v2742
          %2842 = vmatprep.subr.mxu0 0.0
          %2843 = vmatpush1.msra.mxu0 %v2743
          %2844 = vmatprep.subr.mxu0 0.0
          %2845 = vmatpush1.msra.mxu0 %v2744
          %2846 = vmatprep.subr.mxu0 0.0
          %2847 = vmatpush1.msra.mxu0 %v2745
          %2848 = vmatprep.subr.mxu0 0.0
          %2849 = vmatpush1.msra.mxu0 %v2746
          %2850 = vmatprep.subr.mxu0 0.0
          %2851 = vmatpush1.msra.mxu0 %v2747
          %2852 = vmatprep.subr.mxu0 0.0
          %2853 = vmatpush1.msra.mxu0 %v2748
          %2854 = vmatprep.subr.mxu0 0.0
          %2855 = vmatpush1.msra.mxu0 %v2749
          %2856 = vmatprep.mubr.f32.mxu0 %v2784
          %2857 = vmatmul.mubr.f32.gmra.mrb[0].mxu0 %v2780
          %v2858 = vpop.f32.mrb[0].mxu0
          %v2859 = vadd.f32 0.0, %v2858
          %v2860 = vpop.f32.mrb[0].mxu0
          %2861 = vdwg.mxu0
          %2862 = vmatprep.subr.mxu0 0.0
          %2863 = vmatpush1.msra.mxu0 %v2750
          %2864 = vmatprep.subr.mxu0 0.0
          %2865 = vmatpush1.msra.mxu0 %v2751
          %2866 = vmatprep.subr.mxu0 0.0
          %2867 = vmatpush1.msra.mxu0 %v2752
          %2868 = vmatprep.subr.mxu0 0.0
          %2869 = vmatpush1.msra.mxu0 %v2753
          %2870 = vmatprep.subr.mxu0 0.0
          %2871 = vmatpush1.msra.mxu0 %v2754
          %2872 = vmatprep.subr.mxu0 0.0
          %2873 = vmatpush1.msra.mxu0 %v2755
          %2874 = vmatprep.subr.mxu0 0.0
          %2875 = vmatpush1.msra.mxu0 %v2756
          %2876 = vmatprep.subr.mxu0 0.0
          %2877 = vmatpush1.msra.mxu0 %v2757
          %2878 = vmatprep.subr.mxu0 0.0
          %2879 = vmatpush1.msra.mxu0 %v2758
          %2880 = vmatprep.subr.mxu0 0.0
          %2881 = vmatpush1.msra.mxu0 %v2759
          %2882 = vmatprep.subr.mxu0 0.0
          %2883 = vmatpush1.msra.mxu0 %v2760
          %2884 = vmatprep.subr.mxu0 0.0
          %2885 = vmatpush1.msra.mxu0 %v2761
          %2886 = vmatprep.subr.mxu0 0.0
          %2887 = vmatpush1.msra.mxu0 %v2762
          %2888 = vmatprep.subr.mxu0 0.0
          %2889 = vmatpush1.msra.mxu0 %v2763
          %2890 = vmatprep.subr.mxu0 0.0
          %2891 = vmatpush1.msra.mxu0 %v2764
          %2892 = vmatprep.subr.mxu0 0.0
          %2893 = vmatpush1.msra.mxu0 %v2765
          %2894 = vmatprep.subr.mxu0 0.0
          %2895 = vmatpush1.msra.mxu0 0.0
          %2896 = vmatprep.subr.mxu0 0.0
          %2897 = vmatpush1.msra.mxu0 0.0
          %2898 = vmatprep.subr.mxu0 0.0
          %2899 = vmatpush1.msra.mxu0 0.0
          %2900 = vmatprep.subr.mxu0 0.0
          %2901 = vmatpush1.msra.mxu0 0.0
          %2902 = vmatprep.subr.mxu0 0.0
          %2903 = vmatpush1.msra.mxu0 0.0
          %2904 = vmatprep.subr.mxu0 0.0
          %2905 = vmatpush1.msra.mxu0 0.0
          %2906 = vmatprep.subr.mxu0 0.0
          %2907 = vmatpush1.msra.mxu0 0.0
          %2908 = vmatprep.subr.mxu0 0.0
          %2909 = vmatpush1.msra.mxu0 0.0
          %2910 = vmatprep.subr.mxu0 0.0
          %2911 = vmatpush1.msra.mxu0 0.0
          %2912 = vmatprep.subr.mxu0 0.0
          %2913 = vmatpush1.msra.mxu0 0.0
          %2914 = vmatprep.subr.mxu0 0.0
          %2915 = vmatpush1.msra.mxu0 0.0
          %2916 = vmatprep.subr.mxu0 0.0
          %2917 = vmatpush1.msra.mxu0 0.0
          %2918 = vmatprep.subr.mxu0 0.0
          %2919 = vmatpush1.msra.mxu0 0.0
          %2920 = vmatprep.subr.mxu0 0.0
          %2921 = vmatpush1.msra.mxu0 0.0
          %2922 = vmatprep.subr.mxu0 0.0
          %2923 = vmatpush1.msra.mxu0 0.0
          %2924 = vmatprep.subr.mxu0 0.0
          %2925 = vmatpush1.msra.mxu0 0.0
          %2926 = vmatprep.mubr.f32.mxu0 0.0
          %2927 = vmatmul.mubr.f32.gmra.mrb[0].mxu0 %v2788
          %v2928 = vpop.f32.mrb[0].mxu0
          %v2929 = vadd.f32 %v2859, %v2928
          %v2930 = vpop.f32.mrb[0].mxu0
          %2931 = vdwg.mxu0
          %v2932 = vmul.f32 %v2929, 0.001953125
          %vm2933 = vcmask 195584
          %v2935 = vsel %vm2933, %v2932, 0
          %2937 = vmatprep.subr.mxu0 %v2767
          %2938 = vmatpush1.msra.mxu0 %v2766
          %2939 = vmatprep.subr.mxu0 %v2770
          %2940 = vmatpush1.msra.mxu0 %v2769
          %2941 = vmatprep.subr.mxu0 %v2773
          %2942 = vmatpush1.msra.mxu0 %v2772
          %2943 = vmatprep.subr.mxu0 0.0
          %2944 = vmatpush1.msra.mxu0 0.0
          %2945 = vmatprep.subr.mxu0 0.0
          %2946 = vmatpush1.msra.mxu0 0.0
          %2947 = vmatprep.subr.mxu0 0.0
          %2948 = vmatpush1.msra.mxu0 0.0
          %2949 = vmatprep.subr.mxu0 0.0
          %2950 = vmatpush1.msra.mxu0 0.0
          %2951 = vmatprep.subr.mxu0 0.0
          %2952 = vmatpush1.msra.mxu0 0.0
          %2953 = vmatprep.subr.mxu0 0.0
          %2954 = vmatpush1.msra.mxu0 0.0
          %2955 = vmatprep.subr.mxu0 0.0
          %2956 = vmatpush1.msra.mxu0 0.0
          %2957 = vmatprep.subr.mxu0 0.0
          %2958 = vmatpush1.msra.mxu0 0.0
          %2959 = vmatprep.subr.mxu0 0.0
          %2960 = vmatpush1.msra.mxu0 0.0
          %2961 = vmatprep.subr.mxu0 0.0
          %2962 = vmatpush1.msra.mxu0 0.0
          %2963 = vmatprep.subr.mxu0 0.0
          %2964 = vmatpush1.msra.mxu0 0.0
          %2965 = vmatprep.subr.mxu0 0.0
          %2966 = vmatpush1.msra.mxu0 0.0
          %2967 = vmatprep.subr.mxu0 0.0
          %2968 = vmatpush1.msra.mxu0 0.0
          %2969 = vmatprep.subr.mxu0 0.0
          %2970 = vmatpush1.msra.mxu0 0.0
          %2971 = vmatprep.subr.mxu0 0.0
          %2972 = vmatpush1.msra.mxu0 0.0
          %2973 = vmatprep.subr.mxu0 0.0
          %2974 = vmatpush1.msra.mxu0 0.0
          %2975 = vmatprep.subr.mxu0 0.0
          %2976 = vmatpush1.msra.mxu0 0.0
          %2977 = vmatprep.subr.mxu0 0.0
          %2978 = vmatpush1.msra.mxu0 0.0
          %2979 = vmatprep.subr.mxu0 0.0
          %2980 = vmatpush1.msra.mxu0 0.0
          %2981 = vmatprep.subr.mxu0 0.0
          %2982 = vmatpush1.msra.mxu0 0.0
          %2983 = vmatprep.subr.mxu0 0.0
          %2984 = vmatpush1.msra.mxu0 0.0
          %2985 = vmatprep.subr.mxu0 0.0
          %2986 = vmatpush1.msra.mxu0 0.0
          %2987 = vmatprep.subr.mxu0 0.0
          %2988 = vmatpush1.msra.mxu0 0.0
          %2989 = vmatprep.subr.mxu0 0.0
          %2990 = vmatpush1.msra.mxu0 0.0
          %2991 = vmatprep.subr.mxu0 0.0
          %2992 = vmatpush1.msra.mxu0 0.0
          %2993 = vmatprep.subr.mxu0 0.0
          %2994 = vmatpush1.msra.mxu0 0.0
          %2995 = vmatprep.subr.mxu0 0.0
          %2996 = vmatpush1.msra.mxu0 0.0
          %2997 = vmatprep.subr.mxu0 0.0
          %2998 = vmatpush1.msra.mxu0 0.0
          %2999 = vmatprep.subr.mxu0 0.0
          %3000 = vmatpush1.msra.mxu0 0.0
          %3001 = vmatprep.mubr.f32.mxu0 0.0
          %3002 = vmatmul.mubr.f32.gmra.mrb[0].mxu0 %v2935
          %v3003 = vpop.f32.mrb[0].mxu0
          %v3004 = vadd.f32 0.0, %v3003
          %v3005 = vpop.f32.mrb[0].mxu0
          %v3006 = vadd.f32 0.0, %v3005
          %3007 = vdwg.mxu0
          %3008 = vmatprep.subr.mxu0 0.0
          %3009 = vmatpush1.msra.mxu0 %v2768
          %3010 = vmatprep.subr.mxu0 0.0
          %3011 = vmatpush1.msra.mxu0 %v2771
          %3012 = vmatprep.subr.mxu0 0.0
          %3013 = vmatpush1.msra.mxu0 %v2774
          %3014 = vmatprep.subr.mxu0 0.0
          %3015 = vmatpush1.msra.mxu0 0.0
          %3016 = vmatprep.subr.mxu0 0.0
          %3017 = vmatpush1.msra.mxu0 0.0
          %3018 = vmatprep.subr.mxu0 0.0
          %3019 = vmatpush1.msra.mxu0 0.0
          %3020 = vmatprep.subr.mxu0 0.0
          %3021 = vmatpush1.msra.mxu0 0.0
          %3022 = vmatprep.subr.mxu0 0.0
          %3023 = vmatpush1.msra.mxu0 0.0
          %3024 = vmatprep.subr.mxu0 0.0
          %3025 = vmatpush1.msra.mxu0 0.0
          %3026 = vmatprep.subr.mxu0 0.0
          %3027 = vmatpush1.msra.mxu0 0.0
          %3028 = vmatprep.subr.mxu0 0.0
          %3029 = vmatpush1.msra.mxu0 0.0
          %3030 = vmatprep.subr.mxu0 0.0
          %3031 = vmatpush1.msra.mxu0 0.0
          %3032 = vmatprep.subr.mxu0 0.0
          %3033 = vmatpush1.msra.mxu0 0.0
          %3034 = vmatprep.subr.mxu0 0.0
          %3035 = vmatpush1.msra.mxu0 0.0
          %3036 = vmatprep.subr.mxu0 0.0
          %3037 = vmatpush1.msra.mxu0 0.0
          %3038 = vmatprep.subr.mxu0 0.0
          %3039 = vmatpush1.msra.mxu0 0.0
          %3040 = vmatprep.subr.mxu0 0.0
          %3041 = vmatpush1.msra.mxu0 0.0
          %3042 = vmatprep.subr.mxu0 0.0
          %3043 = vmatpush1.msra.mxu0 0.0
          %3044 = vmatprep.subr.mxu0 0.0
          %3045 = vmatpush1.msra.mxu0 0.0
          %3046 = vmatprep.subr.mxu0 0.0
          %3047 = vmatpush1.msra.mxu0 0.0
          %3048 = vmatprep.subr.mxu0 0.0
          %3049 = vmatpush1.msra.mxu0 0.0
          %3050 = vmatprep.subr.mxu0 0.0
          %3051 = vmatpush1.msra.mxu0 0.0
          %3052 = vmatprep.subr.mxu0 0.0
          %3053 = vmatpush1.msra.mxu0 0.0
          %3054 = vmatprep.subr.mxu0 0.0
          %3055 = vmatpush1.msra.mxu0 0.0
          %3056 = vmatprep.subr.mxu0 0.0
          %3057 = vmatpush1.msra.mxu0 0.0
          %3058 = vmatprep.subr.mxu0 0.0
          %3059 = vmatpush1.msra.mxu0 0.0
          %3060 = vmatprep.subr.mxu0 0.0
          %3061 = vmatpush1.msra.mxu0 0.0
          %3062 = vmatprep.subr.mxu0 0.0
          %3063 = vmatpush1.msra.mxu0 0.0
          %3064 = vmatprep.subr.mxu0 0.0
          %3065 = vmatpush1.msra.mxu0 0.0
          %3066 = vmatprep.subr.mxu0 0.0
          %3067 = vmatpush1.msra.mxu0 0.0
          %3068 = vmatprep.subr.mxu0 0.0
          %3069 = vmatpush1.msra.mxu0 0.0
          %3070 = vmatprep.subr.mxu0 0.0
          %3071 = vmatpush1.msra.mxu0 0.0
          %3072 = vmatprep.mubr.f32.mxu0 0.0
          %3073 = vmatmul.mubr.f32.gmra.mrb[0].mxu0 %v2935
          %v3074 = vpop.f32.mrb[0].mxu0
          %v3075 = vadd.f32 0.0, %v3074
          %v3076 = vpop.f32.mrb[0].mxu0
          %3077 = vdwg.mxu0
          %v3078 = vld [vmem:[#allocation2] sm:$0xff]
          %v3079 = vld [vmem:[#allocation2 + $0x8] sm:$0xff]
          %v3080 = vld [vmem:[#allocation2 + $0x10] sm:$0xff]
          %v3081 = vld [vmem:[#allocation2 + $0x18] sm:$0xff]
          %v3082 = vld [vmem:[#allocation2 + $0x20] sm:$0xff]
          %v3083 = vld [vmem:[#allocation2 + $0x28] sm:$0xff]
          %v3084 = vld [vmem:[#allocation2 + $0x30] sm:$0xff]
          %v3085 = vld [vmem:[#allocation2 + $0x38] sm:$0xff]
          %v3086 = vld [vmem:[#allocation2 + $0x40] sm:$0xff]
          %v3087 = vld [vmem:[#allocation2 + $0x48] sm:$0xff]
          %v3088 = vld [vmem:[#allocation2 + $0x50] sm:$0xff]
          %v3089 = vld [vmem:[#allocation2 + $0x58] sm:$0xff]
          %v3090 = vlaneseq
          %v3091 = vshrl.u32 %v3090, 7
          %v3092 = vsub.s32 0, %v3091
          %v3093 = vrot.slane %v3004, %v3092
          %v3094 = vlaneseq
          %v3095 = vshrl.u32 %v3094, 7
          %v3096 = vsub.s32 0, %v3095
          %v3097 = vrot.slane %v3006, %v3096
          %v3098 = vlaneseq
          %v3099 = vshrl.u32 %v3098, 7
          %v3100 = vsub.s32 0, %v3099
          %v3101 = vrot.slane %v3075, %v3100
          %v3102 = vsub.f32 %v3078, %v3093
          %v3103 = vsub.f32 %v3079, %v3097
          %v3104 = vsub.f32 %v3080, %v3101
          %v3105 = vsub.f32 %v3081, %v3093
          %v3106 = vsub.f32 %v3082, %v3097
          %v3107 = vsub.f32 %v3083, %v3101
          %v3108 = vsub.f32 %v3084, %v3093
          %v3109 = vsub.f32 %v3085, %v3097
          %v3110 = vsub.f32 %v3086, %v3101
          %v3111 = vsub.f32 %v3087, %v3093
          %v3112 = vsub.f32 %v3088, %v3097
          %v3113 = vsub.f32 %v3089, %v3101
          %v3114 = vmul.f32 %v3102, %v3102
          %v3115 = vmul.f32 %v3103, %v3103
          %v3116 = vmul.f32 %v3104, %v3104
          %v3117 = vmul.f32 %v3105, %v3105
          %v3118 = vmul.f32 %v3106, %v3106
          %v3119 = vmul.f32 %v3107, %v3107
          %v3120 = vmul.f32 %v3108, %v3108
          %v3121 = vmul.f32 %v3109, %v3109
          %v3122 = vmul.f32 %v3110, %v3110
          %v3123 = vmul.f32 %v3111, %v3111
          %v3124 = vmul.f32 %v3112, %v3112
          %v3125 = vmul.f32 %v3113, %v3113
          %v3126 = vadd.f32 %v3114, %v3117
          %v3127 = vadd.f32 %v3126, %v3120
          %v3128 = vadd.f32 %v3127, %v3123
          %v3129 = vrot.slane %v3128, 4
          %v3130 = vadd.f32 %v3128, %v3129
          %v3131 = vrot.slane %v3130, 2
          %v3132 = vadd.f32 %v3130, %v3131
          %v3133 = vrot.slane %v3132, 1
          %v3134 = vadd.f32 %v3132, %v3133
          %v3135 = vadd.f32 %v3115, %v3118
          %v3136 = vadd.f32 %v3135, %v3121
          %v3137 = vadd.f32 %v3136, %v3124
          %v3138 = vrot.slane %v3137, 4
          %v3139 = vadd.f32 %v3137, %v3138
          %v3140 = vrot.slane %v3139, 2
          %v3141 = vadd.f32 %v3139, %v3140
          %v3142 = vrot.slane %v3141, 1
          %v3143 = vadd.f32 %v3141, %v3142
          %v3144 = vadd.f32 %v3116, %v3119
          %v3145 = vadd.f32 %v3144, %v3122
          %v3146 = vadd.f32 %v3145, %v3125
          %v3147 = vrot.slane %v3146, 4
          %v3148 = vadd.f32 %v3146, %v3147
          %v3149 = vrot.slane %v3148, 2
          %v3150 = vadd.f32 %v3148, %v3149
          %v3151 = vrot.slane %v3150, 1
          %v3152 = vadd.f32 %v3150, %v3151
          %v3153 = vadd.f32 %v3134, 0.0
          %v3154 = vadd.f32 %v3143, 0.0
          %v3155 = vadd.f32 %v3152, 0.0
          %3156 = vmatprep.subr.mxu0 0.0
          %3157 = vmatpush1.msra.mxu0 %v2718
          %3158 = vmatprep.subr.mxu0 0.0
          %3159 = vmatpush1.msra.mxu0 %v2719
          %3160 = vmatprep.subr.mxu0 0.0
          %3161 = vmatpush1.msra.mxu0 %v2720
          %3162 = vmatprep.subr.mxu0 0.0
          %3163 = vmatpush1.msra.mxu0 %v2721
          %3164 = vmatprep.subr.mxu0 0.0
          %3165 = vmatpush1.msra.mxu0 %v2722
          %3166 = vmatprep.subr.mxu0 0.0
          %3167 = vmatpush1.msra.mxu0 %v2723
          %3168 = vmatprep.subr.mxu0 0.0
          %3169 = vmatpush1.msra.mxu0 %v2724
          %3170 = vmatprep.subr.mxu0 0.0
          %3171 = vmatpush1.msra.mxu0 %v2725
          %3172 = vmatprep.subr.mxu0 0.0
          %3173 = vmatpush1.msra.mxu0 %v2726
          %3174 = vmatprep.subr.mxu0 0.0
          %3175 = vmatpush1.msra.mxu0 %v2727
          %3176 = vmatprep.subr.mxu0 0.0
          %3177 = vmatpush1.msra.mxu0 %v2728
          %3178 = vmatprep.subr.mxu0 0.0
          %3179 = vmatpush1.msra.mxu0 %v2729
          %3180 = vmatprep.subr.mxu0 0.0
          %3181 = vmatpush1.msra.mxu0 %v2730
          %3182 = vmatprep.subr.mxu0 0.0
          %3183 = vmatpush1.msra.mxu0 %v2731
          %3184 = vmatprep.subr.mxu0 0.0
          %3185 = vmatpush1.msra.mxu0 %v2732
          %3186 = vmatprep.subr.mxu0 0.0
          %3187 = vmatpush1.msra.mxu0 %v2733
          %3188 = vmatprep.subr.mxu0 0.0
          %3189 = vmatpush1.msra.mxu0 %v2734
          %3190 = vmatprep.subr.mxu0 0.0
          %3191 = vmatpush1.msra.mxu0 %v2735
          %3192 = vmatprep.subr.mxu0 0.0
          %3193 = vmatpush1.msra.mxu0 %v2736
          %3194 = vmatprep.subr.mxu0 0.0
          %3195 = vmatpush1.msra.mxu0 %v2737
          %3196 = vmatprep.subr.mxu0 0.0
          %3197 = vmatpush1.msra.mxu0 %v2738
          %3198 = vmatprep.subr.mxu0 0.0
          %3199 = vmatpush1.msra.mxu0 %v2739
          %3200 = vmatprep.subr.mxu0 0.0
          %3201 = vmatpush1.msra.mxu0 %v2740
          %3202 = vmatprep.subr.mxu0 0.0
          %3203 = vmatpush1.msra.mxu0 %v2741
          %3204 = vmatprep.subr.mxu0 0.0
          %3205 = vmatpush1.msra.mxu0 %v2742
          %3206 = vmatprep.subr.mxu0 0.0
          %3207 = vmatpush1.msra.mxu0 %v2743
          %3208 = vmatprep.subr.mxu0 0.0
          %3209 = vmatpush1.msra.mxu0 %v2744
          %3210 = vmatprep.subr.mxu0 0.0
          %3211 = vmatpush1.msra.mxu0 %v2745
          %3212 = vmatprep.subr.mxu0 0.0
          %3213 = vmatpush1.msra.mxu0 %v2746
          %3214 = vmatprep.subr.mxu0 0.0
          %3215 = vmatpush1.msra.mxu0 %v2747
          %3216 = vmatprep.subr.mxu0 0.0
          %3217 = vmatpush1.msra.mxu0 %v2748
          %3218 = vmatprep.subr.mxu0 0.0
          %3219 = vmatpush1.msra.mxu0 %v2749
          %3220 = vmatprep.mubr.f32.mxu0 %v3154
          %3221 = vmatmul.mubr.f32.gmra.mrb[0].mxu0 %v3153
          %v3222 = vpop.f32.mrb[0].mxu0
          %v3223 = vadd.f32 0.0, %v3222
          %v3224 = vpop.f32.mrb[0].mxu0
          %3225 = vdwg.mxu0
          %3226 = vmatprep.subr.mxu0 0.0
          %3227 = vmatpush1.msra.mxu0 %v2750
          %3228 = vmatprep.subr.mxu0 0.0
          %3229 = vmatpush1.msra.mxu0 %v2751
          %3230 = vmatprep.subr.mxu0 0.0
          %3231 = vmatpush1.msra.mxu0 %v2752
          %3232 = vmatprep.subr.mxu0 0.0
          %3233 = vmatpush1.msra.mxu0 %v2753
          %3234 = vmatprep.subr.mxu0 0.0
          %3235 = vmatpush1.msra.mxu0 %v2754
          %3236 = vmatprep.subr.mxu0 0.0
          %3237 = vmatpush1.msra.mxu0 %v2755
          %3238 = vmatprep.subr.mxu0 0.0
          %3239 = vmatpush1.msra.mxu0 %v2756
          %3240 = vmatprep.subr.mxu0 0.0
          %3241 = vmatpush1.msra.mxu0 %v2757
          %3242 = vmatprep.subr.mxu0 0.0
          %3243 = vmatpush1.msra.mxu0 %v2758
          %3244 = vmatprep.subr.mxu0 0.0
          %3245 = vmatpush1.msra.mxu0 %v2759
          %3246 = vmatprep.subr.mxu0 0.0
          %3247 = vmatpush1.msra.mxu0 %v2760
          %3248 = vmatprep.subr.mxu0 0.0
          %3249 = vmatpush1.msra.mxu0 %v2761
          %3250 = vmatprep.subr.mxu0 0.0
          %3251 = vmatpush1.msra.mxu0 %v2762
          %3252 = vmatprep.subr.mxu0 0.0
          %3253 = vmatpush1.msra.mxu0 %v2763
          %3254 = vmatprep.subr.mxu0 0.0
          %3255 = vmatpush1.msra.mxu0 %v2764
          %3256 = vmatprep.subr.mxu0 0.0
          %3257 = vmatpush1.msra.mxu0 %v2765
          %3258 = vmatprep.subr.mxu0 0.0
          %3259 = vmatpush1.msra.mxu0 0.0
          %3260 = vmatprep.subr.mxu0 0.0
          %3261 = vmatpush1.msra.mxu0 0.0
          %3262 = vmatprep.subr.mxu0 0.0
          %3263 = vmatpush1.msra.mxu0 0.0
          %3264 = vmatprep.subr.mxu0 0.0
          %3265 = vmatpush1.msra.mxu0 0.0
          %3266 = vmatprep.subr.mxu0 0.0
          %3267 = vmatpush1.msra.mxu0 0.0
          %3268 = vmatprep.subr.mxu0 0.0
          %3269 = vmatpush1.msra.mxu0 0.0
          %3270 = vmatprep.subr.mxu0 0.0
          %3271 = vmatpush1.msra.mxu0 0.0
          %3272 = vmatprep.subr.mxu0 0.0
          %3273 = vmatpush1.msra.mxu0 0.0
          %3274 = vmatprep.subr.mxu0 0.0
          %3275 = vmatpush1.msra.mxu0 0.0
          %3276 = vmatprep.subr.mxu0 0.0
          %3277 = vmatpush1.msra.mxu0 0.0
          %3278 = vmatprep.subr.mxu0 0.0
          %3279 = vmatpush1.msra.mxu0 0.0
          %3280 = vmatprep.subr.mxu0 0.0
          %3281 = vmatpush1.msra.mxu0 0.0
          %3282 = vmatprep.subr.mxu0 0.0
          %3283 = vmatpush1.msra.mxu0 0.0
          %3284 = vmatprep.subr.mxu0 0.0
          %3285 = vmatpush1.msra.mxu0 0.0
          %3286 = vmatprep.subr.mxu0 0.0
          %3287 = vmatpush1.msra.mxu0 0.0
          %3288 = vmatprep.subr.mxu0 0.0
          %3289 = vmatpush1.msra.mxu0 0.0
          %3290 = vmatprep.mubr.f32.mxu0 0.0
          %3291 = vmatmul.mubr.f32.gmra.mrb[0].mxu0 %v3155
          %v3292 = vpop.f32.mrb[0].mxu0
          %v3293 = vadd.f32 %v3223, %v3292
          %v3294 = vpop.f32.mrb[0].mxu0
          %3295 = vdwg.mxu0
          %v3296 = vmul.f32 %v3293, 0.001953125
          %v3297 = vadd.f32 %v3296, 1e-05
          %v3298 = vrsqrt.pop %v3297
          %v3299 = vld [vmem:[%s3] sm:$0x1]
          %v3300 = vmul.f32 %v3298, %v3299
          %v3301 = vld [vmem:[%s4] sm:$0x1]
          %v3302 = vmul.f32 %v2932, %v3300
          %v3303 = vsub.f32 %v3301, %v3302
          %v3305 = vsel %vm2933, %v3300, 0
          %3307 = vmatprep.subr.mxu0 %v2767
          %3308 = vmatpush1.msra.mxu0 %v2766
          %3309 = vmatprep.subr.mxu0 %v2770
          %3310 = vmatpush1.msra.mxu0 %v2769
          %3311 = vmatprep.subr.mxu0 %v2773
          %3312 = vmatpush1.msra.mxu0 %v2772
          %3313 = vmatprep.subr.mxu0 0.0
          %3314 = vmatpush1.msra.mxu0 0.0
          %3315 = vmatprep.subr.mxu0 0.0
          %3316 = vmatpush1.msra.mxu0 0.0
          %3317 = vmatprep.subr.mxu0 0.0
          %3318 = vmatpush1.msra.mxu0 0.0
          %3319 = vmatprep.subr.mxu0 0.0
          %3320 = vmatpush1.msra.mxu0 0.0
          %3321 = vmatprep.subr.mxu0 0.0
          %3322 = vmatpush1.msra.mxu0 0.0
          %3323 = vmatprep.subr.mxu0 0.0
          %3324 = vmatpush1.msra.mxu0 0.0
          %3325 = vmatprep.subr.mxu0 0.0
          %3326 = vmatpush1.msra.mxu0 0.0
          %3327 = vmatprep.subr.mxu0 0.0
          %3328 = vmatpush1.msra.mxu0 0.0
          %3329 = vmatprep.subr.mxu0 0.0
          %3330 = vmatpush1.msra.mxu0 0.0
          %3331 = vmatprep.subr.mxu0 0.0
          %3332 = vmatpush1.msra.mxu0 0.0
          %3333 = vmatprep.subr.mxu0 0.0
          %3334 = vmatpush1.msra.mxu0 0.0
          %3335 = vmatprep.subr.mxu0 0.0
          %3336 = vmatpush1.msra.mxu0 0.0
          %3337 = vmatprep.subr.mxu0 0.0
          %3338 = vmatpush1.msra.mxu0 0.0
          %3339 = vmatprep.subr.mxu0 0.0
          %3340 = vmatpush1.msra.mxu0 0.0
          %3341 = vmatprep.subr.mxu0 0.0
          %3342 = vmatpush1.msra.mxu0 0.0
          %3343 = vmatprep.subr.mxu0 0.0
          %3344 = vmatpush1.msra.mxu0 0.0
          %3345 = vmatprep.subr.mxu0 0.0
          %3346 = vmatpush1.msra.mxu0 0.0
          %3347 = vmatprep.subr.mxu0 0.0
          %3348 = vmatpush1.msra.mxu0 0.0
          %3349 = vmatprep.subr.mxu0 0.0
          %3350 = vmatpush1.msra.mxu0 0.0
          %3351 = vmatprep.subr.mxu0 0.0
          %3352 = vmatpush1.msra.mxu0 0.0
          %3353 = vmatprep.subr.mxu0 0.0
          %3354 = vmatpush1.msra.mxu0 0.0
          %3355 = vmatprep.subr.mxu0 0.0
          %3356 = vmatpush1.msra.mxu0 0.0
          %3357 = vmatprep.subr.mxu0 0.0
          %3358 = vmatpush1.msra.mxu0 0.0
          %3359 = vmatprep.subr.mxu0 0.0
          %3360 = vmatpush1.msra.mxu0 0.0
          %3361 = vmatprep.subr.mxu0 0.0
          %3362 = vmatpush1.msra.mxu0 0.0
          %3363 = vmatprep.subr.mxu0 0.0
          %3364 = vmatpush1.msra.mxu0 0.0
          %3365 = vmatprep.subr.mxu0 0.0
          %3366 = vmatpush1.msra.mxu0 0.0
          %3367 = vmatprep.subr.mxu0 0.0
          %3368 = vmatpush1.msra.mxu0 0.0
          %3369 = vmatprep.subr.mxu0 0.0
          %3370 = vmatpush1.msra.mxu0 0.0
          %3371 = vmatprep.mubr.f32.mxu0 0.0
          %3372 = vmatmul.mubr.f32.gmra.mrb[0].mxu0 %v3305
          %v3373 = vpop.f32.mrb[0].mxu0
          %v3374 = vadd.f32 0.0, %v3373
          %v3375 = vpop.f32.mrb[0].mxu0
          %v3376 = vadd.f32 0.0, %v3375
          %3377 = vdwg.mxu0
          %3378 = vmatprep.subr.mxu0 0.0
          %3379 = vmatpush1.msra.mxu0 %v2768
          %3380 = vmatprep.subr.mxu0 0.0
          %3381 = vmatpush1.msra.mxu0 %v2771
          %3382 = vmatprep.subr.mxu0 0.0
          %3383 = vmatpush1.msra.mxu0 %v2774
          %3384 = vmatprep.subr.mxu0 0.0
          %3385 = vmatpush1.msra.mxu0 0.0
          %3386 = vmatprep.subr.mxu0 0.0
          %3387 = vmatpush1.msra.mxu0 0.0
          %3388 = vmatprep.subr.mxu0 0.0
          %3389 = vmatpush1.msra.mxu0 0.0
          %3390 = vmatprep.subr.mxu0 0.0
          %3391 = vmatpush1.msra.mxu0 0.0
          %3392 = vmatprep.subr.mxu0 0.0
          %3393 = vmatpush1.msra.mxu0 0.0
          %3394 = vmatprep.subr.mxu0 0.0
          %3395 = vmatpush1.msra.mxu0 0.0
          %3396 = vmatprep.subr.mxu0 0.0
          %3397 = vmatpush1.msra.mxu0 0.0
          %3398 = vmatprep.subr.mxu0 0.0
          %3399 = vmatpush1.msra.mxu0 0.0
          %3400 = vmatprep.subr.mxu0 0.0
          %3401 = vmatpush1.msra.mxu0 0.0
          %3402 = vmatprep.subr.mxu0 0.0
          %3403 = vmatpush1.msra.mxu0 0.0
          %3404 = vmatprep.subr.mxu0 0.0
          %3405 = vmatpush1.msra.mxu0 0.0
          %3406 = vmatprep.subr.mxu0 0.0
          %3407 = vmatpush1.msra.mxu0 0.0
          %3408 = vmatprep.subr.mxu0 0.0
          %3409 = vmatpush1.msra.mxu0 0.0
          %3410 = vmatprep.subr.mxu0 0.0
          %3411 = vmatpush1.msra.mxu0 0.0
          %3412 = vmatprep.subr.mxu0 0.0
          %3413 = vmatpush1.msra.mxu0 0.0
          %3414 = vmatprep.subr.mxu0 0.0
          %3415 = vmatpush1.msra.mxu0 0.0
          %3416 = vmatprep.subr.mxu0 0.0
          %3417 = vmatpush1.msra.mxu0 0.0
          %3418 = vmatprep.subr.mxu0 0.0
          %3419 = vmatpush1.msra.mxu0 0.0
          %3420 = vmatprep.subr.mxu0 0.0
          %3421 = vmatpush1.msra.mxu0 0.0
          %3422 = vmatprep.subr.mxu0 0.0
          %3423 = vmatpush1.msra.mxu0 0.0
          %3424 = vmatprep.subr.mxu0 0.0
          %3425 = vmatpush1.msra.mxu0 0.0
          %3426 = vmatprep.subr.mxu0 0.0
          %3427 = vmatpush1.msra.mxu0 0.0
          %3428 = vmatprep.subr.mxu0 0.0
          %3429 = vmatpush1.msra.mxu0 0.0
          %3430 = vmatprep.subr.mxu0 0.0
          %3431 = vmatpush1.msra.mxu0 0.0
          %3432 = vmatprep.subr.mxu0 0.0
          %3433 = vmatpush1.msra.mxu0 0.0
          %3434 = vmatprep.subr.mxu0 0.0
          %3435 = vmatpush1.msra.mxu0 0.0
          %3436 = vmatprep.subr.mxu0 0.0
          %3437 = vmatpush1.msra.mxu0 0.0
          %3438 = vmatprep.subr.mxu0 0.0
          %3439 = vmatpush1.msra.mxu0 0.0
          %3440 = vmatprep.subr.mxu0 0.0
          %3441 = vmatpush1.msra.mxu0 0.0
          %3442 = vmatprep.mubr.f32.mxu0 0.0
          %3443 = vmatmul.mubr.f32.gmra.mrb[0].mxu0 %v3305
          %v3444 = vpop.f32.mrb[0].mxu0
          %v3445 = vadd.f32 0.0, %v3444
          %v3446 = vpop.f32.mrb[0].mxu0
          %3447 = vdwg.mxu0
          %v3451 = vcombine.low %v3374, %v3376
          %v3453 = vunpack.c.l.s4 1966171168
          %v3454 = vunpack.c.0.s8 %v3453
          %v3455 = vlaneseq
          %v3456 = vshrl.u32 %v3455, 7
          %v3457 = vsub.s32 %v3454, %v3456
          %v3458 = vrot.slane %v3451, %v3457
          %v3460 = vunpack.c.l.s4 1966171168
          %v3461 = vunpack.c.0.s8 %v3460
          %v3462 = vlaneseq
          %v3463 = vshrl.u32 %v3462, 7
          %v3464 = vsub.s32 %v3461, %v3463
          %v3465 = vrot.slane %v3445, %v3464
          %v3466 = vcombine.low %v3458, %v3465
          %v3468 = vunpack.c.l.s4 1966171168
          %v3469 = vunpack.c.0.s8 %v3468
          %v3470 = vlaneseq
          %v3471 = vshrl.u32 %v3470, 7
          %v3472 = vsub.s32 %v3469, %v3471
          %v3473 = vrot.slane %v3466, %v3472
          %v3475 = vlaneseq
          %vm3476 = vcmp.ge.s32.totalorder %v3475, 0
          %vm3477 = vcmp.lt.s32.totalorder %v3475, 384
          %vm3478 = vmand %vm3476, %vm3477
          %3479 = vst.msk [vmem:[#allocation4] sm:$0x7] %vm3478, %v3473
          %v3481 = vsel %vm2933, %v3303, 0
          %3483 = vmatprep.subr.mxu0 %v2767
          %3484 = vmatpush1.msra.mxu0 %v2766
          %3485 = vmatprep.subr.mxu0 %v2770
          %3486 = vmatpush1.msra.mxu0 %v2769
          %3487 = vmatprep.subr.mxu0 %v2773
          %3488 = vmatpush1.msra.mxu0 %v2772
          %3489 = vmatprep.subr.mxu0 0.0
          %3490 = vmatpush1.msra.mxu0 0.0
          %3491 = vmatprep.subr.mxu0 0.0
          %3492 = vmatpush1.msra.mxu0 0.0
          %3493 = vmatprep.subr.mxu0 0.0
          %3494 = vmatpush1.msra.mxu0 0.0
          %3495 = vmatprep.subr.mxu0 0.0
          %3496 = vmatpush1.msra.mxu0 0.0
          %3497 = vmatprep.subr.mxu0 0.0
          %3498 = vmatpush1.msra.mxu0 0.0
          %3499 = vmatprep.subr.mxu0 0.0
          %3500 = vmatpush1.msra.mxu0 0.0
          %3501 = vmatprep.subr.mxu0 0.0
          %3502 = vmatpush1.msra.mxu0 0.0
          %3503 = vmatprep.subr.mxu0 0.0
          %3504 = vmatpush1.msra.mxu0 0.0
          %3505 = vmatprep.subr.mxu0 0.0
          %3506 = vmatpush1.msra.mxu0 0.0
          %3507 = vmatprep.subr.mxu0 0.0
          %3508 = vmatpush1.msra.mxu0 0.0
          %3509 = vmatprep.subr.mxu0 0.0
          %3510 = vmatpush1.msra.mxu0 0.0
          %3511 = vmatprep.subr.mxu0 0.0
          %3512 = vmatpush1.msra.mxu0 0.0
          %3513 = vmatprep.subr.mxu0 0.0
          %3514 = vmatpush1.msra.mxu0 0.0
          %3515 = vmatprep.subr.mxu0 0.0
          %3516 = vmatpush1.msra.mxu0 0.0
          %3517 = vmatprep.subr.mxu0 0.0
          %3518 = vmatpush1.msra.mxu0 0.0
          %3519 = vmatprep.subr.mxu0 0.0
          %3520 = vmatpush1.msra.mxu0 0.0
          %3521 = vmatprep.subr.mxu0 0.0
          %3522 = vmatpush1.msra.mxu0 0.0
          %3523 = vmatprep.subr.mxu0 0.0
          %3524 = vmatpush1.msra.mxu0 0.0
          %3525 = vmatprep.subr.mxu0 0.0
          %3526 = vmatpush1.msra.mxu0 0.0
          %3527 = vmatprep.subr.mxu0 0.0
          %3528 = vmatpush1.msra.mxu0 0.0
          %3529 = vmatprep.subr.mxu0 0.0
          %3530 = vmatpush1.msra.mxu0 0.0
          %3531 = vmatprep.subr.mxu0 0.0
          %3532 = vmatpush1.msra.mxu0 0.0
          %3533 = vmatprep.subr.mxu0 0.0
          %3534 = vmatpush1.msra.mxu0 0.0
          %3535 = vmatprep.subr.mxu0 0.0
          %3536 = vmatpush1.msra.mxu0 0.0
          %3537 = vmatprep.subr.mxu0 0.0
          %3538 = vmatpush1.msra.mxu0 0.0
          %3539 = vmatprep.subr.mxu0 0.0
          %3540 = vmatpush1.msra.mxu0 0.0
          %3541 = vmatprep.subr.mxu0 0.0
          %3542 = vmatpush1.msra.mxu0 0.0
          %3543 = vmatprep.subr.mxu0 0.0
          %3544 = vmatpush1.msra.mxu0 0.0
          %3545 = vmatprep.subr.mxu0 0.0
          %3546 = vmatpush1.msra.mxu0 0.0
          %3547 = vmatprep.mubr.f32.mxu0 0.0
          %3548 = vmatmul.mubr.f32.gmra.mrb[0].mxu0 %v3481
          %v3549 = vpop.f32.mrb[0].mxu0
          %v3550 = vadd.f32 0.0, %v3549
          %v3551 = vpop.f32.mrb[0].mxu0
          %v3552 = vadd.f32 0.0, %v3551
          %3553 = vdwg.mxu0
          %3554 = vmatprep.subr.mxu0 0.0
          %3555 = vmatpush1.msra.mxu0 %v2768
          %3556 = vmatprep.subr.mxu0 0.0
          %3557 = vmatpush1.msra.mxu0 %v2771
          %3558 = vmatprep.subr.mxu0 0.0
          %3559 = vmatpush1.msra.mxu0 %v2774
          %3560 = vmatprep.subr.mxu0 0.0
          %3561 = vmatpush1.msra.mxu0 0.0
          %3562 = vmatprep.subr.mxu0 0.0
          %3563 = vmatpush1.msra.mxu0 0.0
          %3564 = vmatprep.subr.mxu0 0.0
          %3565 = vmatpush1.msra.mxu0 0.0
          %3566 = vmatprep.subr.mxu0 0.0
          %3567 = vmatpush1.msra.mxu0 0.0
          %3568 = vmatprep.subr.mxu0 0.0
          %3569 = vmatpush1.msra.mxu0 0.0
          %3570 = vmatprep.subr.mxu0 0.0
          %3571 = vmatpush1.msra.mxu0 0.0
          %3572 = vmatprep.subr.mxu0 0.0
          %3573 = vmatpush1.msra.mxu0 0.0
          %3574 = vmatprep.subr.mxu0 0.0
          %3575 = vmatpush1.msra.mxu0 0.0
          %3576 = vmatprep.subr.mxu0 0.0
          %3577 = vmatpush1.msra.mxu0 0.0
          %3578 = vmatprep.subr.mxu0 0.0
          %3579 = vmatpush1.msra.mxu0 0.0
          %3580 = vmatprep.subr.mxu0 0.0
          %3581 = vmatpush1.msra.mxu0 0.0
          %3582 = vmatprep.subr.mxu0 0.0
          %3583 = vmatpush1.msra.mxu0 0.0
          %3584 = vmatprep.subr.mxu0 0.0
          %3585 = vmatpush1.msra.mxu0 0.0
          %3586 = vmatprep.subr.mxu0 0.0
          %3587 = vmatpush1.msra.mxu0 0.0
          %3588 = vmatprep.subr.mxu0 0.0
          %3589 = vmatpush1.msra.mxu0 0.0
          %3590 = vmatprep.subr.mxu0 0.0
          %3591 = vmatpush1.msra.mxu0 0.0
          %3592 = vmatprep.subr.mxu0 0.0
          %3593 = vmatpush1.msra.mxu0 0.0
          %3594 = vmatprep.subr.mxu0 0.0
          %3595 = vmatpush1.msra.mxu0 0.0
          %3596 = vmatprep.subr.mxu0 0.0
          %3597 = vmatpush1.msra.mxu0 0.0
          %3598 = vmatprep.subr.mxu0 0.0
          %3599 = vmatpush1.msra.mxu0 0.0
          %3600 = vmatprep.subr.mxu0 0.0
          %3601 = vmatpush1.msra.mxu0 0.0
          %3602 = vmatprep.subr.mxu0 0.0
          %3603 = vmatpush1.msra.mxu0 0.0
          %3604 = vmatprep.subr.mxu0 0.0
          %3605 = vmatpush1.msra.mxu0 0.0
          %3606 = vmatprep.subr.mxu0 0.0
          %3607 = vmatpush1.msra.mxu0 0.0
          %3608 = vmatprep.subr.mxu0 0.0
          %3609 = vmatpush1.msra.mxu0 0.0
          %3610 = vmatprep.subr.mxu0 0.0
          %3611 = vmatpush1.msra.mxu0 0.0
          %3612 = vmatprep.subr.mxu0 0.0
          %3613 = vmatpush1.msra.mxu0 0.0
          %3614 = vmatprep.subr.mxu0 0.0
          %3615 = vmatpush1.msra.mxu0 0.0
          %3616 = vmatprep.subr.mxu0 0.0
          %3617 = vmatpush1.msra.mxu0 0.0
          %3618 = vmatprep.mubr.f32.mxu0 0.0
          %3619 = vmatmul.mubr.f32.gmra.mrb[0].mxu0 %v3481
          %v3620 = vpop.f32.mrb[0].mxu0
          %v3621 = vadd.f32 0.0, %v3620
          %v3622 = vpop.f32.mrb[0].mxu0
          %3623 = vdwg.mxu0
          %v3627 = vcombine.low %v3550, %v3552
          %v3629 = vunpack.c.l.s4 1966171168
          %v3630 = vunpack.c.0.s8 %v3629
          %v3631 = vlaneseq
          %v3632 = vshrl.u32 %v3631, 7
          %v3633 = vsub.s32 %v3630, %v3632
          %v3634 = vrot.slane %v3627, %v3633
          %v3636 = vunpack.c.l.s4 1966171168
          %v3637 = vunpack.c.0.s8 %v3636
          %v3638 = vlaneseq
          %v3639 = vshrl.u32 %v3638, 7
          %v3640 = vsub.s32 %v3637, %v3639
          %v3641 = vrot.slane %v3621, %v3640
          %v3642 = vcombine.low %v3634, %v3641
          %v3644 = vunpack.c.l.s4 1966171168
          %v3645 = vunpack.c.0.s8 %v3644
          %v3646 = vlaneseq
          %v3647 = vshrl.u32 %v3646, 7
          %v3648 = vsub.s32 %v3645, %v3647
          %v3649 = vrot.slane %v3642, %v3648
          %3651 = vst.msk [vmem:[#allocation5] sm:$0x7] %vm3478, %v3649
        $region64: #{multi_scale_block.1} parent=59 // pred_fallthru
          _
        %s3652 = smul.u32 %s23, 12
        %s3653 = smul.addr %s3652, 8
        %s3654 = scalar_lea.vmem [#allocation2], %s3653
        %v3655 = vld [vmem:[%s3654] sm:$0xff]
        %v3656 = vld [vmem:[%s3654 + $0x8] sm:$0xff]
        %v3657 = vld [vmem:[%s3654 + $0x10] sm:$0xff]
        %v3658 = vld [vmem:[%s3654 + $0x18] sm:$0xff]
        %v3659 = vld [vmem:[%s3654 + $0x20] sm:$0xff]
        %v3660 = vld [vmem:[%s3654 + $0x28] sm:$0xff]
        %v3661 = vld [vmem:[%s3654 + $0x30] sm:$0xff]
        %v3662 = vld [vmem:[%s3654 + $0x38] sm:$0xff]
        %v3663 = vld [vmem:[%s3654 + $0x40] sm:$0xff]
        %v3664 = vld [vmem:[%s3654 + $0x48] sm:$0xff]
        %v3665 = vld [vmem:[%s3654 + $0x50] sm:$0xff]
        %v3666 = vld [vmem:[%s3654 + $0x58] sm:$0xff]
        %v3667 = vld [vmem:[#allocation4] sm:$0x7]
        %v3669 = vlaneseq
        %v3670 = vshrl.u32 %v3669, 7
        %v3671 = vsub.s32 0, %v3670
        %v3672 = vrot.slane %v3667, %v3671
        %v3673 = vlaneseq
        %v3674 = vshrl.u32 %v3673, 7
        %v3675 = vsub.s32 1, %v3674
        %v3676 = vrot.slane %v3667, %v3675
        %v3677 = vlaneseq
        %v3678 = vshrl.u32 %v3677, 7
        %v3679 = vsub.s32 2, %v3678
        %v3680 = vrot.slane %v3667, %v3679
        %v3684 = vmul.f32 %v3655, %v3672
        %v3685 = vmul.f32 %v3656, %v3676
        %v3686 = vmul.f32 %v3657, %v3680
        %v3687 = vmul.f32 %v3658, %v3672
        %v3688 = vmul.f32 %v3659, %v3676
        %v3689 = vmul.f32 %v3660, %v3680
        %v3690 = vmul.f32 %v3661, %v3672
        %v3691 = vmul.f32 %v3662, %v3676
        %v3692 = vmul.f32 %v3663, %v3680
        %v3693 = vmul.f32 %v3664, %v3672
        %v3694 = vmul.f32 %v3665, %v3676
        %v3695 = vmul.f32 %v3666, %v3680
        %v3696 = vld [vmem:[#allocation5] sm:$0x7]
        %v3698 = vlaneseq
        %v3699 = vshrl.u32 %v3698, 7
        %v3700 = vsub.s32 0, %v3699
        %v3701 = vrot.slane %v3696, %v3700
        %v3702 = vlaneseq
        %v3703 = vshrl.u32 %v3702, 7
        %v3704 = vsub.s32 1, %v3703
        %v3705 = vrot.slane %v3696, %v3704
        %v3706 = vlaneseq
        %v3707 = vshrl.u32 %v3706, 7
        %v3708 = vsub.s32 2, %v3707
        %v3709 = vrot.slane %v3696, %v3708
        %v3713 = vadd.f32 %v3684, %v3701
        %v3714 = vadd.f32 %v3685, %v3705
        %v3715 = vadd.f32 %v3686, %v3709
        %v3716 = vadd.f32 %v3687, %v3701
        %v3717 = vadd.f32 %v3688, %v3705
        %v3718 = vadd.f32 %v3689, %v3709
        %v3719 = vadd.f32 %v3690, %v3701
        %v3720 = vadd.f32 %v3691, %v3705
        %v3721 = vadd.f32 %v3692, %v3709
        %v3722 = vadd.f32 %v3693, %v3701
        %v3723 = vadd.f32 %v3694, %v3705
        %v3724 = vadd.f32 %v3695, %v3709
        %v3725 = vmax.f32 %v3713, 0.0
        %v3726 = vmax.f32 %v3714, 0.0
        %v3727 = vmax.f32 %v3715, 0.0
        %v3728 = vmax.f32 %v3716, 0.0
        %v3729 = vmax.f32 %v3717, 0.0
        %v3730 = vmax.f32 %v3718, 0.0
        %v3731 = vmax.f32 %v3719, 0.0
        %v3732 = vmax.f32 %v3720, 0.0
        %v3733 = vmax.f32 %v3721, 0.0
        %v3734 = vmax.f32 %v3722, 0.0
        %v3735 = vmax.f32 %v3723, 0.0
        %v3736 = vmax.f32 %v3724, 0.0
        %3737 = vst [vmem:[%s308] sm:$0xff] %v3725
        %3738 = vst [vmem:[%s308 + $0x8] sm:$0xff] %v3726
        %3739 = vst [vmem:[%s308 + $0x10] sm:$0xff] %v3727
        %3740 = vst [vmem:[%s308 + $0x18] sm:$0xff] %v3728
        %3741 = vst [vmem:[%s308 + $0x20] sm:$0xff] %v3729
        %3742 = vst [vmem:[%s308 + $0x28] sm:$0xff] %v3730
        %3743 = vst [vmem:[%s308 + $0x30] sm:$0xff] %v3731
        %3744 = vst [vmem:[%s308 + $0x38] sm:$0xff] %v3732
        %3745 = vst [vmem:[%s308 + $0x40] sm:$0xff] %v3733
        %3746 = vst [vmem:[%s308 + $0x48] sm:$0xff] %v3734
        %3747 = vst [vmem:[%s308 + $0x50] sm:$0xff] %v3735
        %3748 = vst [vmem:[%s308 + $0x58] sm:$0xff] %v3736
      $region60: #{multi_scale_block.1} parent=47 // pred_fallthru
        _
      %s3749 = smul.u32 %s23, %s22
      %p3750 = scmp.lt.s32.totalorder %s3749, 0
      %s3751 = scalar_select %p3750, %s3749, 0
      %s3752 = smul.addr %s3751, 12
      %s3753 = smul.addr %s3752, 8
      %s3754 = scalar_lea.vmem %s7, %s3753
      // Predicated region
      $region65: #{multi_scale_block.1} parent=47 // pred_check
        %p3755 = pneg %p206
      $region66: #{multi_scale_block.1} parent=47 // pred_check_branch
        %3757 = sbr.rel (%p3755) target = $region68
      $region67: #{multi_scale_block.1} parent=47 // pred_region
        %s3758 = smul.u32 %s23, %s22
      $region68: #{multi_scale_block.1} parent=47 // pred_fallthru
        _
    $region48: #{multi_scale_block.1} parent=5 // pred_fallthru
      _
    %p3759 = scmp.le.s32.totalorder 2, %s13
    // Predicated region
    $region69: #{multi_scale_block.1} parent=5 // pred_check
      %p3760 = pneg %p3759
    $region70: #{multi_scale_block.1} parent=5 // pred_check_branch
      %3762 = sbr.rel (%p3760) target = $region72
    $region71: #{multi_scale_block.1} parent=5 // pred_region
      %s3763 = ssub.s32 %s13, 2
      // Predicated region
      $region73: #{multi_scale_block.1} parent=71 // pred_check
        %p3764 = pneg %p212
      $region74: #{multi_scale_block.1} parent=71 // pred_check_branch
        %3766 = sbr.rel (%p3764) target = $region76
      $region75: #{multi_scale_block.1} parent=71 // pred_region
        %s3767 = smul.u32 %s25, %s24
        %p3768 = scmp.lt.s32.totalorder %s3767, 0
        %s3769 = scalar_select %p3768, %s3767, 0
        %s3770 = smul.addr %s3769, 12
        %s3771 = smul.addr %s3770, 8
        %s3772 = scalar_lea.vmem %s7, %s3771
      $region76: #{multi_scale_block.1} parent=71 // pred_fallthru
        _
    $region72: #{multi_scale_block.1} parent=5 // pred_fallthru
      _
  $region6: #{multi_scale_block.1} parent=0 // loop_footer
    %s17 = sadd.s32 1, %s13
  $region7: #{multi_scale_block.1} parent=0 // loop_footer_branch
    %12 = sbr.rel target = $region3
  $region8: #{multi_scale_block.1} parent=0 // loop_exit
    _

</llo_original>
